<compile_context>
chip_gen: v5e
topology: v5e:2x2
jax: 0.10.0
libtpu: 0.0.40
codegen_flags: <defaults>
</compile_context>

<pallas_src>
import functools
import numpy as np
import jax
import jax.numpy as jnp
from jax.experimental import pallas as pl
from jax.experimental.pallas import tpu as pltpu

PRIMITIVES = ['none', 'max_pool_3x3', 'avg_pool_3x3', 'skip_connect',
              'sep_conv_3x3', 'sep_conv_5x5', 'dil_conv_3x3', 'dil_conv_5x5']


def _ceil_to(x, m):
    return ((x + m - 1) // m) * m


def _out_size(h, k, s, p, d):
    return (h + 2 * p - d * (k - 1) - 1) // s + 1


# ----------------------------- tiling helpers -----------------------------

def _tile_m(M, target=256):
    Mp0 = _ceil_to(max(M, 1), 16)          # multiple of 16 (safe for bf16 sublane packing)
    tm = min(target, Mp0)
    return tm, _ceil_to(M, tm)


def _tile_k(K):
    Kp0 = _ceil_to(K, 128)
    if Kp0 <= 1024:
        return Kp0, Kp0
    return 512, _ceil_to(Kp0, 512)


def _tile_n(N):
    Np0 = _ceil_to(N, 128)
    if Np0 <= 512:
        return Np0, Np0
    return 256, _ceil_to(Np0, 256)


# ----------------------------- Pallas kernels -----------------------------

def _matmul_kernel(a_ref, b_ref, sh_ref, o_ref, acc_ref, *, relu_a):
    """out[i,j] = sum_k (relu?(A[i,k]) @ B[k,j]) + shift[j]; bf16 MXU, f32 accumulate."""
    k = pl.program_id(2)

    @pl.when(k == 0)
    def _init():
        acc_ref[...] = jnp.zeros_like(acc_ref)

    a = a_ref[...]
    if relu_a:
        a = jnp.maximum(a, 0)
    acc_ref[...] += jnp.dot(a, b_ref[...], preferred_element_type=jnp.float32)

    @pl.when(k == pl.num_programs(2) - 1)
    def _fin():
        o_ref[...] = acc_ref[...] + sh_ref[...]


def prep_matmul(wm, scale=None, shift=None):
    """Pre-fold BN scale into the weight columns, pad & cast to bf16 once (build time)."""
    K, N = wm.shape
    wm = wm.astype(jnp.float32)
    if scale is not None:
        wm = wm * scale.astype(jnp.float32)[None, :]
    if shift is None:
        shift = jnp.zeros((N,), jnp.float32)
    tk, Kp = _tile_k(K)
    tn, Np = _tile_n(N)
    b_p = jnp.pad(wm, ((0, Kp - K), (0, Np - N))).astype(jnp.bfloat16)
    sh_p = jnp.pad(shift.astype(jnp.float32).reshape(1, N), ((0, 0), (0, Np - N)))
    return dict(b=b_p, sh=sh_p, K=K, N=N, Kp=Kp, Np=Np, tk=tk, tn=tn)


def pallas_matmul(a, wp, relu_a=False, tm_target=256):
    M, K = a.shape
    assert K == wp['K'], (K, wp['K'])
    tm, Mp = _tile_m(M, tm_target)
    Kp, Np, tk, tn = wp['Kp'], wp['Np'], wp['tk'], wp['tn']
    a_p = jnp.pad(a.astype(jnp.bfloat16), ((0, Mp - M), (0, Kp - K)))
    out = pl.pallas_call(
        functools.partial(_matmul_kernel, relu_a=relu_a),
        out_shape=jax.ShapeDtypeStruct((Mp, Np), jnp.float32),
        grid_spec=pltpu.PrefetchScalarGridSpec(
            num_scalar_prefetch=0,
            grid=(Mp // tm, Np // tn, Kp // tk),
            in_specs=[pl.BlockSpec((tm, tk), lambda i, j, k: (i, k)),
                      pl.BlockSpec((tk, tn), lambda i, j, k: (k, j)),
                      pl.BlockSpec((1, tn), lambda i, j, k: (0, j))],
            out_specs=pl.BlockSpec((tm, tn), lambda i, j, k: (i, j)),
            scratch_shapes=[pltpu.VMEM((tm, tn), jnp.float32)]),
        compiler_params=pltpu.CompilerParams(
            dimension_semantics=("parallel", "parallel", "arbitrary")),
    )(a_p, wp['b'], wp['sh'])
    return out[:M, :wp['N']]


def _dw_kernel(t_ref, w_ref, o_ref, acc_ref, *, relu_in):
    """Depthwise conv as per-tap VPU multiply-accumulate: acc += relu?(tap_t) * w[t]."""
    t = pl.program_id(1)

    @pl.when(t == 0)
    def _init():
        acc_ref[...] = jnp.zeros_like(acc_ref)

    x = t_ref[0].astype(jnp.float32)
    if relu_in:
        x = jnp.maximum(x, 0.0)
    acc_ref[...] += x * w_ref[0]

    @pl.when(t == pl.num_programs(1) - 1)
    def _fin():
        o_ref[...] = acc_ref[...]


def _pool_kernel(t_ref, inv_ref, sc_ref, sh_ref, o_ref, acc_ref, *, is_max):
    t = pl.program_id(1)

    @pl.when(t == 0)
    def _init():
        if is_max:
            acc_ref[...] = jnp.full(acc_ref.shape, -jnp.inf, dtype=acc_ref.dtype)
        else:
            acc_ref[...] = jnp.zeros_like(acc_ref)

    x = t_ref[0]
    if is_max:
        acc_ref[...] = jnp.maximum(acc_ref[...], x)
    else:
        acc_ref[...] += x

    @pl.when(t == pl.num_programs(1) - 1)
    def _fin():
        r = acc_ref[...]
        if not is_max:
            r = r * inv_ref[...]          # (tm,1) broadcast: count_include_pad=False divisor
        o_ref[...] = r * sc_ref[...] + sh_ref[...]


def _affine_kernel(x_ref, sc_ref, sh_ref, o_ref, *, relu):
    y = x_ref[...] * sc_ref[...] + sh_ref[...]
    if relu:
        y = jnp.maximum(y, 0.0)
    o_ref[...] = y


def pallas_affine(x, scale, shift, relu=False):
    M, C = x.shape
    tm, Mp = _tile_m(M, 512)
    Cp = _ceil_to(C, 128)
    x_p = jnp.pad(x.astype(jnp.float32), ((0, Mp - M), (0, Cp - C)))
    sc_p = jnp.pad(scale.reshape(1, C), ((0, 0), (0, Cp - C)))
    sh_p = jnp.pad(shift.reshape(1, C), ((0, 0), (0, Cp - C)))
    out = pl.pallas_call(
        functools.partial(_affine_kernel, relu=relu),
        out_shape=jax.ShapeDtypeStruct((Mp, Cp), jnp.float32),
        grid_spec=pltpu.PrefetchScalarGridSpec(
            num_scalar_prefetch=0,
            grid=(Mp // tm,),
            in_specs=[pl.BlockSpec((tm, Cp), lambda i: (i, 0)),
                      pl.BlockSpec((1, Cp), lambda i: (0, 0)),
                      pl.BlockSpec((1, Cp), lambda i: (0, 0))],
            out_specs=pl.BlockSpec((tm, Cp), lambda i: (i, 0))),
        compiler_params=pltpu.CompilerParams(dimension_semantics=("parallel",)),
    )(x_p, sc_p, sh_p)
    return out[:M, :C]


# ----------------------------- conv / pool glue -----------------------------

def bn_fold(p):
    inv = 1.0 / jnp.sqrt(p['var'] + 1e-5)
    scale = p['gamma'] * inv
    shift = p['beta'] - p['mean'] * scale
    return scale, shift


def _im2col(x, kh, kw, stride, padding, dilation):
    N, H, W, C = x.shape
    OH = _out_size(H, kh, stride, padding, dilation)
    OW = _out_size(W, kw, stride, padding, dilation)
    xp = jnp.pad(x, ((0, 0), (padding, padding), (padding, padding), (0, 0)))
    cols = []
    for i in range(kh):
        for j in range(kw):
            r0, c0 = i * dilation, j * dilation
            cols.append(xp[:, r0:r0 + stride * (OH - 1) + 1:stride,
                           c0:c0 + stride * (OW - 1) + 1:stride, :])
    patches = cols[0] if len(cols) == 1 else jnp.concatenate(cols, axis=-1)
    return patches.reshape(N * OH * OW, kh * kw * C), OH, OW


def _extract_taps(x, kh, kw, stride, padding, dilation, pad_value=0.0):
    N, H, W, C = x.shape
    OH = _out_size(H, kh, stride, padding, dilation)
    OW = _out_size(W, kw, stride, padding, dilation)
    xp = jnp.pad(x, ((0, 0), (padding, padding), (padding, padding), (0, 0)),
                 constant_values=pad_value)
    taps = []
    for i in range(kh):
        for j in range(kw):
            r0, c0 = i * dilation, j * dilation
            taps.append(xp[:, r0:r0 + stride * (OH - 1) + 1:stride,
                            c0:c0 + stride * (OW - 1) + 1:stride, :])
    return jnp.stack(taps, axis=0).reshape(kh * kw, N * OH * OW, C), OH, OW


def conv2d(x, wp, kh, kw, stride=1, padding=0, dilation=1, relu_in=False):
    """Standard/pointwise conv: im2col + Pallas matmul (BN scale folded, shift fused)."""
    N, H, W, Cin = x.shape
    if kh == 1 and kw == 1 and stride == 1 and padding == 0:
        patches, OH, OW = x.reshape(N * H * W, Cin), H, W
    else:
        patches, OH, OW = _im2col(x, kh, kw, stride, padding, dilation)
    y = pallas_matmul(patches, wp, relu_a=relu_in)
    return y.reshape(N, OH, OW, wp['N'])


def prep_dw_weight(w):
    """w: [C, 1, kh, kw] PyTorch depthwise weight -> (T, 1, Cp) per-tap per-channel taps."""
    C, _, kh, kw = w.shape
    T = kh * kw
    w_taps = jnp.transpose(w[:, 0, :, :], (1, 2, 0)).reshape(T, C).astype(jnp.float32)
    Cp = _ceil_to(C, 128)
    w_p = jnp.pad(w_taps, ((0, 0), (0, Cp - C))).reshape(T, 1, Cp)
    return dict(w=w_p, T=T, C=C, Cp=Cp, kh=kh, kw=kw)


def depthwise_conv(x, dwp, stride, padding, dilation, relu_in):
    N, H, W, C = x.shape
    kh, kw, T, Cp = dwp['kh'], dwp['kw'], dwp['T'], dwp['Cp']
    taps, OH, OW = _extract_taps(x, kh, kw, stride, padding, dilation)
    M = N * OH * OW
    tm, Mp = _tile_m(M)
    t_p = jnp.pad(taps.astype(jnp.bfloat16), ((0, 0), (0, Mp - M), (0, Cp - C)))
    out = pl.pallas_call(
        functools.partial(_dw_kernel, relu_in=relu_in),
        out_shape=jax.ShapeDtypeStruct((Mp, Cp), jnp.float32),
        grid_spec=pltpu.PrefetchScalarGridSpec(
            num_scalar_prefetch=0,
            grid=(Mp // tm, T),
            in_specs=[pl.BlockSpec((1, tm, Cp), lambda i, t: (t, i, 0)),
                      pl.BlockSpec((1, 1, Cp), lambda i, t: (t, 0, 0))],
            out_specs=pl.BlockSpec((tm, Cp), lambda i, t: (i, 0)),
            scratch_shapes=[pltpu.VMEM((tm, Cp), jnp.float32)]),
        compiler_params=pltpu.CompilerParams(
            dimension_semantics=("parallel", "arbitrary")),
    )(t_p, dwp['w'])
    return out[:M, :C].reshape(N, OH, OW, C)


def pool3x3_bn(x, stride, is_max, sc, sh):
    N, H, W, C = x.shape
    pad_val = -jnp.inf if is_max else 0.0
    taps, OH, OW = _extract_taps(x, 3, 3, stride, 1, 1, pad_value=pad_val)
    M = N * OH * OW
    # count_include_pad=False divisor, per output row (Mp, 1)
    rv = np.zeros(OH, np.float32)
    cv = np.zeros(OW, np.float32)
    for d in range(3):
        rv += ((np.arange(OH) * stride - 1 + d >= 0) &
               (np.arange(OH) * stride - 1 + d < H)).astype(np.float32)
        cv += ((np.arange(OW) * stride - 1 + d >= 0) &
               (np.arange(OW) * stride - 1 + d < W)).astype(np.float32)
    inv_np = np.tile((1.0 / (rv[:, None] * cv[None, :])).reshape(1, OH * OW),
                     (N, 1)).reshape(M, 1)
    tm, Mp = _tile_m(M)
    Cp = _ceil_to(C, 128)
    t_p = jnp.pad(taps, ((0, 0), (0, Mp - M), (0, Cp - C)))
    inv_p = jnp.asarray(np.pad(inv_np, ((0, Mp - M), (0, 0))), jnp.float32)
    sc_p = jnp.pad(sc.reshape(1, C), ((0, 0), (0, Cp - C)))
    sh_p = jnp.pad(sh.reshape(1, C), ((0, 0), (0, Cp - C)))
    out = pl.pallas_call(
        functools.partial(_pool_kernel, is_max=is_max),
        out_shape=jax.ShapeDtypeStruct((Mp, Cp), jnp.float32),
        grid_spec=pltpu.PrefetchScalarGridSpec(
            num_scalar_prefetch=0,
            grid=(Mp // tm, 9),
            in_specs=[pl.BlockSpec((1, tm, Cp), lambda i, t: (t, i, 0)),
                      pl.BlockSpec((tm, 1), lambda i, t: (i, 0)),
                      pl.BlockSpec((1, Cp), lambda i, t: (0, 0)),
                      pl.BlockSpec((1, Cp), lambda i, t: (0, 0))],
            out_specs=pl.BlockSpec((tm, Cp), lambda i, t: (i, 0)),
            scratch_shapes=[pltpu.VMEM((tm, Cp), jnp.float32)]),
        compiler_params=pltpu.CompilerParams(
            dimension_semantics=("parallel", "arbitrary")),
    )(t_p, inv_p, sc_p, sh_p)
    return out[:M, :C].reshape(N, OH, OW, C)


# ----------------------------- parameter init -----------------------------

class Init:
    def __init__(self, seed=42):
        self.key = jax.random.PRNGKey(seed)

    def _next(self):
        self.key, k = jax.random.split(self.key)
        return k

    def conv(self, cout, cin, kh, kw):
        return 0.1 * jax.random.normal(self._next(), (cout, cin, kh, kw), jnp.float32)

    def bn(self, c, affine=True):
        if affine:
            gamma = 1.0 + 0.1 * jax.random.normal(self._next(), (c,), jnp.float32)
            beta = 0.1 * jax.random.normal(self._next(), (c,), jnp.float32)
        else:
            gamma = jnp.ones((c,), jnp.float32)
            beta = jnp.zeros((c,), jnp.float32)
        mean = 0.1 * jax.random.normal(self._next(), (c,), jnp.float32)
        var = jax.random.uniform(self._next(), (c,), jnp.float32, 0.5, 1.5)
        return dict(gamma=gamma, beta=beta, mean=mean, var=var)

    def linear(self, cout, cin):
        w = 0.1 * jax.random.normal(self._next(), (cout, cin), jnp.float32)
        b = 0.1 * jax.random.normal(self._next(), (cout,), jnp.float32)
        return w, b


# ----------------------------- DARTS ops -----------------------------

def _conv_weight_matrix(w):
    cout, cin, kh, kw = w.shape
    return jnp.transpose(w, (2, 3, 1, 0)).reshape(kh * kw * cin, cout)


def make_relu_conv_bn(init, cin, cout, k, stride, pad, affine):
    w = init.conv(cout, cin, k, k)
    bn = init.bn(cout, affine)
    sc, sh = bn_fold(bn)
    wp = prep_matmul(_conv_weight_matrix(w), sc, sh)

    def fwd(x):
        return conv2d(x, wp, k, k, stride=stride, padding=pad, relu_in=True)
    return fwd


def make_factorized_reduce(init, cin, cout, affine):
    assert cout % 2 == 0
    w1 = init.conv(cout // 2, cin, 1, 1)
    w2 = init.conv(cout // 2, cin, 1, 1)
    bn = init.bn(cout, affine)
    sc, sh = bn_fold(bn)
    h = cout // 2
    wp1 = prep_matmul(w1[:, :, 0, 0].T, sc[:h], sh[:h])
    wp2 = prep_matmul(w2[:, :, 0, 0].T, sc[h:], sh[h:])

    def fwd(x):
        y1 = conv2d(x, wp1, 1, 1, stride=2, padding=0, relu_in=True)
        y2 = conv2d(x[:, 1:, 1:, :], wp2, 1, 1, stride=2, padding=0, relu_in=True)
        return jnp.concatenate([y1, y2], axis=-1)
    return fwd


def make_sep_conv(init, cin, cout, k, stride, pad, affine):
    dw1 = prep_dw_weight(init.conv(cin, 1, k, k))
    pw1_w = init.conv(cin, cin, 1, 1)
    bn1 = init.bn(cin, affine)
    dw2 = prep_dw_weight(init.conv(cin, 1, k, k))
    pw2_w = init.conv(cout, cin, 1, 1)
    bn2 = init.bn(cout, affine)
    sc1, sh1 = bn_fold(bn1)
    sc2, sh2 = bn_fold(bn2)
    wp1 = prep_matmul(pw1_w[:, :, 0, 0].T, sc1, sh1)
    wp2 = prep_matmul(pw2_w[:, :, 0, 0].T, sc2, sh2)

    def fwd(x):
        y = depthwise_conv(x, dw1, stride, pad, 1, relu_in=True)
        y = conv2d(y, wp1, 1, 1)
        y = depthwise_conv(y, dw2, 1, pad, 1, relu_in=True)
        y = conv2d(y, wp2, 1, 1)
        return y
    return fwd


def make_dil_conv(init, cin, cout, k, stride, pad, dilation, affine):
    dw = prep_dw_weight(init.conv(cin, 1, k, k))
    pw_w = init.conv(cout, cin, 1, 1)
    bn = init.bn(cout, affine)
    sc, sh = bn_fold(bn)
    wp = prep_matmul(pw_w[:, :, 0, 0].T, sc, sh)

    def fwd(x):
        y = depthwise_conv(x, dw, stride, pad, dilation, relu_in=True)
        y = conv2d(y, wp, 1, 1)
        return y
    return fwd


def make_op(init, primitive, C, stride):
    if primitive == 'none':
        if stride == 1:
            return lambda x: jnp.zeros_like(x)
        return lambda x: jnp.zeros_like(x[:, ::stride, ::stride, :])
    if primitive == 'max_pool_3x3':
        bn = init.bn(C, affine=False)           # MixedOp wraps pool ops with BN(affine=False)
        sc, sh = bn_fold(bn)
        return lambda x: pool3x3_bn(x, stride, True, sc, sh)
    if primitive == 'avg_pool_3x3':
        bn = init.bn(C, affine=False)
        sc, sh = bn_fold(bn)
        return lambda x: pool3x3_bn(x, stride, False, sc, sh)
    if primitive == 'skip_connect':
        if stride == 1:
            return lambda x: x
        return make_factorized_reduce(init, C, C, affine=False)
    if primitive == 'sep_conv_3x3':
        return make_sep_conv(init, C, C, 3, stride, 1, False)
    if primitive == 'sep_conv_5x5':
        return make_sep_conv(init, C, C, 5, stride, 2, False)
    if primitive == 'dil_conv_3x3':
        return make_dil_conv(init, C, C, 3, stride, 2, 2, False)
    if primitive == 'dil_conv_5x5':
        return make_dil_conv(init, C, C, 5, stride, 4, 2, False)
    raise ValueError(primitive)


def make_mixed_op(init, C, stride):
    ops = [make_op(init, p, C, stride) for p in PRIMITIVES]

    def fwd(x, weights):
        # all softmax weights are nonzero, so PyTorch's `if w != 0` filter is a no-op
        out = None
        for idx, op in enumerate(ops):
            y = weights[idx] * op(x)
            out = y if out is None else out + y
        return out
    return fwd


def make_cell(init, steps, multiplier, cpp, cp, c, reduction, reduction_prev):
    if reduction_prev:
        pre0 = make_factorized_reduce(init, cpp, c, affine=False)
    else:
        pre0 = make_relu_conv_bn(init, cpp, c, 1, 1, 0, affine=False)
    pre1 = make_relu_conv_bn(init, cp, c, 1, 1, 0, affine=False)
    ops = []
    for i in range(steps):
        for j in range(2 + i):
            stride = 2 if reduction and j < 2 else 1
            ops.append(make_mixed_op(init, c, stride))

    def fwd(s0, s1, weights):
        s0 = pre0(s0)
        s1 = pre1(s1)
        states = [s0, s1]
        offset = 0
        for _ in range(steps):
            s = None
            for j, h in enumerate(states):
                y = ops[offset + j](h, weights[offset + j])
                s = y if s is None else s + y
            offset += len(states)
            states.append(s)
        return jnp.concatenate(states[-multiplier:], axis=-1)
    return fwd, reduction


def build_network(init, C, num_classes, layers, steps=4, multiplier=4, stem_multiplier=3):
    C_curr = stem_multiplier * C
    # stem0: Conv s2 -> BN -> ReLU -> Conv s2 -> BN ; stem1: ReLU -> Conv s2 -> BN
    w1 = init.conv(C_curr // 2, 3, 3, 3)
    bn1 = init.bn(C_curr // 2, True)
    w2 = init.conv(C_curr, C_curr // 2, 3, 3)
    bn2 = init.bn(C_curr, True)
    w3 = init.conv(C_curr, C_curr, 3, 3)
    bn3 = init.bn(C_curr, True)
    sc1, sh1 = bn_fold(bn1)
    sc2, sh2 = bn_fold(bn2)
    sc3, sh3 = bn_fold(bn3)
    stem0_wp1 = prep_matmul(_conv_weight_matrix(w1), sc1, sh1)
    stem0_wp2 = prep_matmul(_conv_weight_matrix(w2), sc2, sh2)
    stem1_wp = prep_matmul(_conv_weight_matrix(w3), sc3, sh3)

    cpp, cp, cc = C_curr, C_curr, C
    cells = []
    reduction_prev = True
    for i in range(layers):
        if i in [layers // 3, 2 * layers // 3]:
            cc *= 2
            reduction = True
        else:
            reduction = False
        cells.append(make_cell(init, steps, multiplier, cpp, cp, cc, reduction, reduction_prev))
        reduction_prev = reduction
        cpp, cp = cp, multiplier * cc

    lastact_bn = init.bn(cp, True)
    last_sc, last_sh = bn_fold(lastact_bn)
    cls_w, cls_b = init.linear(num_classes, cp)
    wp_cls = prep_matmul(cls_w.T, None, cls_b)

    k = sum(1 for i in range(steps) for _ in range(2 + i))
    # arch parameters initialized exactly like the module: 0.001 * zeros == zeros
    alphas = dict(normal_non=jnp.zeros((k, 4), jnp.float32),
                  normal_par=jnp.zeros((k, 4), jnp.float32),
                  reduce_non=jnp.zeros((k, 4), jnp.float32),
                  reduce_par=jnp.zeros((k, 4), jnp.float32))
    T = 1.0

    def forward(x_nchw):
        x = jnp.transpose(x_nchw, (0, 2, 3, 1)).astype(jnp.float32)   # NCHW -> NHWC
        w_red = jnp.concatenate([jax.nn.softmax(alphas['reduce_non'] / T, axis=-1),
                                 jax.nn.softmax(alphas['reduce_par'] / T, axis=-1)], axis=-1)
        w_nor = jnp.concatenate([jax.nn.softmax(alphas['normal_non'] / T, axis=-1),
                                 jax.nn.softmax(alphas['normal_par'] / T, axis=-1)], axis=-1)
        y = conv2d(x, stem0_wp1, 3, 3, stride=2, padding=1, relu_in=False)
        s0 = conv2d(y, stem0_wp2, 3, 3, stride=2, padding=1, relu_in=True)
        s1 = conv2d(s0, stem1_wp, 3, 3, stride=2, padding=1, relu_in=True)
        for cell_fwd, reduction in cells:
            weights = w_red if reduction else w_nor
            s0, s1 = s1, cell_fwd(s0, s1, weights)
        # lastact: BN + ReLU (Pallas), global avg pool (glue), Linear (Pallas matmul)
        N, H, W, Cf = s1.shape
        y = pallas_affine(s1.reshape(N * H * W, Cf), last_sc, last_sh, relu=True)
        pooled = jnp.mean(y.reshape(N, H, W, Cf), axis=(1, 2))
        logits = pallas_matmul(pooled, wp_cls)
        return logits

    return forward


if __name__ == "__main__":
    key = jax.random.PRNGKey(0)
    x = jax.random.normal(key, (2, 3, 32, 32), jnp.float32)   # small NCHW "ImageNet" input

    init = Init(seed=42)
    # Small but structurally faithful config: C=4, 2 layers (both reduction per the
    # `layers//3` rule), steps=2, multiplier=2, stem_multiplier=3.
    forward = build_network(init, C=4, num_classes=10, layers=2,
                            steps=2, multiplier=2, stem_multiplier=3)

    logits = jax.jit(forward)(x)
    logits = jax.block_until_ready(logits)
    assert logits.shape == (2, 10), logits.shape
    assert bool(jnp.all(jnp.isfinite(logits)))
    print("KERNEL_OK")
</pallas_src>

<mosaic_0001>
module attributes {stable_mosaic.version = 11 : i64} {
  func.func @_matmul_kernel(%arg0: i32, %arg1: i32, %arg2: i32, %arg3: memref<256x128xbf16, #tpu.memory_space<vmem>>, %arg4: memref<128x128xbf16, #tpu.memory_space<vmem>>, %arg5: memref<1x128xf32, #tpu.memory_space<vmem>>, %arg6: memref<256x128xf32, #tpu.memory_space<vmem>>, %arg7: memref<256x128xf32, #tpu.memory_space<vmem>>) attributes {dimension_semantics = [#tpu.dimension_semantics<parallel>, #tpu.dimension_semantics<parallel>, #tpu.dimension_semantics<arbitrary>], iteration_bounds = array<i64: 2, 1, 1>, scalar_prefetch = 0 : i64, scratch_operands = 1 : i64, tpu.core_type = #tpu.core_type<tc>, window_params = [{transform_indices = @transform_0, window_bounds = array<i64: 256, 128>}, {transform_indices = @transform_1, window_bounds = array<i64: 128, 128>}, {transform_indices = @transform_2, window_bounds = array<i64: 1, 128>}, {transform_indices = @transform_3, window_bounds = array<i64: 256, 128>}]} {
    %c0_i32 = arith.constant 0 : i32
    %0 = arith.cmpi eq, %arg2, %c0_i32 : i32
    %1 = arith.extui %0 : i1 to i32
    %c0_i32_0 = arith.constant 0 : i32
    %2 = arith.cmpi ne, %1, %c0_i32_0 : i32
    scf.if %2 {
      %cst_10 = arith.constant 0.000000e+00 : f32
      %12 = vector.broadcast %cst_10 : f32 to vector<256x128xf32>
      %c0_11 = arith.constant 0 : index
      %c0_12 = arith.constant 0 : index
      %13 = vector.load %arg7[%c0_11, %c0_12] : memref<256x128xf32, #tpu.memory_space<vmem>>, vector<256x128xf32>
      tpu.vector_store %arg7[%c0_11, %c0_12], %12 {strides = array<i32>} : memref<256x128xf32, #tpu.memory_space<vmem>>, vector<256x128xf32>,
    } else {
    }
    %c0 = arith.constant 0 : index
    %c0_1 = arith.constant 0 : index
    %3 = vector.load %arg3[%c0, %c0_1] : memref<256x128xbf16, #tpu.memory_space<vmem>>, vector<256x128xbf16>
    %c0_2 = arith.constant 0 : index
    %c0_3 = arith.constant 0 : index
    %4 = vector.load %arg7[%c0_2, %c0_3] : memref<256x128xf32, #tpu.memory_space<vmem>>, vector<256x128xf32>
    %c0_4 = arith.constant 0 : index
    %c0_5 = arith.constant 0 : index
    %5 = vector.load %arg4[%c0_4, %c0_5] : memref<128x128xbf16, #tpu.memory_space<vmem>>, vector<128x128xbf16>
    %cst = arith.constant dense<0.000000e+00> : vector<256x128xf32>
    %6 = tpu.matmul %3, %5, %cst {dimension_numbers = #tpu.dot_dimension_numbers<[1], [0], [0], [1], [0, 0, 1, 1], [], []>} : vector<256x128xbf16>, vector<128x128xbf16>, vector<256x128xf32> -> vector<256x128xf32>
    %7 = arith.addf %4, %6 : vector<256x128xf32>
    %c0_6 = arith.constant 0 : index
    %c0_7 = arith.constant 0 : index
    %8 = vector.load %arg7[%c0_6, %c0_7] : memref<256x128xf32, #tpu.memory_space<vmem>>, vector<256x128xf32>
    tpu.vector_store %arg7[%c0_6, %c0_7], %7 {strides = array<i32>} : memref<256x128xf32, #tpu.memory_space<vmem>>, vector<256x128xf32>,
    %c0_i32_8 = arith.constant 0 : i32
    %9 = arith.cmpi eq, %arg2, %c0_i32_8 : i32
    %10 = arith.extui %9 : i1 to i32
    %c0_i32_9 = arith.constant 0 : i32
    %11 = arith.cmpi ne, %10, %c0_i32_9 : i32
    scf.if %11 {
      %c0_10 = arith.constant 0 : index
      %c0_11 = arith.constant 0 : index
      %12 = vector.load %arg7[%c0_10, %c0_11] : memref<256x128xf32, #tpu.memory_space<vmem>>, vector<256x128xf32>
      %c0_12 = arith.constant 0 : index
      %c0_13 = arith.constant 0 : index
      %13 = vector.load %arg5[%c0_12, %c0_13] : memref<1x128xf32, #tpu.memory_space<vmem>>, vector<1x128xf32>
      %14 = vector.broadcast %13 : vector<1x128xf32> to vector<256x128xf32>
      %15 = arith.addf %12, %14 : vector<256x128xf32>
      %c0_14 = arith.constant 0 : index
      %c0_15 = arith.constant 0 : index
      %16 = vector.load %arg6[%c0_14, %c0_15] : memref<256x128xf32, #tpu.memory_space<vmem>>, vector<256x128xf32>
      tpu.vector_store %arg6[%c0_14, %c0_15], %15 {strides = array<i32>} : memref<256x128xf32, #tpu.memory_space<vmem>>, vector<256x128xf32>,
    } else {
    }
    return
  }
  func.func @transform_0(%arg0: i32, %arg1: i32, %arg2: i32) -> (i32, i32) {
    %c0_i32 = arith.constant 0 : i32
    return %arg0, %arg2 : i32, i32
  }
  func.func @transform_1(%arg0: i32, %arg1: i32, %arg2: i32) -> (i32, i32) {
    %c0_i32 = arith.constant 0 : i32
    return %arg2, %arg1 : i32, i32
  }
  func.func @transform_2(%arg0: i32, %arg1: i32, %arg2: i32) -> (i32, i32) {
    %c0_i32 = arith.constant 0 : i32
    %c0_i32_0 = arith.constant 0 : i32
    return %c0_i32, %arg1 : i32, i32
  }
  func.func @transform_3(%arg0: i32, %arg1: i32, %arg2: i32) -> (i32, i32) {
    %c0_i32 = arith.constant 0 : i32
    return %arg0, %arg1 : i32, i32
  }
}

module attributes {stable_mosaic.version = 11 : i64} {
  func.func @_matmul_kernel(%arg0: i32, %arg1: i32, %arg2: i32, %arg3: memref<128x128xbf16, #tpu.memory_space<vmem>>, %arg4: memref<128x128xbf16, #tpu.memory_space<vmem>>, %arg5: memref<1x128xf32, #tpu.memory_space<vmem>>, %arg6: memref<128x128xf32, #tpu.memory_space<vmem>>, %arg7: memref<128x128xf32, #tpu.memory_space<vmem>>) attributes {dimension_semantics = [#tpu.dimension_semantics<parallel>, #tpu.dimension_semantics<parallel>, #tpu.dimension_semantics<arbitrary>], iteration_bounds = array<i64: 1, 1, 1>, scalar_prefetch = 0 : i64, scratch_operands = 1 : i64, tpu.core_type = #tpu.core_type<tc>, window_params = [{transform_indices = @transform_0, window_bounds = array<i64: 128, 128>}, {transform_indices = @transform_1, window_bounds = array<i64: 128, 128>}, {transform_indices = @transform_2, window_bounds = array<i64: 1, 128>}, {transform_indices = @transform_3, window_bounds = array<i64: 128, 128>}]} {
    %c0_i32 = arith.constant 0 : i32
    %0 = arith.cmpi eq, %arg2, %c0_i32 : i32
    %1 = arith.extui %0 : i1 to i32
    %c0_i32_0 = arith.constant 0 : i32
    %2 = arith.cmpi ne, %1, %c0_i32_0 : i32
    scf.if %2 {
      %cst_11 = arith.constant 0.000000e+00 : f32
      %14 = vector.broadcast %cst_11 : f32 to vector<128x128xf32>
      %c0_12 = arith.constant 0 : index
      %c0_13 = arith.constant 0 : index
      %15 = vector.load %arg7[%c0_12, %c0_13] : memref<128x128xf32, #tpu.memory_space<vmem>>, vector<128x128xf32>
      tpu.vector_store %arg7[%c0_12, %c0_13], %14 {strides = array<i32>} : memref<128x128xf32, #tpu.memory_space<vmem>>, vector<128x128xf32>,
    } else {
    }
    %c0 = arith.constant 0 : index
    %c0_1 = arith.constant 0 : index
    %3 = vector.load %arg3[%c0, %c0_1] : memref<128x128xbf16, #tpu.memory_space<vmem>>, vector<128x128xbf16>
    %cst = arith.constant 0.000000e+00 : bf16
    %4 = vector.broadcast %cst : bf16 to vector<128x128xbf16>
    %5 = arith.maximumf %3, %4 : vector<128x128xbf16>
    %c0_2 = arith.constant 0 : index
    %c0_3 = arith.constant 0 : index
    %6 = vector.load %arg7[%c0_2, %c0_3] : memref<128x128xf32, #tpu.memory_space<vmem>>, vector<128x128xf32>
    %c0_4 = arith.constant 0 : index
    %c0_5 = arith.constant 0 : index
    %7 = vector.load %arg4[%c0_4, %c0_5] : memref<128x128xbf16, #tpu.memory_space<vmem>>, vector<128x128xbf16>
    %cst_6 = arith.constant dense<0.000000e+00> : vector<128x128xf32>
    %8 = tpu.matmul %5, %7, %cst_6 {dimension_numbers = #tpu.dot_dimension_numbers<[1], [0], [0], [1], [0, 0, 1, 1], [], []>} : vector<128x128xbf16>, vector<128x128xbf16>, vector<128x128xf32> -> vector<128x128xf32>
    %9 = arith.addf %6, %8 : vector<128x128xf32>
    %c0_7 = arith.constant 0 : index
    %c0_8 = arith.constant 0 : index
    %10 = vector.load %arg7[%c0_7, %c0_8] : memref<128x128xf32, #tpu.memory_space<vmem>>, vector<128x128xf32>
    tpu.vector_store %arg7[%c0_7, %c0_8], %9 {strides = array<i32>} : memref<128x128xf32, #tpu.memory_space<vmem>>, vector<128x128xf32>,
    %c0_i32_9 = arith.constant 0 : i32
    %11 = arith.cmpi eq, %arg2, %c0_i32_9 : i32
    %12 = arith.extui %11 : i1 to i32
    %c0_i32_10 = arith.constant 0 : i32
    %13 = arith.cmpi ne, %12, %c0_i32_10 : i32
    scf.if %13 {
      %c0_11 = arith.constant 0 : index
      %c0_12 = arith.constant 0 : index
      %14 = vector.load %arg7[%c0_11, %c0_12] : memref<128x128xf32, #tpu.memory_space<vmem>>, vector<128x128xf32>
      %c0_13 = arith.constant 0 : index
      %c0_14 = arith.constant 0 : index
      %15 = vector.load %arg5[%c0_13, %c0_14] : memref<1x128xf32, #tpu.memory_space<vmem>>, vector<1x128xf32>
      %16 = vector.broadcast %15 : vector<1x128xf32> to vector<128x128xf32>
      %17 = arith.addf %14, %16 : vector<128x128xf32>
      %c0_15 = arith.constant 0 : index
      %c0_16 = arith.constant 0 : index
      %18 = vector.load %arg6[%c0_15, %c0_16] : memref<128x128xf32, #tpu.memory_space<vmem>>, vector<128x128xf32>
      tpu.vector_store %arg6[%c0_15, %c0_16], %17 {strides = array<i32>} : memref<128x128xf32, #tpu.memory_space<vmem>>, vector<128x128xf32>,
    } else {
    }
    return
  }
  func.func @transform_0(%arg0: i32, %arg1: i32, %arg2: i32) -> (i32, i32) {
    %c0_i32 = arith.constant 0 : i32
    return %arg0, %arg2 : i32, i32
  }
  func.func @transform_1(%arg0: i32, %arg1: i32, %arg2: i32) -> (i32, i32) {
    %c0_i32 = arith.constant 0 : i32
    return %arg2, %arg1 : i32, i32
  }
  func.func @transform_2(%arg0: i32, %arg1: i32, %arg2: i32) -> (i32, i32) {
    %c0_i32 = arith.constant 0 : i32
    %c0_i32_0 = arith.constant 0 : i32
    return %c0_i32, %arg1 : i32, i32
  }
  func.func @transform_3(%arg0: i32, %arg1: i32, %arg2: i32) -> (i32, i32) {
    %c0_i32 = arith.constant 0 : i32
    return %arg0, %arg1 : i32, i32
  }
}

module attributes {stable_mosaic.version = 11 : i64} {
  func.func @_matmul_kernel(%arg0: i32, %arg1: i32, %arg2: i32, %arg3: memref<32x128xbf16, #tpu.memory_space<vmem>>, %arg4: memref<128x128xbf16, #tpu.memory_space<vmem>>, %arg5: memref<1x128xf32, #tpu.memory_space<vmem>>, %arg6: memref<32x128xf32, #tpu.memory_space<vmem>>, %arg7: memref<32x128xf32, #tpu.memory_space<vmem>>) attributes {dimension_semantics = [#tpu.dimension_semantics<parallel>, #tpu.dimension_semantics<parallel>, #tpu.dimension_semantics<arbitrary>], iteration_bounds = array<i64: 1, 1, 1>, scalar_prefetch = 0 : i64, scratch_operands = 1 : i64, tpu.core_type = #tpu.core_type<tc>, window_params = [{transform_indices = @transform_0, window_bounds = array<i64: 32, 128>}, {transform_indices = @transform_1, window_bounds = array<i64: 128, 128>}, {transform_indices = @transform_2, window_bounds = array<i64: 1, 128>}, {transform_indices = @transform_3, window_bounds = array<i64: 32, 128>}]} {
    %c0_i32 = arith.constant 0 : i32
    %0 = arith.cmpi eq, %arg2, %c0_i32 : i32
    %1 = arith.extui %0 : i1 to i32
    %c0_i32_0 = arith.constant 0 : i32
    %2 = arith.cmpi ne, %1, %c0_i32_0 : i32
    scf.if %2 {
      %cst_11 = arith.constant 0.000000e+00 : f32
      %14 = vector.broadcast %cst_11 : f32 to vector<32x128xf32>
      %c0_12 = arith.constant 0 : index
      %c0_13 = arith.constant 0 : index
      %15 = vector.load %arg7[%c0_12, %c0_13] : memref<32x128xf32, #tpu.memory_space<vmem>>, vector<32x128xf32>
      tpu.vector_store %arg7[%c0_12, %c0_13], %14 {strides = array<i32>} : memref<32x128xf32, #tpu.memory_space<vmem>>, vector<32x128xf32>,
    } else {
    }
    %c0 = arith.constant 0 : index
    %c0_1 = arith.constant 0 : index
    %3 = vector.load %arg3[%c0, %c0_1] : memref<32x128xbf16, #tpu.memory_space<vmem>>, vector<32x128xbf16>
    %cst = arith.constant 0.000000e+00 : bf16
    %4 = vector.broadcast %cst : bf16 to vector<32x128xbf16>
    %5 = arith.maximumf %3, %4 : vector<32x128xbf16>
    %c0_2 = arith.constant 0 : index
    %c0_3 = arith.constant 0 : index
    %6 = vector.load %arg7[%c0_2, %c0_3] : memref<32x128xf32, #tpu.memory_space<vmem>>, vector<32x128xf32>
    %c0_4 = arith.constant 0 : index
    %c0_5 = arith.constant 0 : index
    %7 = vector.load %arg4[%c0_4, %c0_5] : memref<128x128xbf16, #tpu.memory_space<vmem>>, vector<128x128xbf16>
    %cst_6 = arith.constant dense<0.000000e+00> : vector<32x128xf32>
    %8 = tpu.matmul %5, %7, %cst_6 {dimension_numbers = #tpu.dot_dimension_numbers<[1], [0], [0], [1], [0, 0, 1, 1], [], []>} : vector<32x128xbf16>, vector<128x128xbf16>, vector<32x128xf32> -> vector<32x128xf32>
    %9 = arith.addf %6, %8 : vector<32x128xf32>
    %c0_7 = arith.constant 0 : index
    %c0_8 = arith.constant 0 : index
    %10 = vector.load %arg7[%c0_7, %c0_8] : memref<32x128xf32, #tpu.memory_space<vmem>>, vector<32x128xf32>
    tpu.vector_store %arg7[%c0_7, %c0_8], %9 {strides = array<i32>} : memref<32x128xf32, #tpu.memory_space<vmem>>, vector<32x128xf32>,
    %c0_i32_9 = arith.constant 0 : i32
    %11 = arith.cmpi eq, %arg2, %c0_i32_9 : i32
    %12 = arith.extui %11 : i1 to i32
    %c0_i32_10 = arith.constant 0 : i32
    %13 = arith.cmpi ne, %12, %c0_i32_10 : i32
    scf.if %13 {
      %c0_11 = arith.constant 0 : index
      %c0_12 = arith.constant 0 : index
      %14 = vector.load %arg7[%c0_11, %c0_12] : memref<32x128xf32, #tpu.memory_space<vmem>>, vector<32x128xf32>
      %c0_13 = arith.constant 0 : index
      %c0_14 = arith.constant 0 : index
      %15 = vector.load %arg5[%c0_13, %c0_14] : memref<1x128xf32, #tpu.memory_space<vmem>>, vector<1x128xf32>
      %16 = vector.broadcast %15 : vector<1x128xf32> to vector<32x128xf32>
      %17 = arith.addf %14, %16 : vector<32x128xf32>
      %c0_15 = arith.constant 0 : index
      %c0_16 = arith.constant 0 : index
      %18 = vector.load %arg6[%c0_15, %c0_16] : memref<32x128xf32, #tpu.memory_space<vmem>>, vector<32x128xf32>
      tpu.vector_store %arg6[%c0_15, %c0_16], %17 {strides = array<i32>} : memref<32x128xf32, #tpu.memory_space<vmem>>, vector<32x128xf32>,
    } else {
    }
    return
  }
  func.func @transform_0(%arg0: i32, %arg1: i32, %arg2: i32) -> (i32, i32) {
    %c0_i32 = arith.constant 0 : i32
    return %arg0, %arg2 : i32, i32
  }
  func.func @transform_1(%arg0: i32, %arg1: i32, %arg2: i32) -> (i32, i32) {
    %c0_i32 = arith.constant 0 : i32
    return %arg2, %arg1 : i32, i32
  }
  func.func @transform_2(%arg0: i32, %arg1: i32, %arg2: i32) -> (i32, i32) {
    %c0_i32 = arith.constant 0 : i32
    %c0_i32_0 = arith.constant 0 : i32
    return %c0_i32, %arg1 : i32, i32
  }
  func.func @transform_3(%arg0: i32, %arg1: i32, %arg2: i32) -> (i32, i32) {
    %c0_i32 = arith.constant 0 : i32
    return %arg0, %arg1 : i32, i32
  }
}

module attributes {stable_mosaic.version = 11 : i64} {
  func.func @_matmul_kernel(%arg0: i32, %arg1: i32, %arg2: i32, %arg3: memref<16x128xbf16, #tpu.memory_space<vmem>>, %arg4: memref<128x128xbf16, #tpu.memory_space<vmem>>, %arg5: memref<1x128xf32, #tpu.memory_space<vmem>>, %arg6: memref<16x128xf32, #tpu.memory_space<vmem>>, %arg7: memref<16x128xf32, #tpu.memory_space<vmem>>) attributes {dimension_semantics = [#tpu.dimension_semantics<parallel>, #tpu.dimension_semantics<parallel>, #tpu.dimension_semantics<arbitrary>], iteration_bounds = array<i64: 1, 1, 1>, scalar_prefetch = 0 : i64, scratch_operands = 1 : i64, tpu.core_type = #tpu.core_type<tc>, window_params = [{transform_indices = @transform_0, window_bounds = array<i64: 16, 128>}, {transform_indices = @transform_1, window_bounds = array<i64: 128, 128>}, {transform_indices = @transform_2, window_bounds = array<i64: 1, 128>}, {transform_indices = @transform_3, window_bounds = array<i64: 16, 128>}]} {
    %c0_i32 = arith.constant 0 : i32
    %0 = arith.cmpi eq, %arg2, %c0_i32 : i32
    %1 = arith.extui %0 : i1 to i32
    %c0_i32_0 = arith.constant 0 : i32
    %2 = arith.cmpi ne, %1, %c0_i32_0 : i32
    scf.if %2 {
      %cst_11 = arith.constant 0.000000e+00 : f32
      %14 = vector.broadcast %cst_11 : f32 to vector<16x128xf32>
      %c0_12 = arith.constant 0 : index
      %c0_13 = arith.constant 0 : index
      %15 = vector.load %arg7[%c0_12, %c0_13] : memref<16x128xf32, #tpu.memory_space<vmem>>, vector<16x128xf32>
      tpu.vector_store %arg7[%c0_12, %c0_13], %14 {strides = array<i32>} : memref<16x128xf32, #tpu.memory_space<vmem>>, vector<16x128xf32>,
    } else {
    }
    %c0 = arith.constant 0 : index
    %c0_1 = arith.constant 0 : index
    %3 = vector.load %arg3[%c0, %c0_1] : memref<16x128xbf16, #tpu.memory_space<vmem>>, vector<16x128xbf16>
    %cst = arith.constant 0.000000e+00 : bf16
    %4 = vector.broadcast %cst : bf16 to vector<16x128xbf16>
    %5 = arith.maximumf %3, %4 : vector<16x128xbf16>
    %c0_2 = arith.constant 0 : index
    %c0_3 = arith.constant 0 : index
    %6 = vector.load %arg7[%c0_2, %c0_3] : memref<16x128xf32, #tpu.memory_space<vmem>>, vector<16x128xf32>
    %c0_4 = arith.constant 0 : index
    %c0_5 = arith.constant 0 : index
    %7 = vector.load %arg4[%c0_4, %c0_5] : memref<128x128xbf16, #tpu.memory_space<vmem>>, vector<128x128xbf16>
    %cst_6 = arith.constant dense<0.000000e+00> : vector<16x128xf32>
    %8 = tpu.matmul %5, %7, %cst_6 {dimension_numbers = #tpu.dot_dimension_numbers<[1], [0], [0], [1], [0, 0, 1, 1], [], []>} : vector<16x128xbf16>, vector<128x128xbf16>, vector<16x128xf32> -> vector<16x128xf32>
    %9 = arith.addf %6, %8 : vector<16x128xf32>
    %c0_7 = arith.constant 0 : index
    %c0_8 = arith.constant 0 : index
    %10 = vector.load %arg7[%c0_7, %c0_8] : memref<16x128xf32, #tpu.memory_space<vmem>>, vector<16x128xf32>
    tpu.vector_store %arg7[%c0_7, %c0_8], %9 {strides = array<i32>} : memref<16x128xf32, #tpu.memory_space<vmem>>, vector<16x128xf32>,
    %c0_i32_9 = arith.constant 0 : i32
    %11 = arith.cmpi eq, %arg2, %c0_i32_9 : i32
    %12 = arith.extui %11 : i1 to i32
    %c0_i32_10 = arith.constant 0 : i32
    %13 = arith.cmpi ne, %12, %c0_i32_10 : i32
    scf.if %13 {
      %c0_11 = arith.constant 0 : index
      %c0_12 = arith.constant 0 : index
      %14 = vector.load %arg7[%c0_11, %c0_12] : memref<16x128xf32, #tpu.memory_space<vmem>>, vector<16x128xf32>
      %c0_13 = arith.constant 0 : index
      %c0_14 = arith.constant 0 : index
      %15 = vector.load %arg5[%c0_13, %c0_14] : memref<1x128xf32, #tpu.memory_space<vmem>>, vector<1x128xf32>
      %16 = vector.broadcast %15 : vector<1x128xf32> to vector<16x128xf32>
      %17 = arith.addf %14, %16 : vector<16x128xf32>
      %c0_15 = arith.constant 0 : index
      %c0_16 = arith.constant 0 : index
      %18 = vector.load %arg6[%c0_15, %c0_16] : memref<16x128xf32, #tpu.memory_space<vmem>>, vector<16x128xf32>
      tpu.vector_store %arg6[%c0_15, %c0_16], %17 {strides = array<i32>} : memref<16x128xf32, #tpu.memory_space<vmem>>, vector<16x128xf32>,
    } else {
    }
    return
  }
  func.func @transform_0(%arg0: i32, %arg1: i32, %arg2: i32) -> (i32, i32) {
    %c0_i32 = arith.constant 0 : i32
    return %arg0, %arg2 : i32, i32
  }
  func.func @transform_1(%arg0: i32, %arg1: i32, %arg2: i32) -> (i32, i32) {
    %c0_i32 = arith.constant 0 : i32
    return %arg2, %arg1 : i32, i32
  }
  func.func @transform_2(%arg0: i32, %arg1: i32, %arg2: i32) -> (i32, i32) {
    %c0_i32 = arith.constant 0 : i32
    %c0_i32_0 = arith.constant 0 : i32
    return %c0_i32, %arg1 : i32, i32
  }
  func.func @transform_3(%arg0: i32, %arg1: i32, %arg2: i32) -> (i32, i32) {
    %c0_i32 = arith.constant 0 : i32
    return %arg0, %arg1 : i32, i32
  }
}

module attributes {stable_mosaic.version = 11 : i64} {
  func.func @_dw_kernel(%arg0: i32, %arg1: i32, %arg2: memref<1x16x128xbf16, #tpu.memory_space<vmem>>, %arg3: memref<1x1x128xf32, #tpu.memory_space<vmem>>, %arg4: memref<16x128xf32, #tpu.memory_space<vmem>>, %arg5: memref<16x128xf32, #tpu.memory_space<vmem>>) attributes {dimension_semantics = [#tpu.dimension_semantics<parallel>, #tpu.dimension_semantics<arbitrary>], iteration_bounds = array<i64: 1, 9>, scalar_prefetch = 0 : i64, scratch_operands = 1 : i64, tpu.core_type = #tpu.core_type<tc>, window_params = [{transform_indices = @transform_0, window_bounds = array<i64: 1, 16, 128>}, {transform_indices = @transform_1, window_bounds = array<i64: 1, 1, 128>}, {transform_indices = @transform_2, window_bounds = array<i64: 16, 128>}]} {
    %c0_i32 = arith.constant 0 : i32
    %0 = arith.cmpi eq, %arg1, %c0_i32 : i32
    %1 = arith.extui %0 : i1 to i32
    %c0_i32_0 = arith.constant 0 : i32
    %2 = arith.cmpi ne, %1, %c0_i32_0 : i32
    scf.if %2 {
      %cst_11 = arith.constant 0.000000e+00 : f32
      %18 = vector.broadcast %cst_11 : f32 to vector<16x128xf32>
      %c0_12 = arith.constant 0 : index
      %c0_13 = arith.constant 0 : index
      %19 = vector.load %arg5[%c0_12, %c0_13] : memref<16x128xf32, #tpu.memory_space<vmem>>, vector<16x128xf32>
      tpu.vector_store %arg5[%c0_12, %c0_13], %18 {strides = array<i32>} : memref<16x128xf32, #tpu.memory_space<vmem>>, vector<16x128xf32>,
    } else {
    }
    %c0 = arith.constant 0 : index
    %c0_1 = arith.constant 0 : index
    %c0_2 = arith.constant 0 : index
    %3 = vector.load %arg2[%c0, %c0_1, %c0_2] : memref<1x16x128xbf16, #tpu.memory_space<vmem>>, vector<1x16x128xbf16>
    %4 = vector.shape_cast %3 : vector<1x16x128xbf16> to vector<16x128xbf16>
    %5 = arith.extf %4 : vector<16x128xbf16> to vector<16x128xf32>
    %cst = arith.constant 0.000000e+00 : f32
    %6 = vector.broadcast %cst : f32 to vector<16x128xf32>
    %7 = arith.maximumf %5, %6 : vector<16x128xf32>
    %c0_3 = arith.constant 0 : index
    %c0_4 = arith.constant 0 : index
    %8 = vector.load %arg5[%c0_3, %c0_4] : memref<16x128xf32, #tpu.memory_space<vmem>>, vector<16x128xf32>
    %c0_5 = arith.constant 0 : index
    %c0_6 = arith.constant 0 : index
    %c0_7 = arith.constant 0 : index
    %9 = vector.load %arg3[%c0_5, %c0_6, %c0_7] : memref<1x1x128xf32, #tpu.memory_space<vmem>>, vector<1x1x128xf32>
    %10 = vector.shape_cast %9 : vector<1x1x128xf32> to vector<1x128xf32>
    %11 = vector.broadcast %10 : vector<1x128xf32> to vector<16x128xf32>
    %12 = arith.mulf %7, %11 : vector<16x128xf32>
    %13 = arith.addf %8, %12 : vector<16x128xf32>
    %c0_8 = arith.constant 0 : index
    %c0_9 = arith.constant 0 : index
    %14 = vector.load %arg5[%c0_8, %c0_9] : memref<16x128xf32, #tpu.memory_space<vmem>>, vector<16x128xf32>
    tpu.vector_store %arg5[%c0_8, %c0_9], %13 {strides = array<i32>} : memref<16x128xf32, #tpu.memory_space<vmem>>, vector<16x128xf32>,
    %c8_i32 = arith.constant 8 : i32
    %15 = arith.cmpi eq, %arg1, %c8_i32 : i32
    %16 = arith.extui %15 : i1 to i32
    %c0_i32_10 = arith.constant 0 : i32
    %17 = arith.cmpi ne, %16, %c0_i32_10 : i32
    scf.if %17 {
      %c0_11 = arith.constant 0 : index
      %c0_12 = arith.constant 0 : index
      %18 = vector.load %arg5[%c0_11, %c0_12] : memref<16x128xf32, #tpu.memory_space<vmem>>, vector<16x128xf32>
      %c0_13 = arith.constant 0 : index
      %c0_14 = arith.constant 0 : index
      %19 = vector.load %arg4[%c0_13, %c0_14] : memref<16x128xf32, #tpu.memory_space<vmem>>, vector<16x128xf32>
      tpu.vector_store %arg4[%c0_13, %c0_14], %18 {strides = array<i32>} : memref<16x128xf32, #tpu.memory_space<vmem>>, vector<16x128xf32>,
    } else {
    }
    return
  }
  func.func @transform_0(%arg0: i32, %arg1: i32) -> (i32, i32, i32) {
    %c0_i32 = arith.constant 0 : i32
    %c0_i32_0 = arith.constant 0 : i32
    return %arg1, %arg0, %c0_i32 : i32, i32, i32
  }
  func.func @transform_1(%arg0: i32, %arg1: i32) -> (i32, i32, i32) {
    %c0_i32 = arith.constant 0 : i32
    %c0_i32_0 = arith.constant 0 : i32
    %c0_i32_1 = arith.constant 0 : i32
    return %arg1, %c0_i32, %c0_i32_0 : i32, i32, i32
  }
  func.func @transform_2(%arg0: i32, %arg1: i32) -> (i32, i32) {
    %c0_i32 = arith.constant 0 : i32
    %c0_i32_0 = arith.constant 0 : i32
    return %arg0, %c0_i32 : i32, i32
  }
}

module attributes {stable_mosaic.version = 11 : i64} {
  func.func @_matmul_kernel(%arg0: i32, %arg1: i32, %arg2: i32, %arg3: memref<16x128xbf16, #tpu.memory_space<vmem>>, %arg4: memref<128x128xbf16, #tpu.memory_space<vmem>>, %arg5: memref<1x128xf32, #tpu.memory_space<vmem>>, %arg6: memref<16x128xf32, #tpu.memory_space<vmem>>, %arg7: memref<16x128xf32, #tpu.memory_space<vmem>>) attributes {dimension_semantics = [#tpu.dimension_semantics<parallel>, #tpu.dimension_semantics<parallel>, #tpu.dimension_semantics<arbitrary>], iteration_bounds = array<i64: 1, 1, 1>, scalar_prefetch = 0 : i64, scratch_operands = 1 : i64, tpu.core_type = #tpu.core_type<tc>, window_params = [{transform_indices = @transform_0, window_bounds = array<i64: 16, 128>}, {transform_indices = @transform_1, window_bounds = array<i64: 128, 128>}, {transform_indices = @transform_2, window_bounds = array<i64: 1, 128>}, {transform_indices = @transform_3, window_bounds = array<i64: 16, 128>}]} {
    %c0_i32 = arith.constant 0 : i32
    %0 = arith.cmpi eq, %arg2, %c0_i32 : i32
    %1 = arith.extui %0 : i1 to i32
    %c0_i32_0 = arith.constant 0 : i32
    %2 = arith.cmpi ne, %1, %c0_i32_0 : i32
    scf.if %2 {
      %cst_10 = arith.constant 0.000000e+00 : f32
      %12 = vector.broadcast %cst_10 : f32 to vector<16x128xf32>
      %c0_11 = arith.constant 0 : index
      %c0_12 = arith.constant 0 : index
      %13 = vector.load %arg7[%c0_11, %c0_12] : memref<16x128xf32, #tpu.memory_space<vmem>>, vector<16x128xf32>
      tpu.vector_store %arg7[%c0_11, %c0_12], %12 {strides = array<i32>} : memref<16x128xf32, #tpu.memory_space<vmem>>, vector<16x128xf32>,
    } else {
    }
    %c0 = arith.constant 0 : index
    %c0_1 = arith.constant 0 : index
    %3 = vector.load %arg3[%c0, %c0_1] : memref<16x128xbf16, #tpu.memory_space<vmem>>, vector<16x128xbf16>
    %c0_2 = arith.constant 0 : index
    %c0_3 = arith.constant 0 : index
    %4 = vector.load %arg7[%c0_2, %c0_3] : memref<16x128xf32, #tpu.memory_space<vmem>>, vector<16x128xf32>
    %c0_4 = arith.constant 0 : index
    %c0_5 = arith.constant 0 : index
    %5 = vector.load %arg4[%c0_4, %c0_5] : memref<128x128xbf16, #tpu.memory_space<vmem>>, vector<128x128xbf16>
    %cst = arith.constant dense<0.000000e+00> : vector<16x128xf32>
    %6 = tpu.matmul %3, %5, %cst {dimension_numbers = #tpu.dot_dimension_numbers<[1], [0], [0], [1], [0, 0, 1, 1], [], []>} : vector<16x128xbf16>, vector<128x128xbf16>, vector<16x128xf32> -> vector<16x128xf32>
    %7 = arith.addf %4, %6 : vector<16x128xf32>
    %c0_6 = arith.constant 0 : index
    %c0_7 = arith.constant 0 : index
    %8 = vector.load %arg7[%c0_6, %c0_7] : memref<16x128xf32, #tpu.memory_space<vmem>>, vector<16x128xf32>
    tpu.vector_store %arg7[%c0_6, %c0_7], %7 {strides = array<i32>} : memref<16x128xf32, #tpu.memory_space<vmem>>, vector<16x128xf32>,
    %c0_i32_8 = arith.constant 0 : i32
    %9 = arith.cmpi eq, %arg2, %c0_i32_8 : i32
    %10 = arith.extui %9 : i1 to i32
    %c0_i32_9 = arith.constant 0 : i32
    %11 = arith.cmpi ne, %10, %c0_i32_9 : i32
    scf.if %11 {
      %c0_10 = arith.constant 0 : index
      %c0_11 = arith.constant 0 : index
      %12 = vector.load %arg7[%c0_10, %c0_11] : memref<16x128xf32, #tpu.memory_space<vmem>>, vector<16x128xf32>
      %c0_12 = arith.constant 0 : index
      %c0_13 = arith.constant 0 : index
      %13 = vector.load %arg5[%c0_12, %c0_13] : memref<1x128xf32, #tpu.memory_space<vmem>>, vector<1x128xf32>
      %14 = vector.broadcast %13 : vector<1x128xf32> to vector<16x128xf32>
      %15 = arith.addf %12, %14 : vector<16x128xf32>
      %c0_14 = arith.constant 0 : index
      %c0_15 = arith.constant 0 : index
      %16 = vector.load %arg6[%c0_14, %c0_15] : memref<16x128xf32, #tpu.memory_space<vmem>>, vector<16x128xf32>
      tpu.vector_store %arg6[%c0_14, %c0_15], %15 {strides = array<i32>} : memref<16x128xf32, #tpu.memory_space<vmem>>, vector<16x128xf32>,
    } else {
    }
    return
  }
  func.func @transform_0(%arg0: i32, %arg1: i32, %arg2: i32) -> (i32, i32) {
    %c0_i32 = arith.constant 0 : i32
    return %arg0, %arg2 : i32, i32
  }
  func.func @transform_1(%arg0: i32, %arg1: i32, %arg2: i32) -> (i32, i32) {
    %c0_i32 = arith.constant 0 : i32
    return %arg2, %arg1 : i32, i32
  }
  func.func @transform_2(%arg0: i32, %arg1: i32, %arg2: i32) -> (i32, i32) {
    %c0_i32 = arith.constant 0 : i32
    %c0_i32_0 = arith.constant 0 : i32
    return %c0_i32, %arg1 : i32, i32
  }
  func.func @transform_3(%arg0: i32, %arg1: i32, %arg2: i32) -> (i32, i32) {
    %c0_i32 = arith.constant 0 : i32
    return %arg0, %arg1 : i32, i32
  }
}

module attributes {stable_mosaic.version = 11 : i64} {
  func.func @_pool_kernel(%arg0: i32, %arg1: i32, %arg2: memref<1x16x128xf32, #tpu.memory_space<vmem>>, %arg3: memref<16x1xf32, #tpu.memory_space<vmem>>, %arg4: memref<1x128xf32, #tpu.memory_space<vmem>>, %arg5: memref<1x128xf32, #tpu.memory_space<vmem>>, %arg6: memref<16x128xf32, #tpu.memory_space<vmem>>, %arg7: memref<16x128xf32, #tpu.memory_space<vmem>>) attributes {dimension_semantics = [#tpu.dimension_semantics<parallel>, #tpu.dimension_semantics<arbitrary>], iteration_bounds = array<i64: 1, 9>, scalar_prefetch = 0 : i64, scratch_operands = 1 : i64, tpu.core_type = #tpu.core_type<tc>, window_params = [{transform_indices = @transform_0, window_bounds = array<i64: 1, 16, 128>}, {transform_indices = @transform_1, window_bounds = array<i64: 16, 1>}, {pipeline_mode = #tpu.pipeline_mode<synchronous>, transform_indices = @transform_2, window_bounds = array<i64: 1, 128>}, {pipeline_mode = #tpu.pipeline_mode<synchronous>, transform_indices = @transform_3, window_bounds = array<i64: 1, 128>}, {transform_indices = @transform_4, window_bounds = array<i64: 16, 128>}]} {
    %c0_i32 = arith.constant 0 : i32
    %0 = arith.cmpi eq, %arg1, %c0_i32 : i32
    %1 = arith.extui %0 : i1 to i32
    %c0_i32_0 = arith.constant 0 : i32
    %2 = arith.cmpi ne, %1, %c0_i32_0 : i32
    scf.if %2 {
      %cst = arith.constant 0xFF800000 : f32
      %11 = vector.broadcast %cst : f32 to vector<16x128xf32>
      %c0_8 = arith.constant 0 : index
      %c0_9 = arith.constant 0 : index
      %12 = vector.load %arg7[%c0_8, %c0_9] : memref<16x128xf32, #tpu.memory_space<vmem>>, vector<16x128xf32>
      tpu.vector_store %arg7[%c0_8, %c0_9], %11 {strides = array<i32>} : memref<16x128xf32, #tpu.memory_space<vmem>>, vector<16x128xf32>,
    } else {
    }
    %c0 = arith.constant 0 : index
    %c0_1 = arith.constant 0 : index
    %c0_2 = arith.constant 0 : index
    %3 = vector.load %arg2[%c0, %c0_1, %c0_2] : memref<1x16x128xf32, #tpu.memory_space<vmem>>, vector<1x16x128xf32>
    %4 = vector.shape_cast %3 : vector<1x16x128xf32> to vector<16x128xf32>
    %c0_3 = arith.constant 0 : index
    %c0_4 = arith.constant 0 : index
    %5 = vector.load %arg7[%c0_3, %c0_4] : memref<16x128xf32, #tpu.memory_space<vmem>>, vector<16x128xf32>
    %6 = arith.maximumf %5, %4 : vector<16x128xf32>
    %c0_5 = arith.constant 0 : index
    %c0_6 = arith.constant 0 : index
    %7 = vector.load %arg7[%c0_5, %c0_6] : memref<16x128xf32, #tpu.memory_space<vmem>>, vector<16x128xf32>
    tpu.vector_store %arg7[%c0_5, %c0_6], %6 {strides = array<i32>} : memref<16x128xf32, #tpu.memory_space<vmem>>, vector<16x128xf32>,
    %c8_i32 = arith.constant 8 : i32
    %8 = arith.cmpi eq, %arg1, %c8_i32 : i32
    %9 = arith.extui %8 : i1 to i32
    %c0_i32_7 = arith.constant 0 : i32
    %10 = arith.cmpi ne, %9, %c0_i32_7 : i32
    scf.if %10 {
      %c0_8 = arith.constant 0 : index
      %c0_9 = arith.constant 0 : index
      %11 = vector.load %arg7[%c0_8, %c0_9] : memref<16x128xf32, #tpu.memory_space<vmem>>, vector<16x128xf32>
      %c0_10 = arith.constant 0 : index
      %c0_11 = arith.constant 0 : index
      %12 = vector.load %arg4[%c0_10, %c0_11] : memref<1x128xf32, #tpu.memory_space<vmem>>, vector<1x128xf32>
      %13 = vector.broadcast %12 : vector<1x128xf32> to vector<16x128xf32>
      %14 = arith.mulf %11, %13 : vector<16x128xf32>
      %c0_12 = arith.constant 0 : index
      %c0_13 = arith.constant 0 : index
      %15 = vector.load %arg5[%c0_12, %c0_13] : memref<1x128xf32, #tpu.memory_space<vmem>>, vector<1x128xf32>
      %16 = vector.broadcast %15 : vector<1x128xf32> to vector<16x128xf32>
      %17 = arith.addf %14, %16 : vector<16x128xf32>
      %c0_14 = arith.constant 0 : index
      %c0_15 = arith.constant 0 : index
      %18 = vector.load %arg6[%c0_14, %c0_15] : memref<16x128xf32, #tpu.memory_space<vmem>>, vector<16x128xf32>
      tpu.vector_store %arg6[%c0_14, %c0_15], %17 {strides = array<i32>} : memref<16x128xf32, #tpu.memory_space<vmem>>, vector<16x128xf32>,
    } else {
    }
    return
  }
  func.func @transform_0(%arg0: i32, %arg1: i32) -> (i32, i32, i32) {
    %c0_i32 = arith.constant 0 : i32
    %c0_i32_0 = arith.constant 0 : i32
    return %arg1, %arg0, %c0_i32 : i32, i32, i32
  }
  func.func @transform_1(%arg0: i32, %arg1: i32) -> (i32, i32) {
    %c0_i32 = arith.constant 0 : i32
    %c0_i32_0 = arith.constant 0 : i32
    return %arg0, %c0_i32 : i32, i32
  }
  func.func @transform_2(%arg0: i32, %arg1: i32) -> (i32, i32) {
    %c0_i32 = arith.constant 0 : i32
    %c0_i32_0 = arith.constant 0 : i32
    %c0_i32_1 = arith.constant 0 : i32
    return %c0_i32, %c0_i32_0 : i32, i32
  }
  func.func @transform_3(%arg0: i32, %arg1: i32) -> (i32, i32) {
    %c0_i32 = arith.constant 0 : i32
    %c0_i32_0 = arith.constant 0 : i32
    %c0_i32_1 = arith.constant 0 : i32
    return %c0_i32, %c0_i32_0 : i32, i32
  }
  func.func @transform_4(%arg0: i32, %arg1: i32) -> (i32, i32) {
    %c0_i32 = arith.constant 0 : i32
    %c0_i32_0 = arith.constant 0 : i32
    return %arg0, %c0_i32 : i32, i32
  }
}

module attributes {stable_mosaic.version = 11 : i64} {
  func.func @_pool_kernel(%arg0: i32, %arg1: i32, %arg2: memref<1x16x128xf32, #tpu.memory_space<vmem>>, %arg3: memref<16x1xf32, #tpu.memory_space<vmem>>, %arg4: memref<1x128xf32, #tpu.memory_space<vmem>>, %arg5: memref<1x128xf32, #tpu.memory_space<vmem>>, %arg6: memref<16x128xf32, #tpu.memory_space<vmem>>, %arg7: memref<16x128xf32, #tpu.memory_space<vmem>>) attributes {dimension_semantics = [#tpu.dimension_semantics<parallel>, #tpu.dimension_semantics<arbitrary>], iteration_bounds = array<i64: 1, 9>, scalar_prefetch = 0 : i64, scratch_operands = 1 : i64, tpu.core_type = #tpu.core_type<tc>, window_params = [{transform_indices = @transform_0, window_bounds = array<i64: 1, 16, 128>}, {transform_indices = @transform_1, window_bounds = array<i64: 16, 1>}, {pipeline_mode = #tpu.pipeline_mode<synchronous>, transform_indices = @transform_2, window_bounds = array<i64: 1, 128>}, {pipeline_mode = #tpu.pipeline_mode<synchronous>, transform_indices = @transform_3, window_bounds = array<i64: 1, 128>}, {transform_indices = @transform_4, window_bounds = array<i64: 16, 128>}]} {
    %c0_i32 = arith.constant 0 : i32
    %0 = arith.cmpi eq, %arg1, %c0_i32 : i32
    %1 = arith.extui %0 : i1 to i32
    %c0_i32_0 = arith.constant 0 : i32
    %2 = arith.cmpi ne, %1, %c0_i32_0 : i32
    scf.if %2 {
      %cst = arith.constant 0.000000e+00 : f32
      %11 = vector.broadcast %cst : f32 to vector<16x128xf32>
      %c0_8 = arith.constant 0 : index
      %c0_9 = arith.constant 0 : index
      %12 = vector.load %arg7[%c0_8, %c0_9] : memref<16x128xf32, #tpu.memory_space<vmem>>, vector<16x128xf32>
      tpu.vector_store %arg7[%c0_8, %c0_9], %11 {strides = array<i32>} : memref<16x128xf32, #tpu.memory_space<vmem>>, vector<16x128xf32>,
    } else {
    }
    %c0 = arith.constant 0 : index
    %c0_1 = arith.constant 0 : index
    %c0_2 = arith.constant 0 : index
    %3 = vector.load %arg2[%c0, %c0_1, %c0_2] : memref<1x16x128xf32, #tpu.memory_space<vmem>>, vector<1x16x128xf32>
    %4 = vector.shape_cast %3 : vector<1x16x128xf32> to vector<16x128xf32>
    %c0_3 = arith.constant 0 : index
    %c0_4 = arith.constant 0 : index
    %5 = vector.load %arg7[%c0_3, %c0_4] : memref<16x128xf32, #tpu.memory_space<vmem>>, vector<16x128xf32>
    %6 = arith.addf %5, %4 : vector<16x128xf32>
    %c0_5 = arith.constant 0 : index
    %c0_6 = arith.constant 0 : index
    %7 = vector.load %arg7[%c0_5, %c0_6] : memref<16x128xf32, #tpu.memory_space<vmem>>, vector<16x128xf32>
    tpu.vector_store %arg7[%c0_5, %c0_6], %6 {strides = array<i32>} : memref<16x128xf32, #tpu.memory_space<vmem>>, vector<16x128xf32>,
    %c8_i32 = arith.constant 8 : i32
    %8 = arith.cmpi eq, %arg1, %c8_i32 : i32
    %9 = arith.extui %8 : i1 to i32
    %c0_i32_7 = arith.constant 0 : i32
    %10 = arith.cmpi ne, %9, %c0_i32_7 : i32
    scf.if %10 {
      %c0_8 = arith.constant 0 : index
      %c0_9 = arith.constant 0 : index
      %11 = vector.load %arg7[%c0_8, %c0_9] : memref<16x128xf32, #tpu.memory_space<vmem>>, vector<16x128xf32>
      %c0_10 = arith.constant 0 : index
      %c0_11 = arith.constant 0 : index
      %12 = vector.load %arg3[%c0_10, %c0_11] : memref<16x1xf32, #tpu.memory_space<vmem>>, vector<16x1xf32>
      %13 = vector.broadcast %12 : vector<16x1xf32> to vector<16x128xf32>
      %14 = arith.mulf %11, %13 : vector<16x128xf32>
      %c0_12 = arith.constant 0 : index
      %c0_13 = arith.constant 0 : index
      %15 = vector.load %arg4[%c0_12, %c0_13] : memref<1x128xf32, #tpu.memory_space<vmem>>, vector<1x128xf32>
      %16 = vector.broadcast %15 : vector<1x128xf32> to vector<16x128xf32>
      %17 = arith.mulf %14, %16 : vector<16x128xf32>
      %c0_14 = arith.constant 0 : index
      %c0_15 = arith.constant 0 : index
      %18 = vector.load %arg5[%c0_14, %c0_15] : memref<1x128xf32, #tpu.memory_space<vmem>>, vector<1x128xf32>
      %19 = vector.broadcast %18 : vector<1x128xf32> to vector<16x128xf32>
      %20 = arith.addf %17, %19 : vector<16x128xf32>
      %c0_16 = arith.constant 0 : index
      %c0_17 = arith.constant 0 : index
      %21 = vector.load %arg6[%c0_16, %c0_17] : memref<16x128xf32, #tpu.memory_space<vmem>>, vector<16x128xf32>
      tpu.vector_store %arg6[%c0_16, %c0_17], %20 {strides = array<i32>} : memref<16x128xf32, #tpu.memory_space<vmem>>, vector<16x128xf32>,
    } else {
    }
    return
  }
  func.func @transform_0(%arg0: i32, %arg1: i32) -> (i32, i32, i32) {
    %c0_i32 = arith.constant 0 : i32
    %c0_i32_0 = arith.constant 0 : i32
    return %arg1, %arg0, %c0_i32 : i32, i32, i32
  }
  func.func @transform_1(%arg0: i32, %arg1: i32) -> (i32, i32) {
    %c0_i32 = arith.constant 0 : i32
    %c0_i32_0 = arith.constant 0 : i32
    return %arg0, %c0_i32 : i32, i32
  }
  func.func @transform_2(%arg0: i32, %arg1: i32) -> (i32, i32) {
    %c0_i32 = arith.constant 0 : i32
    %c0_i32_0 = arith.constant 0 : i32
    %c0_i32_1 = arith.constant 0 : i32
    return %c0_i32, %c0_i32_0 : i32, i32
  }
  func.func @transform_3(%arg0: i32, %arg1: i32) -> (i32, i32) {
    %c0_i32 = arith.constant 0 : i32
    %c0_i32_0 = arith.constant 0 : i32
    %c0_i32_1 = arith.constant 0 : i32
    return %c0_i32, %c0_i32_0 : i32, i32
  }
  func.func @transform_4(%arg0: i32, %arg1: i32) -> (i32, i32) {
    %c0_i32 = arith.constant 0 : i32
    %c0_i32_0 = arith.constant 0 : i32
    return %arg0, %c0_i32 : i32, i32
  }
}

module attributes {stable_mosaic.version = 11 : i64} {
  func.func @_dw_kernel(%arg0: i32, %arg1: i32, %arg2: memref<1x16x128xbf16, #tpu.memory_space<vmem>>, %arg3: memref<1x1x128xf32, #tpu.memory_space<vmem>>, %arg4: memref<16x128xf32, #tpu.memory_space<vmem>>, %arg5: memref<16x128xf32, #tpu.memory_space<vmem>>) attributes {dimension_semantics = [#tpu.dimension_semantics<parallel>, #tpu.dimension_semantics<arbitrary>], iteration_bounds = array<i64: 1, 25>, scalar_prefetch = 0 : i64, scratch_operands = 1 : i64, tpu.core_type = #tpu.core_type<tc>, window_params = [{transform_indices = @transform_0, window_bounds = array<i64: 1, 16, 128>}, {transform_indices = @transform_1, window_bounds = array<i64: 1, 1, 128>}, {transform_indices = @transform_2, window_bounds = array<i64: 16, 128>}]} {
    %c0_i32 = arith.constant 0 : i32
    %0 = arith.cmpi eq, %arg1, %c0_i32 : i32
    %1 = arith.extui %0 : i1 to i32
    %c0_i32_0 = arith.constant 0 : i32
    %2 = arith.cmpi ne, %1, %c0_i32_0 : i32
    scf.if %2 {
      %cst_11 = arith.constant 0.000000e+00 : f32
      %18 = vector.broadcast %cst_11 : f32 to vector<16x128xf32>
      %c0_12 = arith.constant 0 : index
      %c0_13 = arith.constant 0 : index
      %19 = vector.load %arg5[%c0_12, %c0_13] : memref<16x128xf32, #tpu.memory_space<vmem>>, vector<16x128xf32>
      tpu.vector_store %arg5[%c0_12, %c0_13], %18 {strides = array<i32>} : memref<16x128xf32, #tpu.memory_space<vmem>>, vector<16x128xf32>,
    } else {
    }
    %c0 = arith.constant 0 : index
    %c0_1 = arith.constant 0 : index
    %c0_2 = arith.constant 0 : index
    %3 = vector.load %arg2[%c0, %c0_1, %c0_2] : memref<1x16x128xbf16, #tpu.memory_space<vmem>>, vector<1x16x128xbf16>
    %4 = vector.shape_cast %3 : vector<1x16x128xbf16> to vector<16x128xbf16>
    %5 = arith.extf %4 : vector<16x128xbf16> to vector<16x128xf32>
    %cst = arith.constant 0.000000e+00 : f32
    %6 = vector.broadcast %cst : f32 to vector<16x128xf32>
    %7 = arith.maximumf %5, %6 : vector<16x128xf32>
    %c0_3 = arith.constant 0 : index
    %c0_4 = arith.constant 0 : index
    %8 = vector.load %arg5[%c0_3, %c0_4] : memref<16x128xf32, #tpu.memory_space<vmem>>, vector<16x128xf32>
    %c0_5 = arith.constant 0 : index
    %c0_6 = arith.constant 0 : index
    %c0_7 = arith.constant 0 : index
    %9 = vector.load %arg3[%c0_5, %c0_6, %c0_7] : memref<1x1x128xf32, #tpu.memory_space<vmem>>, vector<1x1x128xf32>
    %10 = vector.shape_cast %9 : vector<1x1x128xf32> to vector<1x128xf32>
    %11 = vector.broadcast %10 : vector<1x128xf32> to vector<16x128xf32>
    %12 = arith.mulf %7, %11 : vector<16x128xf32>
    %13 = arith.addf %8, %12 : vector<16x128xf32>
    %c0_8 = arith.constant 0 : index
    %c0_9 = arith.constant 0 : index
    %14 = vector.load %arg5[%c0_8, %c0_9] : memref<16x128xf32, #tpu.memory_space<vmem>>, vector<16x128xf32>
    tpu.vector_store %arg5[%c0_8, %c0_9], %13 {strides = array<i32>} : memref<16x128xf32, #tpu.memory_space<vmem>>, vector<16x128xf32>,
    %c24_i32 = arith.constant 24 : i32
    %15 = arith.cmpi eq, %arg1, %c24_i32 : i32
    %16 = arith.extui %15 : i1 to i32
    %c0_i32_10 = arith.constant 0 : i32
    %17 = arith.cmpi ne, %16, %c0_i32_10 : i32
    scf.if %17 {
      %c0_11 = arith.constant 0 : index
      %c0_12 = arith.constant 0 : index
      %18 = vector.load %arg5[%c0_11, %c0_12] : memref<16x128xf32, #tpu.memory_space<vmem>>, vector<16x128xf32>
      %c0_13 = arith.constant 0 : index
      %c0_14 = arith.constant 0 : index
      %19 = vector.load %arg4[%c0_13, %c0_14] : memref<16x128xf32, #tpu.memory_space<vmem>>, vector<16x128xf32>
      tpu.vector_store %arg4[%c0_13, %c0_14], %18 {strides = array<i32>} : memref<16x128xf32, #tpu.memory_space<vmem>>, vector<16x128xf32>,
    } else {
    }
    return
  }
  func.func @transform_0(%arg0: i32, %arg1: i32) -> (i32, i32, i32) {
    %c0_i32 = arith.constant 0 : i32
    %c0_i32_0 = arith.constant 0 : i32
    return %arg1, %arg0, %c0_i32 : i32, i32, i32
  }
  func.func @transform_1(%arg0: i32, %arg1: i32) -> (i32, i32, i32) {
    %c0_i32 = arith.constant 0 : i32
    %c0_i32_0 = arith.constant 0 : i32
    %c0_i32_1 = arith.constant 0 : i32
    return %arg1, %c0_i32, %c0_i32_0 : i32, i32, i32
  }
  func.func @transform_2(%arg0: i32, %arg1: i32) -> (i32, i32) {
    %c0_i32 = arith.constant 0 : i32
    %c0_i32_0 = arith.constant 0 : i32
    return %arg0, %c0_i32 : i32, i32
  }
}

module attributes {stable_mosaic.version = 11 : i64} {
  func.func @_matmul_kernel(%arg0: i32, %arg1: i32, %arg2: i32, %arg3: memref<16x128xbf16, #tpu.memory_space<vmem>>, %arg4: memref<128x128xbf16, #tpu.memory_space<vmem>>, %arg5: memref<1x128xf32, #tpu.memory_space<vmem>>, %arg6: memref<16x128xf32, #tpu.memory_space<vmem>>, %arg7: memref<16x128xf32, #tpu.memory_space<vmem>>) attributes {dimension_semantics = [#tpu.dimension_semantics<parallel>, #tpu.dimension_semantics<parallel>, #tpu.dimension_semantics<arbitrary>], iteration_bounds = array<i64: 1, 1, 1>, scalar_prefetch = 0 : i64, scratch_operands = 1 : i64, tpu.core_type = #tpu.core_type<tc>, window_params = [{transform_indices = @transform_0, window_bounds = array<i64: 16, 128>}, {transform_indices = @transform_1, window_bounds = array<i64: 128, 128>}, {transform_indices = @transform_2, window_bounds = array<i64: 1, 128>}, {transform_indices = @transform_3, window_bounds = array<i64: 16, 128>}]} {
    %c0_i32 = arith.constant 0 : i32
    %0 = arith.cmpi eq, %arg2, %c0_i32 : i32
    %1 = arith.extui %0 : i1 to i32
    %c0_i32_0 = arith.constant 0 : i32
    %2 = arith.cmpi ne, %1, %c0_i32_0 : i32
    scf.if %2 {
      %cst_11 = arith.constant 0.000000e+00 : f32
      %14 = vector.broadcast %cst_11 : f32 to vector<16x128xf32>
      %c0_12 = arith.constant 0 : index
      %c0_13 = arith.constant 0 : index
      %15 = vector.load %arg7[%c0_12, %c0_13] : memref<16x128xf32, #tpu.memory_space<vmem>>, vector<16x128xf32>
      tpu.vector_store %arg7[%c0_12, %c0_13], %14 {strides = array<i32>} : memref<16x128xf32, #tpu.memory_space<vmem>>, vector<16x128xf32>,
    } else {
    }
    %c0 = arith.constant 0 : index
    %c0_1 = arith.constant 0 : index
    %3 = vector.load %arg3[%c0, %c0_1] : memref<16x128xbf16, #tpu.memory_space<vmem>>, vector<16x128xbf16>
    %cst = arith.constant 0.000000e+00 : bf16
    %4 = vector.broadcast %cst : bf16 to vector<16x128xbf16>
    %5 = arith.maximumf %3, %4 : vector<16x128xbf16>
    %c0_2 = arith.constant 0 : index
    %c0_3 = arith.constant 0 : index
    %6 = vector.load %arg7[%c0_2, %c0_3] : memref<16x128xf32, #tpu.memory_space<vmem>>, vector<16x128xf32>
    %c0_4 = arith.constant 0 : index
    %c0_5 = arith.constant 0 : index
    %7 = vector.load %arg4[%c0_4, %c0_5] : memref<128x128xbf16, #tpu.memory_space<vmem>>, vector<128x128xbf16>
    %cst_6 = arith.constant dense<0.000000e+00> : vector<16x128xf32>
    %8 = tpu.matmul %5, %7, %cst_6 {dimension_numbers = #tpu.dot_dimension_numbers<[1], [0], [0], [1], [0, 0, 1, 1], [], []>} : vector<16x128xbf16>, vector<128x128xbf16>, vector<16x128xf32> -> vector<16x128xf32>
    %9 = arith.addf %6, %8 : vector<16x128xf32>
    %c0_7 = arith.constant 0 : index
    %c0_8 = arith.constant 0 : index
    %10 = vector.load %arg7[%c0_7, %c0_8] : memref<16x128xf32, #tpu.memory_space<vmem>>, vector<16x128xf32>
    tpu.vector_store %arg7[%c0_7, %c0_8], %9 {strides = array<i32>} : memref<16x128xf32, #tpu.memory_space<vmem>>, vector<16x128xf32>,
    %c0_i32_9 = arith.constant 0 : i32
    %11 = arith.cmpi eq, %arg2, %c0_i32_9 : i32
    %12 = arith.extui %11 : i1 to i32
    %c0_i32_10 = arith.constant 0 : i32
    %13 = arith.cmpi ne, %12, %c0_i32_10 : i32
    scf.if %13 {
      %c0_11 = arith.constant 0 : index
      %c0_12 = arith.constant 0 : index
      %14 = vector.load %arg7[%c0_11, %c0_12] : memref<16x128xf32, #tpu.memory_space<vmem>>, vector<16x128xf32>
      %c0_13 = arith.constant 0 : index
      %c0_14 = arith.constant 0 : index
      %15 = vector.load %arg5[%c0_13, %c0_14] : memref<1x128xf32, #tpu.memory_space<vmem>>, vector<1x128xf32>
      %16 = vector.broadcast %15 : vector<1x128xf32> to vector<16x128xf32>
      %17 = arith.addf %14, %16 : vector<16x128xf32>
      %c0_15 = arith.constant 0 : index
      %c0_16 = arith.constant 0 : index
      %18 = vector.load %arg6[%c0_15, %c0_16] : memref<16x128xf32, #tpu.memory_space<vmem>>, vector<16x128xf32>
      tpu.vector_store %arg6[%c0_15, %c0_16], %17 {strides = array<i32>} : memref<16x128xf32, #tpu.memory_space<vmem>>, vector<16x128xf32>,
    } else {
    }
    return
  }
  func.func @transform_0(%arg0: i32, %arg1: i32, %arg2: i32) -> (i32, i32) {
    %c0_i32 = arith.constant 0 : i32
    return %arg0, %arg2 : i32, i32
  }
  func.func @transform_1(%arg0: i32, %arg1: i32, %arg2: i32) -> (i32, i32) {
    %c0_i32 = arith.constant 0 : i32
    return %arg2, %arg1 : i32, i32
  }
  func.func @transform_2(%arg0: i32, %arg1: i32, %arg2: i32) -> (i32, i32) {
    %c0_i32 = arith.constant 0 : i32
    %c0_i32_0 = arith.constant 0 : i32
    return %c0_i32, %arg1 : i32, i32
  }
  func.func @transform_3(%arg0: i32, %arg1: i32, %arg2: i32) -> (i32, i32) {
    %c0_i32 = arith.constant 0 : i32
    return %arg0, %arg1 : i32, i32
  }
}

module attributes {stable_mosaic.version = 11 : i64} {
  func.func @_pool_kernel(%arg0: i32, %arg1: i32, %arg2: memref<1x16x128xf32, #tpu.memory_space<vmem>>, %arg3: memref<16x1xf32, #tpu.memory_space<vmem>>, %arg4: memref<1x128xf32, #tpu.memory_space<vmem>>, %arg5: memref<1x128xf32, #tpu.memory_space<vmem>>, %arg6: memref<16x128xf32, #tpu.memory_space<vmem>>, %arg7: memref<16x128xf32, #tpu.memory_space<vmem>>) attributes {dimension_semantics = [#tpu.dimension_semantics<parallel>, #tpu.dimension_semantics<arbitrary>], iteration_bounds = array<i64: 1, 9>, scalar_prefetch = 0 : i64, scratch_operands = 1 : i64, tpu.core_type = #tpu.core_type<tc>, window_params = [{transform_indices = @transform_0, window_bounds = array<i64: 1, 16, 128>}, {transform_indices = @transform_1, window_bounds = array<i64: 16, 1>}, {pipeline_mode = #tpu.pipeline_mode<synchronous>, transform_indices = @transform_2, window_bounds = array<i64: 1, 128>}, {pipeline_mode = #tpu.pipeline_mode<synchronous>, transform_indices = @transform_3, window_bounds = array<i64: 1, 128>}, {transform_indices = @transform_4, window_bounds = array<i64: 16, 128>}]} {
    %c0_i32 = arith.constant 0 : i32
    %0 = arith.cmpi eq, %arg1, %c0_i32 : i32
    %1 = arith.extui %0 : i1 to i32
    %c0_i32_0 = arith.constant 0 : i32
    %2 = arith.cmpi ne, %1, %c0_i32_0 : i32
    scf.if %2 {
      %cst = arith.constant 0xFF800000 : f32
      %11 = vector.broadcast %cst : f32 to vector<16x128xf32>
      %c0_8 = arith.constant 0 : index
      %c0_9 = arith.constant 0 : index
      %12 = vector.load %arg7[%c0_8, %c0_9] : memref<16x128xf32, #tpu.memory_space<vmem>>, vector<16x128xf32>
      tpu.vector_store %arg7[%c0_8, %c0_9], %11 {strides = array<i32>} : memref<16x128xf32, #tpu.memory_space<vmem>>, vector<16x128xf32>,
    } else {
    }
    %c0 = arith.constant 0 : index
    %c0_1 = arith.constant 0 : index
    %c0_2 = arith.constant 0 : index
    %3 = vector.load %arg2[%c0, %c0_1, %c0_2] : memref<1x16x128xf32, #tpu.memory_space<vmem>>, vector<1x16x128xf32>
    %4 = vector.shape_cast %3 : vector<1x16x128xf32> to vector<16x128xf32>
    %c0_3 = arith.constant 0 : index
    %c0_4 = arith.constant 0 : index
    %5 = vector.load %arg7[%c0_3, %c0_4] : memref<16x128xf32, #tpu.memory_space<vmem>>, vector<16x128xf32>
    %6 = arith.maximumf %5, %4 : vector<16x128xf32>
    %c0_5 = arith.constant 0 : index
    %c0_6 = arith.constant 0 : index
    %7 = vector.load %arg7[%c0_5, %c0_6] : memref<16x128xf32, #tpu.memory_space<vmem>>, vector<16x128xf32>
    tpu.vector_store %arg7[%c0_5, %c0_6], %6 {strides = array<i32>} : memref<16x128xf32, #tpu.memory_space<vmem>>, vector<16x128xf32>,
    %c8_i32 = arith.constant 8 : i32
    %8 = arith.cmpi eq, %arg1, %c8_i32 : i32
    %9 = arith.extui %8 : i1 to i32
    %c0_i32_7 = arith.constant 0 : i32
    %10 = arith.cmpi ne, %9, %c0_i32_7 : i32
    scf.if %10 {
      %c0_8 = arith.constant 0 : index
      %c0_9 = arith.constant 0 : index
      %11 = vector.load %arg7[%c0_8, %c0_9] : memref<16x128xf32, #tpu.memory_space<vmem>>, vector<16x128xf32>
      %c0_10 = arith.constant 0 : index
      %c0_11 = arith.constant 0 : index
      %12 = vector.load %arg4[%c0_10, %c0_11] : memref<1x128xf32, #tpu.memory_space<vmem>>, vector<1x128xf32>
      %13 = vector.broadcast %12 : vector<1x128xf32> to vector<16x128xf32>
      %14 = arith.mulf %11, %13 : vector<16x128xf32>
      %c0_12 = arith.constant 0 : index
      %c0_13 = arith.constant 0 : index
      %15 = vector.load %arg5[%c0_12, %c0_13] : memref<1x128xf32, #tpu.memory_space<vmem>>, vector<1x128xf32>
      %16 = vector.broadcast %15 : vector<1x128xf32> to vector<16x128xf32>
      %17 = arith.addf %14, %16 : vector<16x128xf32>
      %c0_14 = arith.constant 0 : index
      %c0_15 = arith.constant 0 : index
      %18 = vector.load %arg6[%c0_14, %c0_15] : memref<16x128xf32, #tpu.memory_space<vmem>>, vector<16x128xf32>
      tpu.vector_store %arg6[%c0_14, %c0_15], %17 {strides = array<i32>} : memref<16x128xf32, #tpu.memory_space<vmem>>, vector<16x128xf32>,
    } else {
    }
    return
  }
  func.func @transform_0(%arg0: i32, %arg1: i32) -> (i32, i32, i32) {
    %c0_i32 = arith.constant 0 : i32
    %c0_i32_0 = arith.constant 0 : i32
    return %arg1, %arg0, %c0_i32 : i32, i32, i32
  }
  func.func @transform_1(%arg0: i32, %arg1: i32) -> (i32, i32) {
    %c0_i32 = arith.constant 0 : i32
    %c0_i32_0 = arith.constant 0 : i32
    return %arg0, %c0_i32 : i32, i32
  }
  func.func @transform_2(%arg0: i32, %arg1: i32) -> (i32, i32) {
    %c0_i32 = arith.constant 0 : i32
    %c0_i32_0 = arith.constant 0 : i32
    %c0_i32_1 = arith.constant 0 : i32
    return %c0_i32, %c0_i32_0 : i32, i32
  }
  func.func @transform_3(%arg0: i32, %arg1: i32) -> (i32, i32) {
    %c0_i32 = arith.constant 0 : i32
    %c0_i32_0 = arith.constant 0 : i32
    %c0_i32_1 = arith.constant 0 : i32
    return %c0_i32, %c0_i32_0 : i32, i32
  }
  func.func @transform_4(%arg0: i32, %arg1: i32) -> (i32, i32) {
    %c0_i32 = arith.constant 0 : i32
    %c0_i32_0 = arith.constant 0 : i32
    return %arg0, %c0_i32 : i32, i32
  }
}

module attributes {stable_mosaic.version = 11 : i64} {
  func.func @_matmul_kernel(%arg0: i32, %arg1: i32, %arg2: i32, %arg3: memref<16x128xbf16, #tpu.memory_space<vmem>>, %arg4: memref<128x128xbf16, #tpu.memory_space<vmem>>, %arg5: memref<1x128xf32, #tpu.memory_space<vmem>>, %arg6: memref<16x128xf32, #tpu.memory_space<vmem>>, %arg7: memref<16x128xf32, #tpu.memory_space<vmem>>) attributes {dimension_semantics = [#tpu.dimension_semantics<parallel>, #tpu.dimension_semantics<parallel>, #tpu.dimension_semantics<arbitrary>], iteration_bounds = array<i64: 1, 1, 1>, scalar_prefetch = 0 : i64, scratch_operands = 1 : i64, tpu.core_type = #tpu.core_type<tc>, window_params = [{transform_indices = @transform_0, window_bounds = array<i64: 16, 128>}, {transform_indices = @transform_1, window_bounds = array<i64: 128, 128>}, {transform_indices = @transform_2, window_bounds = array<i64: 1, 128>}, {transform_indices = @transform_3, window_bounds = array<i64: 16, 128>}]} {
    %c0_i32 = arith.constant 0 : i32
    %0 = arith.cmpi eq, %arg2, %c0_i32 : i32
    %1 = arith.extui %0 : i1 to i32
    %c0_i32_0 = arith.constant 0 : i32
    %2 = arith.cmpi ne, %1, %c0_i32_0 : i32
    scf.if %2 {
      %cst_10 = arith.constant 0.000000e+00 : f32
      %12 = vector.broadcast %cst_10 : f32 to vector<16x128xf32>
      %c0_11 = arith.constant 0 : index
      %c0_12 = arith.constant 0 : index
      %13 = vector.load %arg7[%c0_11, %c0_12] : memref<16x128xf32, #tpu.memory_space<vmem>>, vector<16x128xf32>
      tpu.vector_store %arg7[%c0_11, %c0_12], %12 {strides = array<i32>} : memref<16x128xf32, #tpu.memory_space<vmem>>, vector<16x128xf32>,
    } else {
    }
    %c0 = arith.constant 0 : index
    %c0_1 = arith.constant 0 : index
    %3 = vector.load %arg3[%c0, %c0_1] : memref<16x128xbf16, #tpu.memory_space<vmem>>, vector<16x128xbf16>
    %c0_2 = arith.constant 0 : index
    %c0_3 = arith.constant 0 : index
    %4 = vector.load %arg7[%c0_2, %c0_3] : memref<16x128xf32, #tpu.memory_space<vmem>>, vector<16x128xf32>
    %c0_4 = arith.constant 0 : index
    %c0_5 = arith.constant 0 : index
    %5 = vector.load %arg4[%c0_4, %c0_5] : memref<128x128xbf16, #tpu.memory_space<vmem>>, vector<128x128xbf16>
    %cst = arith.constant dense<0.000000e+00> : vector<16x128xf32>
    %6 = tpu.matmul %3, %5, %cst {dimension_numbers = #tpu.dot_dimension_numbers<[1], [0], [0], [1], [0, 0, 1, 1], [], []>} : vector<16x128xbf16>, vector<128x128xbf16>, vector<16x128xf32> -> vector<16x128xf32>
    %7 = arith.addf %4, %6 : vector<16x128xf32>
    %c0_6 = arith.constant 0 : index
    %c0_7 = arith.constant 0 : index
    %8 = vector.load %arg7[%c0_6, %c0_7] : memref<16x128xf32, #tpu.memory_space<vmem>>, vector<16x128xf32>
    tpu.vector_store %arg7[%c0_6, %c0_7], %7 {strides = array<i32>} : memref<16x128xf32, #tpu.memory_space<vmem>>, vector<16x128xf32>,
    %c0_i32_8 = arith.constant 0 : i32
    %9 = arith.cmpi eq, %arg2, %c0_i32_8 : i32
    %10 = arith.extui %9 : i1 to i32
    %c0_i32_9 = arith.constant 0 : i32
    %11 = arith.cmpi ne, %10, %c0_i32_9 : i32
    scf.if %11 {
      %c0_10 = arith.constant 0 : index
      %c0_11 = arith.constant 0 : index
      %12 = vector.load %arg7[%c0_10, %c0_11] : memref<16x128xf32, #tpu.memory_space<vmem>>, vector<16x128xf32>
      %c0_12 = arith.constant 0 : index
      %c0_13 = arith.constant 0 : index
      %13 = vector.load %arg5[%c0_12, %c0_13] : memref<1x128xf32, #tpu.memory_space<vmem>>, vector<1x128xf32>
      %14 = vector.broadcast %13 : vector<1x128xf32> to vector<16x128xf32>
      %15 = arith.addf %12, %14 : vector<16x128xf32>
      %c0_14 = arith.constant 0 : index
      %c0_15 = arith.constant 0 : index
      %16 = vector.load %arg6[%c0_14, %c0_15] : memref<16x128xf32, #tpu.memory_space<vmem>>, vector<16x128xf32>
      tpu.vector_store %arg6[%c0_14, %c0_15], %15 {strides = array<i32>} : memref<16x128xf32, #tpu.memory_space<vmem>>, vector<16x128xf32>,
    } else {
    }
    return
  }
  func.func @transform_0(%arg0: i32, %arg1: i32, %arg2: i32) -> (i32, i32) {
    %c0_i32 = arith.constant 0 : i32
    return %arg0, %arg2 : i32, i32
  }
  func.func @transform_1(%arg0: i32, %arg1: i32, %arg2: i32) -> (i32, i32) {
    %c0_i32 = arith.constant 0 : i32
    return %arg2, %arg1 : i32, i32
  }
  func.func @transform_2(%arg0: i32, %arg1: i32, %arg2: i32) -> (i32, i32) {
    %c0_i32 = arith.constant 0 : i32
    %c0_i32_0 = arith.constant 0 : i32
    return %c0_i32, %arg1 : i32, i32
  }
  func.func @transform_3(%arg0: i32, %arg1: i32, %arg2: i32) -> (i32, i32) {
    %c0_i32 = arith.constant 0 : i32
    return %arg0, %arg1 : i32, i32
  }
}

module attributes {stable_mosaic.version = 11 : i64} {
  func.func @_affine_kernel(%arg0: i32, %arg1: memref<16x128xf32, #tpu.memory_space<vmem>>, %arg2: memref<1x128xf32, #tpu.memory_space<vmem>>, %arg3: memref<1x128xf32, #tpu.memory_space<vmem>>, %arg4: memref<16x128xf32, #tpu.memory_space<vmem>>) attributes {dimension_semantics = [#tpu.dimension_semantics<parallel>], iteration_bounds = array<i64: 1>, scalar_prefetch = 0 : i64, scratch_operands = 0 : i64, tpu.core_type = #tpu.core_type<tc>, window_params = [{transform_indices = @transform_0, window_bounds = array<i64: 16, 128>}, {pipeline_mode = #tpu.pipeline_mode<synchronous>, transform_indices = @transform_1, window_bounds = array<i64: 1, 128>}, {pipeline_mode = #tpu.pipeline_mode<synchronous>, transform_indices = @transform_2, window_bounds = array<i64: 1, 128>}, {transform_indices = @transform_3, window_bounds = array<i64: 16, 128>}]} {
    %c0 = arith.constant 0 : index
    %c0_0 = arith.constant 0 : index
    %0 = vector.load %arg1[%c0, %c0_0] : memref<16x128xf32, #tpu.memory_space<vmem>>, vector<16x128xf32>
    %c0_1 = arith.constant 0 : index
    %c0_2 = arith.constant 0 : index
    %1 = vector.load %arg2[%c0_1, %c0_2] : memref<1x128xf32, #tpu.memory_space<vmem>>, vector<1x128xf32>
    %2 = vector.broadcast %1 : vector<1x128xf32> to vector<16x128xf32>
    %3 = arith.mulf %0, %2 : vector<16x128xf32>
    %c0_3 = arith.constant 0 : index
    %c0_4 = arith.constant 0 : index
    %4 = vector.load %arg3[%c0_3, %c0_4] : memref<1x128xf32, #tpu.memory_space<vmem>>, vector<1x128xf32>
    %5 = vector.broadcast %4 : vector<1x128xf32> to vector<16x128xf32>
    %6 = arith.addf %3, %5 : vector<16x128xf32>
    %cst = arith.constant 0.000000e+00 : f32
    %7 = vector.broadcast %cst : f32 to vector<16x128xf32>
    %8 = arith.maximumf %6, %7 : vector<16x128xf32>
    %c0_5 = arith.constant 0 : index
    %c0_6 = arith.constant 0 : index
    %9 = vector.load %arg4[%c0_5, %c0_6] : memref<16x128xf32, #tpu.memory_space<vmem>>, vector<16x128xf32>
    tpu.vector_store %arg4[%c0_5, %c0_6], %8 {strides = array<i32>} : memref<16x128xf32, #tpu.memory_space<vmem>>, vector<16x128xf32>,
    return
  }
  func.func @transform_0(%arg0: i32) -> (i32, i32) {
    %c0_i32 = arith.constant 0 : i32
    %c0_i32_0 = arith.constant 0 : i32
    return %arg0, %c0_i32 : i32, i32
  }
  func.func @transform_1(%arg0: i32) -> (i32, i32) {
    %c0_i32 = arith.constant 0 : i32
    %c0_i32_0 = arith.constant 0 : i32
    %c0_i32_1 = arith.constant 0 : i32
    return %c0_i32, %c0_i32_0 : i32, i32
  }
  func.func @transform_2(%arg0: i32) -> (i32, i32) {
    %c0_i32 = arith.constant 0 : i32
    %c0_i32_0 = arith.constant 0 : i32
    %c0_i32_1 = arith.constant 0 : i32
    return %c0_i32, %c0_i32_0 : i32, i32
  }
  func.func @transform_3(%arg0: i32) -> (i32, i32) {
    %c0_i32 = arith.constant 0 : i32
    %c0_i32_0 = arith.constant 0 : i32
    return %arg0, %c0_i32 : i32, i32
  }
}

</mosaic_0001>

<llo_original>
// kernel: forward.167
$region0: #{forward.167}
  #allocation0 [shape = 'u32[]', space=smem, size = 0x4, offset = 0x4, fixed_abs, tag = 'smem constant byte address 0x4 - core index']
  #allocation1 [shape = 'u32[72,128]{1,0:T(1,128)}', space=vmem, size = 0x9000, scoped, tag = 'internal scratch']
  #allocation2 [shape = 'f32[256,128]{1,0:T(8,128)}', space=vmem, size = 0x20000, scoped, tag = 'scratch operand']
  %s0 = inlined_call_operand.vmem [shape: bf16[512,128], index: 0, kind: input, shape index: {}]
  %s1 = inlined_call_operand.vmem [shape: bf16[128,128], index: 1, kind: input, shape index: {}]
  %s2 = inlined_call_operand.vmem [shape: f32[1,128], index: 2, kind: input, shape index: {}]
  %s3 = inlined_call_operand.vmem [shape: f32[512,128], index: 3, kind: output, shape index: {}]
  %s4 = sld [smem:[#allocation0]]
  $region53: #{forward.167} parent=0
    _
  %s6 = ssub.s32 1, %s4
  %s7 = scalar_select 0, %s6, %s4
  loop: start=0, step=1, limit=4
  $region2: #{forward.167} parent=0 // loop_pre_header
    _
  $region3: #{forward.167} parent=0 // loop_header
    %s9 = sphi 0, %s13
    %p10 = scmp.ge.s32.totalorder %s9, 4
    %s16 = sphi 0, %s35
    %s17 = sphi 0, %s31
    %s18 = sphi 0, %s27
    %s19 = sphi 0, %s16
    %s20 = sphi 0, %s17
    %s21 = sphi 0, %s18
    %s22 = sphi 0, %s19
    %s23 = sphi 0, %s20
    %s24 = sphi 0, %s21
    %s40 = sphi 0, %s42
    %s43 = sphi 0, %s40
    %s44 = sphi 0, %s43
    %s60 = sphi 0, %s44
    %s68 = sphi 0, %s70
    %s71 = sphi 0, %s68
    %s72 = sphi 0, %s71
    %s88 = sphi 0, %s72
    %s94 = sphi 0, %s96
    %s97 = sphi 0, %s94
    %s98 = sphi 0, %s97
    %s114 = sphi 0, %s98
    %s122 = sphi 0, %s124
    %s125 = sphi 0, %s122
    %s126 = sphi 0, %s125
    %s142 = sphi 0, %s126
  $region4: #{forward.167} parent=0 // loop_header_branch
    %12 = sbr.rel (%p10) target = $region8
  $region5: #{forward.167} parent=0 // loop_body
    %s14 = ssub.s32 %s9, 1
    %s15 = ssub.s32 %s9, 2
    %s25 = sadd.s32 1, %s18
    %p26 = scmp.ge.s32.totalorder %s25, 1
    %s27 = scalar_select %p26, 0, %s25
    %s28 = sadd.s32 1, %s17
    %s29 = scalar_select %p26, %s28, %s17
    %p30 = scmp.ge.s32.totalorder %s29, 1
    %s31 = scalar_select %p30, 0, %s29
    %s32 = sadd.s32 1, %s16
    %s33 = scalar_select %p30, %s32, %s16
    %p34 = scmp.ge.s32.totalorder %s33, 2
    %s35 = scalar_select %p34, 0, %s33
    %s36 = ssub.s32 %s16, %s35
    %s37 = ssub.s32 %s18, %s27
    %s38 = sor.u32 %s36, %s37
    %p39 = scmp.eq.s32.totalorder %s38, 0
    %s41 = sadd.s32 %s40, 1
    %s42 = scalar_select %p39, %s40, %s41
    %p45 = pneg %p39
    %p46 = scmp.eq.s32.totalorder %s9, 1
    %p47 = por %p45, %p46
    %p48 = scmp.ne.s32.totalorder %s40, %s43
    %p49 = scmp.eq.s32.totalorder %s9, 0
    %p50 = por %p48, %p49
    %p51 = scmp.ne.s32.totalorder %s40, %s43
    %p52 = scmp.eq.s32.totalorder %s14, 1
    %p53 = por %p51, %p52
    %p54 = scmp.ne.s32.totalorder %s43, %s44
    %p55 = scmp.eq.s32.totalorder %s14, 0
    %p56 = por %p54, %p55
    %p57 = scmp.ne.s32.totalorder %s43, %s44
    %p58 = scmp.eq.s32.totalorder %s15, 1
    %p59 = por %p57, %p58
    %p61 = scmp.ne.s32.totalorder %s44, %s60
    %p62 = scmp.eq.s32.totalorder %s15, 0
    %p63 = por %p61, %p62
    %s64 = ssub.s32 %s18, %s27
    %s65 = ssub.s32 %s17, %s31
    %s66 = sor.u32 %s64, %s65
    %p67 = scmp.eq.s32.totalorder %s66, 0
    %s69 = sadd.s32 %s68, 1
    %s70 = scalar_select %p67, %s68, %s69
    %p73 = pneg %p67
    %p74 = scmp.eq.s32.totalorder %s9, 1
    %p75 = por %p73, %p74
    %p76 = scmp.ne.s32.totalorder %s68, %s71
    %p77 = scmp.eq.s32.totalorder %s9, 0
    %p78 = por %p76, %p77
    %p79 = scmp.ne.s32.totalorder %s68, %s71
    %p80 = scmp.eq.s32.totalorder %s14, 1
    %p81 = por %p79, %p80
    %p82 = scmp.ne.s32.totalorder %s71, %s72
    %p83 = scmp.eq.s32.totalorder %s14, 0
    %p84 = por %p82, %p83
    %p85 = scmp.ne.s32.totalorder %s71, %s72
    %p86 = scmp.eq.s32.totalorder %s15, 1
    %p87 = por %p85, %p86
    %p89 = scmp.ne.s32.totalorder %s72, %s88
    %p90 = scmp.eq.s32.totalorder %s15, 0
    %p91 = por %p89, %p90
    %s92 = ssub.s32 %s17, %s31
    %p93 = scmp.eq.s32.totalorder %s92, 0
    %s95 = sadd.s32 %s94, 1
    %s96 = scalar_select %p93, %s94, %s95
    %p99 = pneg %p93
    %p100 = scmp.eq.s32.totalorder %s9, 1
    %p101 = por %p99, %p100
    %p102 = scmp.ne.s32.totalorder %s94, %s97
    %p103 = scmp.eq.s32.totalorder %s9, 0
    %p104 = por %p102, %p103
    %p105 = scmp.ne.s32.totalorder %s94, %s97
    %p106 = scmp.eq.s32.totalorder %s14, 1
    %p107 = por %p105, %p106
    %p108 = scmp.ne.s32.totalorder %s97, %s98
    %p109 = scmp.eq.s32.totalorder %s14, 0
    %p110 = por %p108, %p109
    %p111 = scmp.ne.s32.totalorder %s97, %s98
    %p112 = scmp.eq.s32.totalorder %s15, 1
    %p113 = por %p111, %p112
    %p115 = scmp.ne.s32.totalorder %s98, %s114
    %p116 = scmp.eq.s32.totalorder %s15, 0
    %p117 = por %p115, %p116
    %s118 = ssub.s32 %s16, %s35
    %s119 = ssub.s32 %s17, %s31
    %s120 = sor.u32 %s118, %s119
    %p121 = scmp.eq.s32.totalorder %s120, 0
    %s123 = sadd.s32 %s122, 1
    %s124 = scalar_select %p121, %s122, %s123
    %p127 = pneg %p121
    %p128 = scmp.eq.s32.totalorder %s9, 1
    %p129 = por %p127, %p128
    %p130 = scmp.ne.s32.totalorder %s122, %s125
    %p131 = scmp.eq.s32.totalorder %s9, 0
    %p132 = por %p130, %p131
    %p133 = scmp.ne.s32.totalorder %s122, %s125
    %p134 = scmp.eq.s32.totalorder %s14, 1
    %p135 = por %p133, %p134
    %p136 = scmp.ne.s32.totalorder %s125, %s126
    %p137 = scmp.eq.s32.totalorder %s14, 0
    %p138 = por %p136, %p137
    %p139 = scmp.ne.s32.totalorder %s125, %s126
    %p140 = scmp.eq.s32.totalorder %s15, 1
    %p141 = por %p139, %p140
    %p143 = scmp.ne.s32.totalorder %s126, %s142
    %p144 = scmp.eq.s32.totalorder %s15, 0
    %p145 = por %p143, %p144
    %p146 = scmp.le.s32.totalorder 1, %s9
    %p147 = scmp.lt.s32.totalorder %s9, 3
    %p148 = pnand %p146, %p147
    %p149 = pneg %p148
    // Predicated region
    $region9: #{forward.167} parent=5 // pred_check
      _
    $region10: #{forward.167} parent=5 // pred_check_branch
      %151 = sbr.rel (%p148) target = $region12
    $region11: #{forward.167} parent=5 // pred_region
      %s152 = ssub.s32 %s9, 1
      // Predicated region
      $region13: #{forward.167} parent=11 // pred_check
        %p153 = pneg %p84
      $region14: #{forward.167} parent=11 // pred_check_branch
        %155 = sbr.rel (%p153) target = $region16
      $region15: #{forward.167} parent=11 // pred_region
        %s156 = smul.u32 16, %s21
        %p157 = scmp.lt.s32.totalorder %s156, 15
        %s158 = scalar_select %p157, %s156, 15
        %p159 = scmp.lt.s32.totalorder %s20, 0
        %s160 = scalar_select %p159, %s20, 0
        %s161 = sadd.s32 %s160, %s158
        %s162 = smul.addr %s161, 4
        %s163 = scalar_lea.vmem %s1, %s162
        %s164 = smul.u32 16, %s21
      $region16: #{forward.167} parent=11 // pred_fallthru
        _
      // Predicated region
      $region17: #{forward.167} parent=11 // pred_check
        %p165 = pneg %p110
      $region18: #{forward.167} parent=11 // pred_check_branch
        %167 = sbr.rel (%p165) target = $region20
      $region19: #{forward.167} parent=11 // pred_region
        %p168 = scmp.lt.s32.totalorder %s20, 0
        %s169 = scalar_select %p168, %s20, 0
        %s170 = scalar_lea.vmem %s2, %s169
      $region20: #{forward.167} parent=11 // pred_fallthru
        _
    $region12: #{forward.167} parent=5 // pred_fallthru
      _
    %p171 = scmp.lt.s32.totalorder %s9, 2
    // Predicated region
    $region21: #{forward.167} parent=5 // pred_check
      %p172 = pneg %p171
    $region22: #{forward.167} parent=5 // pred_check_branch
      %174 = sbr.rel (%p172) target = $region24
    $region23: #{forward.167} parent=5 // pred_region
      // Predicated region
      $region25: #{forward.167} parent=23 // pred_check
        %p175 = pneg %p50
      $region26: #{forward.167} parent=23 // pred_check_branch
        %177 = sbr.rel (%p175) target = $region28
      $region27: #{forward.167} parent=23 // pred_region
        %s178 = smul.u32 32, %s16
        %p179 = scmp.lt.s32.totalorder %s178, 63
        %s180 = scalar_select %p179, %s178, 63
        %p181 = scmp.lt.s32.totalorder %s18, 0
        %s182 = scalar_select %p181, %s18, 0
        %s183 = sadd.s32 %s182, %s180
        %s184 = smul.addr %s183, 4
        %s185 = scalar_lea.vmem %s0, %s184
        %s186 = smul.u32 32, %s16
      $region28: #{forward.167} parent=23 // pred_fallthru
        _
    $region24: #{forward.167} parent=5 // pred_fallthru
      _
    %p187 = scmp.le.s32.totalorder 1, %s9
    %p188 = scmp.lt.s32.totalorder %s9, 3
    %p189 = pnand %p187, %p188
    %p190 = pneg %p189
    // Predicated region
    $region29: #{forward.167} parent=5 // pred_check
      _
    $region30: #{forward.167} parent=5 // pred_check_branch
      %192 = sbr.rel (%p189) target = $region32
    $region31: #{forward.167} parent=5 // pred_region
      %s193 = ssub.s32 %s9, 1
      %s194 = smul.u32 32, %s19
      %p195 = scmp.lt.s32.totalorder %s194, 63
      %s196 = scalar_select %p195, %s194, 63
      %p197 = scmp.lt.s32.totalorder %s21, 0
      %s198 = scalar_select %p197, %s21, 0
      %s199 = sadd.s32 %s198, %s196
      %s200 = smul.addr %s199, 4
      %s201 = scalar_lea.vmem %s0, %s200
      %p202 = pneg %p56
      %p203 = pneg %p53
      %s204 = smul.u32 16, %s21
      %p205 = scmp.lt.s32.totalorder %s204, 15
      %s206 = scalar_select %p205, %s204, 15
      %p207 = scmp.lt.s32.totalorder %s20, 0
      %s208 = scalar_select %p207, %s20, 0
      %s209 = sadd.s32 %s208, %s206
      %s210 = smul.addr %s209, 4
      %s211 = scalar_lea.vmem %s1, %s210
      %p212 = pneg %p84
      %p213 = pneg %p81
      %p214 = scmp.lt.s32.totalorder %s20, 0
      %s215 = scalar_select %p214, %s20, 0
      %s216 = scalar_lea.vmem %s2, %s215
      %p217 = pneg %p110
      %p218 = pneg %p107
      %p219 = pneg %p138
      %p220 = pneg %p135
      %s221 = smul.u32 32, %s19
      %p222 = scmp.lt.s32.totalorder %s221, 63
      %s223 = scalar_select %p222, %s221, 63
      %p224 = scmp.lt.s32.totalorder %s20, 0
      %s225 = scalar_select %p224, %s20, 0
      %s226 = sadd.s32 %s225, %s223
      %s227 = smul.addr %s226, 8
      %s228 = scalar_lea.vmem %s3, %s227
      %s229 = smul.u32 32, %s19
      %p230 = scmp.lt.s32.totalorder %s229, 63
      %s231 = scalar_select %p230, %s229, 63
      %p232 = scmp.lt.s32.totalorder %s21, 0
      %s233 = scalar_select %p232, %s21, 0
      %s234 = sadd.s32 %s233, %s231
      %s235 = smul.addr %s234, 4
      %s236 = scalar_lea.vmem %s0, %s235
      %s237 = smul.u32 32, %s19
      %s238 = smul.u32 16, %s21
      %p239 = scmp.lt.s32.totalorder %s238, 15
      %s240 = scalar_select %p239, %s238, 15
      %p241 = scmp.lt.s32.totalorder %s20, 0
      %s242 = scalar_select %p241, %s20, 0
      %s243 = sadd.s32 %s242, %s240
      %s244 = smul.addr %s243, 4
      %s245 = scalar_lea.vmem %s1, %s244
      %s246 = smul.u32 16, %s21
      %p247 = scmp.lt.s32.totalorder %s20, 0
      %s248 = scalar_select %p247, %s20, 0
      %s249 = scalar_lea.vmem %s2, %s248
      %s250 = smul.u32 32, %s19
      %p251 = scmp.lt.s32.totalorder %s250, 63
      %s252 = scalar_select %p251, %s250, 63
      %p253 = scmp.lt.s32.totalorder %s20, 0
      %s254 = scalar_select %p253, %s20, 0
      %s255 = sadd.s32 %s254, %s252
      %s256 = smul.addr %s255, 8
      %s257 = scalar_lea.vmem %s3, %s256
      %s258 = smul.u32 32, %s19
      %p259 = scmp.eq.s32.totalorder %s21, 0
      // Predicated region
      $region33: #{forward.167} parent=31 // pred_check
        %p260 = pneg %p259
      $region34: #{forward.167} parent=31 // pred_check_branch
        %262 = sbr.rel (%p260) target = $region36
      $region35: #{forward.167} parent=31 // pred_region
        %263 = vst [vmem:[#allocation2] sm:$0xff] 0.0
        %264 = vst [vmem:[#allocation2 + $0x8] sm:$0xff] 0.0
        %265 = vst [vmem:[#allocation2 + $0x10] sm:$0xff] 0.0
        %266 = vst [vmem:[#allocation2 + $0x18] sm:$0xff] 0.0
        %267 = vst [vmem:[#allocation2 + $0x20] sm:$0xff] 0.0
        %268 = vst [vmem:[#allocation2 + $0x28] sm:$0xff] 0.0
        %269 = vst [vmem:[#allocation2 + $0x30] sm:$0xff] 0.0
        %270 = vst [vmem:[#allocation2 + $0x38] sm:$0xff] 0.0
        %271 = vst [vmem:[#allocation2 + $0x40] sm:$0xff] 0.0
        %272 = vst [vmem:[#allocation2 + $0x48] sm:$0xff] 0.0
        %273 = vst [vmem:[#allocation2 + $0x50] sm:$0xff] 0.0
        %274 = vst [vmem:[#allocation2 + $0x58] sm:$0xff] 0.0
        %275 = vst [vmem:[#allocation2 + $0x60] sm:$0xff] 0.0
        %276 = vst [vmem:[#allocation2 + $0x68] sm:$0xff] 0.0
        %277 = vst [vmem:[#allocation2 + $0x70] sm:$0xff] 0.0
        %278 = vst [vmem:[#allocation2 + $0x78] sm:$0xff] 0.0
        %279 = vst [vmem:[#allocation2 + $0x80] sm:$0xff] 0.0
        %280 = vst [vmem:[#allocation2 + $0x88] sm:$0xff] 0.0
        %281 = vst [vmem:[#allocation2 + $0x90] sm:$0xff] 0.0
        %282 = vst [vmem:[#allocation2 + $0x98] sm:$0xff] 0.0
        %283 = vst [vmem:[#allocation2 + $0xa0] sm:$0xff] 0.0
        %284 = vst [vmem:[#allocation2 + $0xa8] sm:$0xff] 0.0
        %285 = vst [vmem:[#allocation2 + $0xb0] sm:$0xff] 0.0
        %286 = vst [vmem:[#allocation2 + $0xb8] sm:$0xff] 0.0
        %287 = vst [vmem:[#allocation2 + $0xc0] sm:$0xff] 0.0
        %288 = vst [vmem:[#allocation2 + $0xc8] sm:$0xff] 0.0
        %289 = vst [vmem:[#allocation2 + $0xd0] sm:$0xff] 0.0
        %290 = vst [vmem:[#allocation2 + $0xd8] sm:$0xff] 0.0
        %291 = vst [vmem:[#allocation2 + $0xe0] sm:$0xff] 0.0
        %292 = vst [vmem:[#allocation2 + $0xe8] sm:$0xff] 0.0
        %293 = vst [vmem:[#allocation2 + $0xf0] sm:$0xff] 0.0
        %294 = vst [vmem:[#allocation2 + $0xf8] sm:$0xff] 0.0
      $region36: #{forward.167} parent=31 // pred_fallthru
        _
      %v295 = vld [vmem:[%s236] sm:$0xf]
      %v296 = vld [vmem:[%s236 + $0x4] sm:$0xf]
      %v297 = vld [vmem:[%s236 + $0x8] sm:$0xf]
      %v298 = vld [vmem:[%s236 + $0xc] sm:$0xf]
      %v299 = vld [vmem:[%s236 + $0x10] sm:$0xf]
      %v300 = vld [vmem:[%s236 + $0x14] sm:$0xf]
      %v301 = vld [vmem:[%s236 + $0x18] sm:$0xf]
      %v302 = vld [vmem:[%s236 + $0x1c] sm:$0xf]
      %v303 = vld [vmem:[%s236 + $0x20] sm:$0xf]
      %v304 = vld [vmem:[%s236 + $0x24] sm:$0xf]
      %v305 = vld [vmem:[%s236 + $0x28] sm:$0xf]
      %v306 = vld [vmem:[%s236 + $0x2c] sm:$0xf]
      %v307 = vld [vmem:[%s236 + $0x30] sm:$0xf]
      %v308 = vld [vmem:[%s236 + $0x34] sm:$0xf]
      %v309 = vld [vmem:[%s236 + $0x38] sm:$0xf]
      %v310 = vld [vmem:[%s236 + $0x3c] sm:$0xf]
      %v311 = vld [vmem:[%s236 + $0x40] sm:$0xf]
      %v312 = vld [vmem:[%s236 + $0x44] sm:$0xf]
      %v313 = vld [vmem:[%s236 + $0x48] sm:$0xf]
      %v314 = vld [vmem:[%s236 + $0x4c] sm:$0xf]
      %v315 = vld [vmem:[%s236 + $0x50] sm:$0xf]
      %v316 = vld [vmem:[%s236 + $0x54] sm:$0xf]
      %v317 = vld [vmem:[%s236 + $0x58] sm:$0xf]
      %v318 = vld [vmem:[%s236 + $0x5c] sm:$0xf]
      %v319 = vld [vmem:[%s236 + $0x60] sm:$0xf]
      %v320 = vld [vmem:[%s236 + $0x64] sm:$0xf]
      %v321 = vld [vmem:[%s236 + $0x68] sm:$0xf]
      %v322 = vld [vmem:[%s236 + $0x6c] sm:$0xf]
      %v323 = vld [vmem:[%s236 + $0x70] sm:$0xf]
      %v324 = vld [vmem:[%s236 + $0x74] sm:$0xf]
      %v325 = vld [vmem:[%s236 + $0x78] sm:$0xf]
      %v326 = vld [vmem:[%s236 + $0x7c] sm:$0xf]
      %v327 = vld [vmem:[#allocation2] sm:$0xff]
      %v328 = vld [vmem:[#allocation2 + $0x8] sm:$0xff]
      %v329 = vld [vmem:[#allocation2 + $0x10] sm:$0xff]
      %v330 = vld [vmem:[#allocation2 + $0x18] sm:$0xff]
      %v331 = vld [vmem:[#allocation2 + $0x20] sm:$0xff]
      %v332 = vld [vmem:[#allocation2 + $0x28] sm:$0xff]
      %v333 = vld [vmem:[#allocation2 + $0x30] sm:$0xff]
      %v334 = vld [vmem:[#allocation2 + $0x38] sm:$0xff]
      %v335 = vld [vmem:[#allocation2 + $0x40] sm:$0xff]
      %v336 = vld [vmem:[#allocation2 + $0x48] sm:$0xff]
      %v337 = vld [vmem:[#allocation2 + $0x50] sm:$0xff]
      %v338 = vld [vmem:[#allocation2 + $0x58] sm:$0xff]
      %v339 = vld [vmem:[#allocation2 + $0x60] sm:$0xff]
      %v340 = vld [vmem:[#allocation2 + $0x68] sm:$0xff]
      %v341 = vld [vmem:[#allocation2 + $0x70] sm:$0xff]
      %v342 = vld [vmem:[#allocation2 + $0x78] sm:$0xff]
      %v343 = vld [vmem:[#allocation2 + $0x80] sm:$0xff]
      %v344 = vld [vmem:[#allocation2 + $0x88] sm:$0xff]
      %v345 = vld [vmem:[#allocation2 + $0x90] sm:$0xff]
      %v346 = vld [vmem:[#allocation2 + $0x98] sm:$0xff]
      %v347 = vld [vmem:[#allocation2 + $0xa0] sm:$0xff]
      %v348 = vld [vmem:[#allocation2 + $0xa8] sm:$0xff]
      %v349 = vld [vmem:[#allocation2 + $0xb0] sm:$0xff]
      %v350 = vld [vmem:[#allocation2 + $0xb8] sm:$0xff]
      %v351 = vld [vmem:[#allocation2 + $0xc0] sm:$0xff]
      %v352 = vld [vmem:[#allocation2 + $0xc8] sm:$0xff]
      %v353 = vld [vmem:[#allocation2 + $0xd0] sm:$0xff]
      %v354 = vld [vmem:[#allocation2 + $0xd8] sm:$0xff]
      %v355 = vld [vmem:[#allocation2 + $0xe0] sm:$0xff]
      %v356 = vld [vmem:[#allocation2 + $0xe8] sm:$0xff]
      %v357 = vld [vmem:[#allocation2 + $0xf0] sm:$0xff]
      %v358 = vld [vmem:[#allocation2 + $0xf8] sm:$0xff]
      %v359 = vld [vmem:[%s245] sm:$0xf]
      %v360 = vld [vmem:[%s245 + $0x4] sm:$0xf]
      %v361 = vld [vmem:[%s245 + $0x8] sm:$0xf]
      %v362 = vld [vmem:[%s245 + $0xc] sm:$0xf]
      %v363 = vld [vmem:[%s245 + $0x10] sm:$0xf]
      %v364 = vld [vmem:[%s245 + $0x14] sm:$0xf]
      %v365 = vld [vmem:[%s245 + $0x18] sm:$0xf]
      %v366 = vld [vmem:[%s245 + $0x1c] sm:$0xf]
      %v367 = vld [vmem:[%s245 + $0x20] sm:$0xf]
      %v368 = vld [vmem:[%s245 + $0x24] sm:$0xf]
      %v369 = vld [vmem:[%s245 + $0x28] sm:$0xf]
      %v370 = vld [vmem:[%s245 + $0x2c] sm:$0xf]
      %v371 = vld [vmem:[%s245 + $0x30] sm:$0xf]
      %v372 = vld [vmem:[%s245 + $0x34] sm:$0xf]
      %v373 = vld [vmem:[%s245 + $0x38] sm:$0xf]
      %v374 = vld [vmem:[%s245 + $0x3c] sm:$0xf]
      %v407 = vunpack.c.l.b16 %v295
      %v408 = vunpack.c.l.b16 %v296
      %v409 = vunpack.c.l.b16 %v297
      %v410 = vunpack.c.l.b16 %v298
      %v411 = vunpack.c.l.b16 %v299
      %v412 = vunpack.c.l.b16 %v300
      %v413 = vunpack.c.l.b16 %v301
      %v414 = vunpack.c.l.b16 %v302
      %v415 = vunpack.c.l.b16 %v303
      %v416 = vunpack.c.l.b16 %v304
      %v417 = vunpack.c.l.b16 %v305
      %v418 = vunpack.c.l.b16 %v306
      %v419 = vunpack.c.l.b16 %v307
      %v420 = vunpack.c.l.b16 %v308
      %v421 = vunpack.c.l.b16 %v309
      %v422 = vunpack.c.l.b16 %v310
      %v423 = vunpack.c.l.b16 %v311
      %v424 = vunpack.c.l.b16 %v312
      %v425 = vunpack.c.l.b16 %v313
      %v426 = vunpack.c.l.b16 %v314
      %v427 = vunpack.c.l.b16 %v315
      %v428 = vunpack.c.l.b16 %v316
      %v429 = vunpack.c.l.b16 %v317
      %v430 = vunpack.c.l.b16 %v318
      %v431 = vunpack.c.l.b16 %v319
      %v432 = vunpack.c.l.b16 %v320
      %v433 = vunpack.c.l.b16 %v321
      %v434 = vunpack.c.l.b16 %v322
      %v435 = vunpack.c.l.b16 %v323
      %v436 = vunpack.c.l.b16 %v324
      %v437 = vunpack.c.l.b16 %v325
      %v438 = vunpack.c.l.b16 %v326
      %v439 = vpack.c.b16 %v408, %v407
      %v440 = vpack.c.b16 %v410, %v409
      %v441 = vpack.c.b16 %v412, %v411
      %v442 = vpack.c.b16 %v414, %v413
      %v443 = vpack.c.b16 %v416, %v415
      %v444 = vpack.c.b16 %v418, %v417
      %v445 = vpack.c.b16 %v420, %v419
      %v446 = vpack.c.b16 %v422, %v421
      %v447 = vpack.c.b16 %v424, %v423
      %v448 = vpack.c.b16 %v426, %v425
      %v449 = vpack.c.b16 %v428, %v427
      %v450 = vpack.c.b16 %v430, %v429
      %v451 = vpack.c.b16 %v432, %v431
      %v452 = vpack.c.b16 %v434, %v433
      %v453 = vpack.c.b16 %v436, %v435
      %v454 = vpack.c.b16 %v438, %v437
      %v487 = vunpack.c.l.b16 %v359
      %v488 = vunpack.c.l.b16 %v360
      %v489 = vunpack.c.l.b16 %v361
      %v490 = vunpack.c.l.b16 %v362
      %v491 = vunpack.c.l.b16 %v363
      %v492 = vunpack.c.l.b16 %v364
      %v493 = vunpack.c.l.b16 %v365
      %v494 = vunpack.c.l.b16 %v366
      %v495 = vunpack.c.l.b16 %v367
      %v496 = vunpack.c.l.b16 %v368
      %v497 = vunpack.c.l.b16 %v369
      %v498 = vunpack.c.l.b16 %v370
      %v499 = vunpack.c.l.b16 %v371
      %v500 = vunpack.c.l.b16 %v372
      %v501 = vunpack.c.l.b16 %v373
      %v502 = vunpack.c.l.b16 %v374
      %v503 = vpack.c.b16 %v488, %v487
      %v504 = vpack.c.b16 %v490, %v489
      %v505 = vpack.c.b16 %v492, %v491
      %v506 = vpack.c.b16 %v494, %v493
      %v507 = vpack.c.b16 %v496, %v495
      %v508 = vpack.c.b16 %v498, %v497
      %v509 = vpack.c.b16 %v500, %v499
      %v510 = vpack.c.b16 %v502, %v501
      %519 = vmatpush.bf16.msra.mxu0 %v510
      %520 = vmatpush.bf16.msra.mxu0 %v509
      %521 = vmatpush.bf16.msra.mxu0 %v508
      %522 = vmatpush.bf16.msra.mxu0 %v507
      %523 = vmatpush.bf16.msra.mxu0 %v506
      %524 = vmatpush.bf16.msra.mxu0 %v505
      %525 = vmatpush.bf16.msra.mxu0 %v504
      %526 = vmatpush.bf16.msra.mxu0 %v503
      %527 = vmatmul.bf16.gmra.mxu0 %v439
      %v528 = vpop.f32.mrf.mxu0
      %v529 = vadd.f32 0.0, %v528
      %v530 = vpop.f32.mrf.mxu0
      %v531 = vadd.f32 0.0, %v530
      %532 = vmatmul.bf16.gmra.mxu0 %v440
      %v533 = vpop.f32.mrf.mxu0
      %v534 = vadd.f32 0.0, %v533
      %v535 = vpop.f32.mrf.mxu0
      %v536 = vadd.f32 0.0, %v535
      %537 = vmatmul.bf16.gmra.mxu0 %v441
      %v538 = vpop.f32.mrf.mxu0
      %v539 = vadd.f32 0.0, %v538
      %v540 = vpop.f32.mrf.mxu0
      %v541 = vadd.f32 0.0, %v540
      %542 = vmatmul.bf16.gmra.mxu0 %v442
      %v543 = vpop.f32.mrf.mxu0
      %v544 = vadd.f32 0.0, %v543
      %v545 = vpop.f32.mrf.mxu0
      %v546 = vadd.f32 0.0, %v545
      %547 = vmatmul.bf16.gmra.mxu0 %v443
      %v548 = vpop.f32.mrf.mxu0
      %v549 = vadd.f32 0.0, %v548
      %v550 = vpop.f32.mrf.mxu0
      %v551 = vadd.f32 0.0, %v550
      %552 = vmatmul.bf16.gmra.mxu0 %v444
      %v553 = vpop.f32.mrf.mxu0
      %v554 = vadd.f32 0.0, %v553
      %v555 = vpop.f32.mrf.mxu0
      %v556 = vadd.f32 0.0, %v555
      %557 = vmatmul.bf16.gmra.mxu0 %v445
      %v558 = vpop.f32.mrf.mxu0
      %v559 = vadd.f32 0.0, %v558
      %v560 = vpop.f32.mrf.mxu0
      %v561 = vadd.f32 0.0, %v560
      %562 = vmatmul.bf16.gmra.mxu0 %v446
      %v563 = vpop.f32.mrf.mxu0
      %v564 = vadd.f32 0.0, %v563
      %v565 = vpop.f32.mrf.mxu0
      %v566 = vadd.f32 0.0, %v565
      %567 = vmatmul.bf16.gmra.mxu0 %v447
      %v568 = vpop.f32.mrf.mxu0
      %v569 = vadd.f32 0.0, %v568
      %v570 = vpop.f32.mrf.mxu0
      %v571 = vadd.f32 0.0, %v570
      %572 = vmatmul.bf16.gmra.mxu0 %v448
      %v573 = vpop.f32.mrf.mxu0
      %v574 = vadd.f32 0.0, %v573
      %v575 = vpop.f32.mrf.mxu0
      %v576 = vadd.f32 0.0, %v575
      %577 = vmatmul.bf16.gmra.mxu0 %v449
      %v578 = vpop.f32.mrf.mxu0
      %v579 = vadd.f32 0.0, %v578
      %v580 = vpop.f32.mrf.mxu0
      %v581 = vadd.f32 0.0, %v580
      %582 = vmatmul.bf16.gmra.mxu0 %v450
      %v583 = vpop.f32.mrf.mxu0
      %v584 = vadd.f32 0.0, %v583
      %v585 = vpop.f32.mrf.mxu0
      %v586 = vadd.f32 0.0, %v585
      %587 = vmatmul.bf16.gmra.mxu0 %v451
      %v588 = vpop.f32.mrf.mxu0
      %v589 = vadd.f32 0.0, %v588
      %v590 = vpop.f32.mrf.mxu0
      %v591 = vadd.f32 0.0, %v590
      %592 = vmatmul.bf16.gmra.mxu0 %v452
      %v593 = vpop.f32.mrf.mxu0
      %v594 = vadd.f32 0.0, %v593
      %v595 = vpop.f32.mrf.mxu0
      %v596 = vadd.f32 0.0, %v595
      %597 = vmatmul.bf16.gmra.mxu0 %v453
      %v598 = vpop.f32.mrf.mxu0
      %v599 = vadd.f32 0.0, %v598
      %v600 = vpop.f32.mrf.mxu0
      %v601 = vadd.f32 0.0, %v600
      %602 = vmatmul.bf16.gmra.mxu0 %v454
      %v603 = vpop.f32.mrf.mxu0
      %v604 = vadd.f32 0.0, %v603
      %v605 = vpop.f32.mrf.mxu0
      %v606 = vadd.f32 0.0, %v605
      %607 = vdwg.mxu0
      %v608 = vadd.f32 %v327, %v529
      %v609 = vadd.f32 %v328, %v531
      %v610 = vadd.f32 %v329, %v534
      %v611 = vadd.f32 %v330, %v536
      %v612 = vadd.f32 %v331, %v539
      %v613 = vadd.f32 %v332, %v541
      %v614 = vadd.f32 %v333, %v544
      %v615 = vadd.f32 %v334, %v546
      %v616 = vadd.f32 %v335, %v549
      %v617 = vadd.f32 %v336, %v551
      %v618 = vadd.f32 %v337, %v554
      %v619 = vadd.f32 %v338, %v556
      %v620 = vadd.f32 %v339, %v559
      %v621 = vadd.f32 %v340, %v561
      %v622 = vadd.f32 %v341, %v564
      %v623 = vadd.f32 %v342, %v566
      %v624 = vadd.f32 %v343, %v569
      %v625 = vadd.f32 %v344, %v571
      %v626 = vadd.f32 %v345, %v574
      %v627 = vadd.f32 %v346, %v576
      %v628 = vadd.f32 %v347, %v579
      %v629 = vadd.f32 %v348, %v581
      %v630 = vadd.f32 %v349, %v584
      %v631 = vadd.f32 %v350, %v586
      %v632 = vadd.f32 %v351, %v589
      %v633 = vadd.f32 %v352, %v591
      %v634 = vadd.f32 %v353, %v594
      %v635 = vadd.f32 %v354, %v596
      %v636 = vadd.f32 %v355, %v599
      %v637 = vadd.f32 %v356, %v601
      %v638 = vadd.f32 %v357, %v604
      %v639 = vadd.f32 %v358, %v606
      %640 = vst [vmem:[#allocation2] sm:$0xff] %v608
      %641 = vst [vmem:[#allocation2 + $0x8] sm:$0xff] %v609
      %642 = vst [vmem:[#allocation2 + $0x10] sm:$0xff] %v610
      %643 = vst [vmem:[#allocation2 + $0x18] sm:$0xff] %v611
      %644 = vst [vmem:[#allocation2 + $0x20] sm:$0xff] %v612
      %645 = vst [vmem:[#allocation2 + $0x28] sm:$0xff] %v613
      %646 = vst [vmem:[#allocation2 + $0x30] sm:$0xff] %v614
      %647 = vst [vmem:[#allocation2 + $0x38] sm:$0xff] %v615
      %648 = vst [vmem:[#allocation2 + $0x40] sm:$0xff] %v616
      %649 = vst [vmem:[#allocation2 + $0x48] sm:$0xff] %v617
      %650 = vst [vmem:[#allocation2 + $0x50] sm:$0xff] %v618
      %651 = vst [vmem:[#allocation2 + $0x58] sm:$0xff] %v619
      %652 = vst [vmem:[#allocation2 + $0x60] sm:$0xff] %v620
      %653 = vst [vmem:[#allocation2 + $0x68] sm:$0xff] %v621
      %654 = vst [vmem:[#allocation2 + $0x70] sm:$0xff] %v622
      %655 = vst [vmem:[#allocation2 + $0x78] sm:$0xff] %v623
      %656 = vst [vmem:[#allocation2 + $0x80] sm:$0xff] %v624
      %657 = vst [vmem:[#allocation2 + $0x88] sm:$0xff] %v625
      %658 = vst [vmem:[#allocation2 + $0x90] sm:$0xff] %v626
      %659 = vst [vmem:[#allocation2 + $0x98] sm:$0xff] %v627
      %660 = vst [vmem:[#allocation2 + $0xa0] sm:$0xff] %v628
      %661 = vst [vmem:[#allocation2 + $0xa8] sm:$0xff] %v629
      %662 = vst [vmem:[#allocation2 + $0xb0] sm:$0xff] %v630
      %663 = vst [vmem:[#allocation2 + $0xb8] sm:$0xff] %v631
      %664 = vst [vmem:[#allocation2 + $0xc0] sm:$0xff] %v632
      %665 = vst [vmem:[#allocation2 + $0xc8] sm:$0xff] %v633
      %666 = vst [vmem:[#allocation2 + $0xd0] sm:$0xff] %v634
      %667 = vst [vmem:[#allocation2 + $0xd8] sm:$0xff] %v635
      %668 = vst [vmem:[#allocation2 + $0xe0] sm:$0xff] %v636
      %669 = vst [vmem:[#allocation2 + $0xe8] sm:$0xff] %v637
      %670 = vst [vmem:[#allocation2 + $0xf0] sm:$0xff] %v638
      %671 = vst [vmem:[#allocation2 + $0xf8] sm:$0xff] %v639
      // Predicated region
      $region37: #{forward.167} parent=31 // pred_check
        %p672 = pneg %p259
      $region38: #{forward.167} parent=31 // pred_check_branch
        %674 = sbr.rel (%p672) target = $region40
      $region39: #{forward.167} parent=31 // pred_region
        %v675 = vld [vmem:[#allocation2] sm:$0xff]
        %v676 = vld [vmem:[#allocation2 + $0x8] sm:$0xff]
        %v677 = vld [vmem:[#allocation2 + $0x10] sm:$0xff]
        %v678 = vld [vmem:[#allocation2 + $0x18] sm:$0xff]
        %v679 = vld [vmem:[#allocation2 + $0x20] sm:$0xff]
        %v680 = vld [vmem:[#allocation2 + $0x28] sm:$0xff]
        %v681 = vld [vmem:[#allocation2 + $0x30] sm:$0xff]
        %v682 = vld [vmem:[#allocation2 + $0x38] sm:$0xff]
        %v683 = vld [vmem:[#allocation2 + $0x40] sm:$0xff]
        %v684 = vld [vmem:[#allocation2 + $0x48] sm:$0xff]
        %v685 = vld [vmem:[#allocation2 + $0x50] sm:$0xff]
        %v686 = vld [vmem:[#allocation2 + $0x58] sm:$0xff]
        %v687 = vld [vmem:[#allocation2 + $0x60] sm:$0xff]
        %v688 = vld [vmem:[#allocation2 + $0x68] sm:$0xff]
        %v689 = vld [vmem:[#allocation2 + $0x70] sm:$0xff]
        %v690 = vld [vmem:[#allocation2 + $0x78] sm:$0xff]
        %v691 = vld [vmem:[#allocation2 + $0x80] sm:$0xff]
        %v692 = vld [vmem:[#allocation2 + $0x88] sm:$0xff]
        %v693 = vld [vmem:[#allocation2 + $0x90] sm:$0xff]
        %v694 = vld [vmem:[#allocation2 + $0x98] sm:$0xff]
        %v695 = vld [vmem:[#allocation2 + $0xa0] sm:$0xff]
        %v696 = vld [vmem:[#allocation2 + $0xa8] sm:$0xff]
        %v697 = vld [vmem:[#allocation2 + $0xb0] sm:$0xff]
        %v698 = vld [vmem:[#allocation2 + $0xb8] sm:$0xff]
        %v699 = vld [vmem:[#allocation2 + $0xc0] sm:$0xff]
        %v700 = vld [vmem:[#allocation2 + $0xc8] sm:$0xff]
        %v701 = vld [vmem:[#allocation2 + $0xd0] sm:$0xff]
        %v702 = vld [vmem:[#allocation2 + $0xd8] sm:$0xff]
        %v703 = vld [vmem:[#allocation2 + $0xe0] sm:$0xff]
        %v704 = vld [vmem:[#allocation2 + $0xe8] sm:$0xff]
        %v705 = vld [vmem:[#allocation2 + $0xf0] sm:$0xff]
        %v706 = vld [vmem:[#allocation2 + $0xf8] sm:$0xff]
        %v707 = vld [vmem:[%s249] sm:$0x1]
        %v709 = vperm.slane %v707, 0
        %v711 = vadd.f32 %v675, %v709
        %v712 = vadd.f32 %v676, %v709
        %v713 = vadd.f32 %v677, %v709
        %v714 = vadd.f32 %v678, %v709
        %v715 = vadd.f32 %v679, %v709
        %v716 = vadd.f32 %v680, %v709
        %v717 = vadd.f32 %v681, %v709
        %v718 = vadd.f32 %v682, %v709
        %v719 = vadd.f32 %v683, %v709
        %v720 = vadd.f32 %v684, %v709
        %v721 = vadd.f32 %v685, %v709
        %v722 = vadd.f32 %v686, %v709
        %v723 = vadd.f32 %v687, %v709
        %v724 = vadd.f32 %v688, %v709
        %v725 = vadd.f32 %v689, %v709
        %v726 = vadd.f32 %v690, %v709
        %v727 = vadd.f32 %v691, %v709
        %v728 = vadd.f32 %v692, %v709
        %v729 = vadd.f32 %v693, %v709
        %v730 = vadd.f32 %v694, %v709
        %v731 = vadd.f32 %v695, %v709
        %v732 = vadd.f32 %v696, %v709
        %v733 = vadd.f32 %v697, %v709
        %v734 = vadd.f32 %v698, %v709
        %v735 = vadd.f32 %v699, %v709
        %v736 = vadd.f32 %v700, %v709
        %v737 = vadd.f32 %v701, %v709
        %v738 = vadd.f32 %v702, %v709
        %v739 = vadd.f32 %v703, %v709
        %v740 = vadd.f32 %v704, %v709
        %v741 = vadd.f32 %v705, %v709
        %v742 = vadd.f32 %v706, %v709
        %743 = vst [vmem:[%s257] sm:$0xff] %v711
        %744 = vst [vmem:[%s257 + $0x8] sm:$0xff] %v712
        %745 = vst [vmem:[%s257 + $0x10] sm:$0xff] %v713
        %746 = vst [vmem:[%s257 + $0x18] sm:$0xff] %v714
        %747 = vst [vmem:[%s257 + $0x20] sm:$0xff] %v715
        %748 = vst [vmem:[%s257 + $0x28] sm:$0xff] %v716
        %749 = vst [vmem:[%s257 + $0x30] sm:$0xff] %v717
        %750 = vst [vmem:[%s257 + $0x38] sm:$0xff] %v718
        %751 = vst [vmem:[%s257 + $0x40] sm:$0xff] %v719
        %752 = vst [vmem:[%s257 + $0x48] sm:$0xff] %v720
        %753 = vst [vmem:[%s257 + $0x50] sm:$0xff] %v721
        %754 = vst [vmem:[%s257 + $0x58] sm:$0xff] %v722
        %755 = vst [vmem:[%s257 + $0x60] sm:$0xff] %v723
        %756 = vst [vmem:[%s257 + $0x68] sm:$0xff] %v724
        %757 = vst [vmem:[%s257 + $0x70] sm:$0xff] %v725
        %758 = vst [vmem:[%s257 + $0x78] sm:$0xff] %v726
        %759 = vst [vmem:[%s257 + $0x80] sm:$0xff] %v727
        %760 = vst [vmem:[%s257 + $0x88] sm:$0xff] %v728
        %761 = vst [vmem:[%s257 + $0x90] sm:$0xff] %v729
        %762 = vst [vmem:[%s257 + $0x98] sm:$0xff] %v730
        %763 = vst [vmem:[%s257 + $0xa0] sm:$0xff] %v731
        %764 = vst [vmem:[%s257 + $0xa8] sm:$0xff] %v732
        %765 = vst [vmem:[%s257 + $0xb0] sm:$0xff] %v733
        %766 = vst [vmem:[%s257 + $0xb8] sm:$0xff] %v734
        %767 = vst [vmem:[%s257 + $0xc0] sm:$0xff] %v735
        %768 = vst [vmem:[%s257 + $0xc8] sm:$0xff] %v736
        %769 = vst [vmem:[%s257 + $0xd0] sm:$0xff] %v737
        %770 = vst [vmem:[%s257 + $0xd8] sm:$0xff] %v738
        %771 = vst [vmem:[%s257 + $0xe0] sm:$0xff] %v739
        %772 = vst [vmem:[%s257 + $0xe8] sm:$0xff] %v740
        %773 = vst [vmem:[%s257 + $0xf0] sm:$0xff] %v741
        %774 = vst [vmem:[%s257 + $0xf8] sm:$0xff] %v742
      $region40: #{forward.167} parent=31 // pred_fallthru
        _
      %s775 = smul.u32 32, %s19
      %p776 = scmp.lt.s32.totalorder %s775, 63
      %s777 = scalar_select %p776, %s775, 63
      %p778 = scmp.lt.s32.totalorder %s20, 0
      %s779 = scalar_select %p778, %s20, 0
      %s780 = sadd.s32 %s779, %s777
      %s781 = smul.addr %s780, 8
      %s782 = scalar_lea.vmem %s3, %s781
      // Predicated region
      $region41: #{forward.167} parent=31 // pred_check
        %p783 = pneg %p135
      $region42: #{forward.167} parent=31 // pred_check_branch
        %785 = sbr.rel (%p783) target = $region44
      $region43: #{forward.167} parent=31 // pred_region
        %s786 = smul.u32 32, %s19
      $region44: #{forward.167} parent=31 // pred_fallthru
        _
    $region32: #{forward.167} parent=5 // pred_fallthru
      _
    %p787 = scmp.le.s32.totalorder 2, %s9
    // Predicated region
    $region45: #{forward.167} parent=5 // pred_check
      %p788 = pneg %p787
    $region46: #{forward.167} parent=5 // pred_check_branch
      %790 = sbr.rel (%p788) target = $region48
    $region47: #{forward.167} parent=5 // pred_region
      %s791 = ssub.s32 %s9, 2
      // Predicated region
      $region49: #{forward.167} parent=47 // pred_check
        %p792 = pneg %p141
      $region50: #{forward.167} parent=47 // pred_check_branch
        %794 = sbr.rel (%p792) target = $region52
      $region51: #{forward.167} parent=47 // pred_region
        %s795 = smul.u32 32, %s22
        %p796 = scmp.lt.s32.totalorder %s795, 63
        %s797 = scalar_select %p796, %s795, 63
        %p798 = scmp.lt.s32.totalorder %s23, 0
        %s799 = scalar_select %p798, %s23, 0
        %s800 = sadd.s32 %s799, %s797
        %s801 = smul.addr %s800, 8
        %s802 = scalar_lea.vmem %s3, %s801
      $region52: #{forward.167} parent=47 // pred_fallthru
        _
    $region48: #{forward.167} parent=5 // pred_fallthru
      _
  $region6: #{forward.167} parent=0 // loop_footer
    %s13 = sadd.s32 1, %s9
  $region7: #{forward.167} parent=0 // loop_footer_branch
    %8 = sbr.rel target = $region3
  $region8: #{forward.167} parent=0 // loop_exit
    _

// kernel: forward.168
$region0: #{forward.168}
  #allocation0 [shape = 'u32[]', space=smem, size = 0x4, offset = 0x4, fixed_abs, tag = 'smem constant byte address 0x4 - core index']
  #allocation1 [shape = 'u32[72,128]{1,0:T(1,128)}', space=vmem, size = 0x9000, scoped, tag = 'internal scratch']
  #allocation2 [shape = 'f32[128,128]{1,0:T(8,128)}', space=vmem, size = 0x10000, scoped, tag = 'scratch operand']
  %s0 = inlined_call_operand.vmem [shape: bf16[128,128], index: 0, kind: input, shape index: {}]
  %s1 = inlined_call_operand.vmem [shape: bf16[128,128], index: 1, kind: input, shape index: {}]
  %s2 = inlined_call_operand.vmem [shape: f32[1,128], index: 2, kind: input, shape index: {}]
  %s3 = inlined_call_operand.vmem [shape: f32[128,128], index: 3, kind: output, shape index: {}]
  %s4 = sld [smem:[#allocation0]]
  $region30: #{forward.168} parent=0
    _
  %s6 = ssub.s32 1, %s4
  %s7 = scalar_select 0, %s6, %s4
  // Predicated region
  $region2: #{forward.168} parent=0 // pred_check
    _
  $region3: #{forward.168} parent=0 // pred_check_branch
    %9 = sbr.rel (0) target = $region5
  $region4: #{forward.168} parent=0 // pred_region
    _
  $region5: #{forward.168} parent=0 // pred_fallthru
    _
  // Predicated region
  $region6: #{forward.168} parent=0 // pred_check
    _
  $region7: #{forward.168} parent=0 // pred_check_branch
    %11 = sbr.rel (0) target = $region9
  $region8: #{forward.168} parent=0 // pred_region
    _
  $region9: #{forward.168} parent=0 // pred_fallthru
    _
  // Predicated region
  $region10: #{forward.168} parent=0 // pred_check
    _
  $region11: #{forward.168} parent=0 // pred_check_branch
    %13 = sbr.rel (0) target = $region13
  $region12: #{forward.168} parent=0 // pred_region
    _
  $region13: #{forward.168} parent=0 // pred_fallthru
    _
  %p14 = scmp.eq.s32.totalorder 0, 0
  // Predicated region
  $region14: #{forward.168} parent=0 // pred_check
    %p15 = pneg %p14
  $region15: #{forward.168} parent=0 // pred_check_branch
    %17 = sbr.rel (%p15) target = $region17
  $region16: #{forward.168} parent=0 // pred_region
    %18 = vst [vmem:[#allocation2] sm:$0xff] 0.0
    %19 = vst [vmem:[#allocation2 + $0x8] sm:$0xff] 0.0
    %20 = vst [vmem:[#allocation2 + $0x10] sm:$0xff] 0.0
    %21 = vst [vmem:[#allocation2 + $0x18] sm:$0xff] 0.0
    %22 = vst [vmem:[#allocation2 + $0x20] sm:$0xff] 0.0
    %23 = vst [vmem:[#allocation2 + $0x28] sm:$0xff] 0.0
    %24 = vst [vmem:[#allocation2 + $0x30] sm:$0xff] 0.0
    %25 = vst [vmem:[#allocation2 + $0x38] sm:$0xff] 0.0
    %26 = vst [vmem:[#allocation2 + $0x40] sm:$0xff] 0.0
    %27 = vst [vmem:[#allocation2 + $0x48] sm:$0xff] 0.0
    %28 = vst [vmem:[#allocation2 + $0x50] sm:$0xff] 0.0
    %29 = vst [vmem:[#allocation2 + $0x58] sm:$0xff] 0.0
    %30 = vst [vmem:[#allocation2 + $0x60] sm:$0xff] 0.0
    %31 = vst [vmem:[#allocation2 + $0x68] sm:$0xff] 0.0
    %32 = vst [vmem:[#allocation2 + $0x70] sm:$0xff] 0.0
    %33 = vst [vmem:[#allocation2 + $0x78] sm:$0xff] 0.0
  $region17: #{forward.168} parent=0 // pred_fallthru
    _
  %v34 = vld [vmem:[%s0] sm:$0xf]
  %v35 = vld [vmem:[%s0 + $0x4] sm:$0xf]
  %v36 = vld [vmem:[%s0 + $0x8] sm:$0xf]
  %v37 = vld [vmem:[%s0 + $0xc] sm:$0xf]
  %v38 = vld [vmem:[%s0 + $0x10] sm:$0xf]
  %v39 = vld [vmem:[%s0 + $0x14] sm:$0xf]
  %v40 = vld [vmem:[%s0 + $0x18] sm:$0xf]
  %v41 = vld [vmem:[%s0 + $0x1c] sm:$0xf]
  %v42 = vld [vmem:[%s0 + $0x20] sm:$0xf]
  %v43 = vld [vmem:[%s0 + $0x24] sm:$0xf]
  %v44 = vld [vmem:[%s0 + $0x28] sm:$0xf]
  %v45 = vld [vmem:[%s0 + $0x2c] sm:$0xf]
  %v46 = vld [vmem:[%s0 + $0x30] sm:$0xf]
  %v47 = vld [vmem:[%s0 + $0x34] sm:$0xf]
  %v48 = vld [vmem:[%s0 + $0x38] sm:$0xf]
  %v49 = vld [vmem:[%s0 + $0x3c] sm:$0xf]
  %v50 = vunpack.c.l.bf16 %v34
  %v51 = vunpack.c.l.bf16 %v35
  %v52 = vunpack.c.l.bf16 %v36
  %v53 = vunpack.c.l.bf16 %v37
  %v54 = vunpack.c.l.bf16 %v38
  %v55 = vunpack.c.l.bf16 %v39
  %v56 = vunpack.c.l.bf16 %v40
  %v57 = vunpack.c.l.bf16 %v41
  %v58 = vunpack.c.l.bf16 %v42
  %v59 = vunpack.c.l.bf16 %v43
  %v60 = vunpack.c.l.bf16 %v44
  %v61 = vunpack.c.l.bf16 %v45
  %v62 = vunpack.c.l.bf16 %v46
  %v63 = vunpack.c.l.bf16 %v47
  %v64 = vunpack.c.l.bf16 %v48
  %v65 = vunpack.c.l.bf16 %v49
  %v66 = vmax.f32 %v50, 0.0
  %v67 = vmax.f32 %v51, 0.0
  %v68 = vmax.f32 %v52, 0.0
  %v69 = vmax.f32 %v53, 0.0
  %v70 = vmax.f32 %v54, 0.0
  %v71 = vmax.f32 %v55, 0.0
  %v72 = vmax.f32 %v56, 0.0
  %v73 = vmax.f32 %v57, 0.0
  %v74 = vmax.f32 %v58, 0.0
  %v75 = vmax.f32 %v59, 0.0
  %v76 = vmax.f32 %v60, 0.0
  %v77 = vmax.f32 %v61, 0.0
  %v78 = vmax.f32 %v62, 0.0
  %v79 = vmax.f32 %v63, 0.0
  %v80 = vmax.f32 %v64, 0.0
  %v81 = vmax.f32 %v65, 0.0
  %v82 = vpack.c.bf16 %v67, %v66
  %v83 = vpack.c.bf16 %v69, %v68
  %v84 = vpack.c.bf16 %v71, %v70
  %v85 = vpack.c.bf16 %v73, %v72
  %v86 = vpack.c.bf16 %v75, %v74
  %v87 = vpack.c.bf16 %v77, %v76
  %v88 = vpack.c.bf16 %v79, %v78
  %v89 = vpack.c.bf16 %v81, %v80
  %v90 = vld [vmem:[#allocation2] sm:$0xff]
  %v91 = vld [vmem:[#allocation2 + $0x8] sm:$0xff]
  %v92 = vld [vmem:[#allocation2 + $0x10] sm:$0xff]
  %v93 = vld [vmem:[#allocation2 + $0x18] sm:$0xff]
  %v94 = vld [vmem:[#allocation2 + $0x20] sm:$0xff]
  %v95 = vld [vmem:[#allocation2 + $0x28] sm:$0xff]
  %v96 = vld [vmem:[#allocation2 + $0x30] sm:$0xff]
  %v97 = vld [vmem:[#allocation2 + $0x38] sm:$0xff]
  %v98 = vld [vmem:[#allocation2 + $0x40] sm:$0xff]
  %v99 = vld [vmem:[#allocation2 + $0x48] sm:$0xff]
  %v100 = vld [vmem:[#allocation2 + $0x50] sm:$0xff]
  %v101 = vld [vmem:[#allocation2 + $0x58] sm:$0xff]
  %v102 = vld [vmem:[#allocation2 + $0x60] sm:$0xff]
  %v103 = vld [vmem:[#allocation2 + $0x68] sm:$0xff]
  %v104 = vld [vmem:[#allocation2 + $0x70] sm:$0xff]
  %v105 = vld [vmem:[#allocation2 + $0x78] sm:$0xff]
  %v106 = vld [vmem:[%s1] sm:$0xf]
  %v107 = vld [vmem:[%s1 + $0x4] sm:$0xf]
  %v108 = vld [vmem:[%s1 + $0x8] sm:$0xf]
  %v109 = vld [vmem:[%s1 + $0xc] sm:$0xf]
  %v110 = vld [vmem:[%s1 + $0x10] sm:$0xf]
  %v111 = vld [vmem:[%s1 + $0x14] sm:$0xf]
  %v112 = vld [vmem:[%s1 + $0x18] sm:$0xf]
  %v113 = vld [vmem:[%s1 + $0x1c] sm:$0xf]
  %v114 = vld [vmem:[%s1 + $0x20] sm:$0xf]
  %v115 = vld [vmem:[%s1 + $0x24] sm:$0xf]
  %v116 = vld [vmem:[%s1 + $0x28] sm:$0xf]
  %v117 = vld [vmem:[%s1 + $0x2c] sm:$0xf]
  %v118 = vld [vmem:[%s1 + $0x30] sm:$0xf]
  %v119 = vld [vmem:[%s1 + $0x34] sm:$0xf]
  %v120 = vld [vmem:[%s1 + $0x38] sm:$0xf]
  %v121 = vld [vmem:[%s1 + $0x3c] sm:$0xf]
  %v138 = vunpack.c.l.b16 %v106
  %v139 = vunpack.c.l.b16 %v107
  %v140 = vunpack.c.l.b16 %v108
  %v141 = vunpack.c.l.b16 %v109
  %v142 = vunpack.c.l.b16 %v110
  %v143 = vunpack.c.l.b16 %v111
  %v144 = vunpack.c.l.b16 %v112
  %v145 = vunpack.c.l.b16 %v113
  %v146 = vunpack.c.l.b16 %v114
  %v147 = vunpack.c.l.b16 %v115
  %v148 = vunpack.c.l.b16 %v116
  %v149 = vunpack.c.l.b16 %v117
  %v150 = vunpack.c.l.b16 %v118
  %v151 = vunpack.c.l.b16 %v119
  %v152 = vunpack.c.l.b16 %v120
  %v153 = vunpack.c.l.b16 %v121
  %v154 = vpack.c.b16 %v139, %v138
  %v155 = vpack.c.b16 %v141, %v140
  %v156 = vpack.c.b16 %v143, %v142
  %v157 = vpack.c.b16 %v145, %v144
  %v158 = vpack.c.b16 %v147, %v146
  %v159 = vpack.c.b16 %v149, %v148
  %v160 = vpack.c.b16 %v151, %v150
  %v161 = vpack.c.b16 %v153, %v152
  %170 = vmatpush.bf16.msra.mxu0 %v161
  %171 = vmatpush.bf16.msra.mxu0 %v160
  %172 = vmatpush.bf16.msra.mxu0 %v159
  %173 = vmatpush.bf16.msra.mxu0 %v158
  %174 = vmatpush.bf16.msra.mxu0 %v157
  %175 = vmatpush.bf16.msra.mxu0 %v156
  %176 = vmatpush.bf16.msra.mxu0 %v155
  %177 = vmatpush.bf16.msra.mxu0 %v154
  %178 = vmatmul.bf16.gmra.mxu0 %v82
  %v179 = vpop.f32.mrf.mxu0
  %v180 = vadd.f32 0.0, %v179
  %v181 = vpop.f32.mrf.mxu0
  %v182 = vadd.f32 0.0, %v181
  %183 = vmatmul.bf16.gmra.mxu0 %v83
  %v184 = vpop.f32.mrf.mxu0
  %v185 = vadd.f32 0.0, %v184
  %v186 = vpop.f32.mrf.mxu0
  %v187 = vadd.f32 0.0, %v186
  %188 = vmatmul.bf16.gmra.mxu0 %v84
  %v189 = vpop.f32.mrf.mxu0
  %v190 = vadd.f32 0.0, %v189
  %v191 = vpop.f32.mrf.mxu0
  %v192 = vadd.f32 0.0, %v191
  %193 = vmatmul.bf16.gmra.mxu0 %v85
  %v194 = vpop.f32.mrf.mxu0
  %v195 = vadd.f32 0.0, %v194
  %v196 = vpop.f32.mrf.mxu0
  %v197 = vadd.f32 0.0, %v196
  %198 = vmatmul.bf16.gmra.mxu0 %v86
  %v199 = vpop.f32.mrf.mxu0
  %v200 = vadd.f32 0.0, %v199
  %v201 = vpop.f32.mrf.mxu0
  %v202 = vadd.f32 0.0, %v201
  %203 = vmatmul.bf16.gmra.mxu0 %v87
  %v204 = vpop.f32.mrf.mxu0
  %v205 = vadd.f32 0.0, %v204
  %v206 = vpop.f32.mrf.mxu0
  %v207 = vadd.f32 0.0, %v206
  %208 = vmatmul.bf16.gmra.mxu0 %v88
  %v209 = vpop.f32.mrf.mxu0
  %v210 = vadd.f32 0.0, %v209
  %v211 = vpop.f32.mrf.mxu0
  %v212 = vadd.f32 0.0, %v211
  %213 = vmatmul.bf16.gmra.mxu0 %v89
  %v214 = vpop.f32.mrf.mxu0
  %v215 = vadd.f32 0.0, %v214
  %v216 = vpop.f32.mrf.mxu0
  %v217 = vadd.f32 0.0, %v216
  %218 = vdwg.mxu0
  %v219 = vadd.f32 %v90, %v180
  %v220 = vadd.f32 %v91, %v182
  %v221 = vadd.f32 %v92, %v185
  %v222 = vadd.f32 %v93, %v187
  %v223 = vadd.f32 %v94, %v190
  %v224 = vadd.f32 %v95, %v192
  %v225 = vadd.f32 %v96, %v195
  %v226 = vadd.f32 %v97, %v197
  %v227 = vadd.f32 %v98, %v200
  %v228 = vadd.f32 %v99, %v202
  %v229 = vadd.f32 %v100, %v205
  %v230 = vadd.f32 %v101, %v207
  %v231 = vadd.f32 %v102, %v210
  %v232 = vadd.f32 %v103, %v212
  %v233 = vadd.f32 %v104, %v215
  %v234 = vadd.f32 %v105, %v217
  %235 = vst [vmem:[#allocation2] sm:$0xff] %v219
  %236 = vst [vmem:[#allocation2 + $0x8] sm:$0xff] %v220
  %237 = vst [vmem:[#allocation2 + $0x10] sm:$0xff] %v221
  %238 = vst [vmem:[#allocation2 + $0x18] sm:$0xff] %v222
  %239 = vst [vmem:[#allocation2 + $0x20] sm:$0xff] %v223
  %240 = vst [vmem:[#allocation2 + $0x28] sm:$0xff] %v224
  %241 = vst [vmem:[#allocation2 + $0x30] sm:$0xff] %v225
  %242 = vst [vmem:[#allocation2 + $0x38] sm:$0xff] %v226
  %243 = vst [vmem:[#allocation2 + $0x40] sm:$0xff] %v227
  %244 = vst [vmem:[#allocation2 + $0x48] sm:$0xff] %v228
  %245 = vst [vmem:[#allocation2 + $0x50] sm:$0xff] %v229
  %246 = vst [vmem:[#allocation2 + $0x58] sm:$0xff] %v230
  %247 = vst [vmem:[#allocation2 + $0x60] sm:$0xff] %v231
  %248 = vst [vmem:[#allocation2 + $0x68] sm:$0xff] %v232
  %249 = vst [vmem:[#allocation2 + $0x70] sm:$0xff] %v233
  %250 = vst [vmem:[#allocation2 + $0x78] sm:$0xff] %v234
  // Predicated region
  $region18: #{forward.168} parent=0 // pred_check
    %p251 = pneg %p14
  $region19: #{forward.168} parent=0 // pred_check_branch
    %253 = sbr.rel (%p251) target = $region21
  $region20: #{forward.168} parent=0 // pred_region
    %v254 = vld [vmem:[#allocation2] sm:$0xff]
    %v255 = vld [vmem:[#allocation2 + $0x8] sm:$0xff]
    %v256 = vld [vmem:[#allocation2 + $0x10] sm:$0xff]
    %v257 = vld [vmem:[#allocation2 + $0x18] sm:$0xff]
    %v258 = vld [vmem:[#allocation2 + $0x20] sm:$0xff]
    %v259 = vld [vmem:[#allocation2 + $0x28] sm:$0xff]
    %v260 = vld [vmem:[#allocation2 + $0x30] sm:$0xff]
    %v261 = vld [vmem:[#allocation2 + $0x38] sm:$0xff]
    %v262 = vld [vmem:[#allocation2 + $0x40] sm:$0xff]
    %v263 = vld [vmem:[#allocation2 + $0x48] sm:$0xff]
    %v264 = vld [vmem:[#allocation2 + $0x50] sm:$0xff]
    %v265 = vld [vmem:[#allocation2 + $0x58] sm:$0xff]
    %v266 = vld [vmem:[#allocation2 + $0x60] sm:$0xff]
    %v267 = vld [vmem:[#allocation2 + $0x68] sm:$0xff]
    %v268 = vld [vmem:[#allocation2 + $0x70] sm:$0xff]
    %v269 = vld [vmem:[#allocation2 + $0x78] sm:$0xff]
    %v270 = vld [vmem:[%s2] sm:$0x1]
    %v272 = vperm.slane %v270, 0
    %v274 = vadd.f32 %v254, %v272
    %v275 = vadd.f32 %v255, %v272
    %v276 = vadd.f32 %v256, %v272
    %v277 = vadd.f32 %v257, %v272
    %v278 = vadd.f32 %v258, %v272
    %v279 = vadd.f32 %v259, %v272
    %v280 = vadd.f32 %v260, %v272
    %v281 = vadd.f32 %v261, %v272
    %v282 = vadd.f32 %v262, %v272
    %v283 = vadd.f32 %v263, %v272
    %v284 = vadd.f32 %v264, %v272
    %v285 = vadd.f32 %v265, %v272
    %v286 = vadd.f32 %v266, %v272
    %v287 = vadd.f32 %v267, %v272
    %v288 = vadd.f32 %v268, %v272
    %v289 = vadd.f32 %v269, %v272
    %290 = vst [vmem:[%s3] sm:$0xff] %v274
    %291 = vst [vmem:[%s3 + $0x8] sm:$0xff] %v275
    %292 = vst [vmem:[%s3 + $0x10] sm:$0xff] %v276
    %293 = vst [vmem:[%s3 + $0x18] sm:$0xff] %v277
    %294 = vst [vmem:[%s3 + $0x20] sm:$0xff] %v278
    %295 = vst [vmem:[%s3 + $0x28] sm:$0xff] %v279
    %296 = vst [vmem:[%s3 + $0x30] sm:$0xff] %v280
    %297 = vst [vmem:[%s3 + $0x38] sm:$0xff] %v281
    %298 = vst [vmem:[%s3 + $0x40] sm:$0xff] %v282
    %299 = vst [vmem:[%s3 + $0x48] sm:$0xff] %v283
    %300 = vst [vmem:[%s3 + $0x50] sm:$0xff] %v284
    %301 = vst [vmem:[%s3 + $0x58] sm:$0xff] %v285
    %302 = vst [vmem:[%s3 + $0x60] sm:$0xff] %v286
    %303 = vst [vmem:[%s3 + $0x68] sm:$0xff] %v287
    %304 = vst [vmem:[%s3 + $0x70] sm:$0xff] %v288
    %305 = vst [vmem:[%s3 + $0x78] sm:$0xff] %v289
  $region21: #{forward.168} parent=0 // pred_fallthru
    _
  // Predicated region
  $region22: #{forward.168} parent=0 // pred_check
    _
  $region23: #{forward.168} parent=0 // pred_check_branch
    %307 = sbr.rel (0) target = $region25
  $region24: #{forward.168} parent=0 // pred_region
    _
  $region25: #{forward.168} parent=0 // pred_fallthru
    _
  // Predicated region
  $region26: #{forward.168} parent=0 // pred_check
    _
  $region27: #{forward.168} parent=0 // pred_check_branch
    %309 = sbr.rel (0) target = $region29
  $region28: #{forward.168} parent=0 // pred_region
    _
  $region29: #{forward.168} parent=0 // pred_fallthru
    _

// kernel: forward.169
$region0: #{forward.169}
  #allocation0 [shape = 'u32[]', space=smem, size = 0x4, offset = 0x4, fixed_abs, tag = 'smem constant byte address 0x4 - core index']
  #allocation1 [shape = 'u32[72,128]{1,0:T(1,128)}', space=vmem, size = 0x9000, scoped, tag = 'internal scratch']
  #allocation2 [shape = 'f32[32,128]{1,0:T(8,128)}', space=vmem, size = 0x4000, scoped, tag = 'scratch operand']
  %s0 = inlined_call_operand.vmem [shape: bf16[32,128], index: 0, kind: input, shape index: {}]
  %s1 = inlined_call_operand.vmem [shape: bf16[128,128], index: 1, kind: input, shape index: {}]
  %s2 = inlined_call_operand.vmem [shape: f32[1,128], index: 2, kind: input, shape index: {}]
  %s3 = inlined_call_operand.vmem [shape: f32[32,128], index: 3, kind: output, shape index: {}]
  %s4 = sld [smem:[#allocation0]]
  $region30: #{forward.169} parent=0
    _
  %s6 = ssub.s32 1, %s4
  %s7 = scalar_select 0, %s6, %s4
  // Predicated region
  $region2: #{forward.169} parent=0 // pred_check
    _
  $region3: #{forward.169} parent=0 // pred_check_branch
    %9 = sbr.rel (0) target = $region5
  $region4: #{forward.169} parent=0 // pred_region
    _
  $region5: #{forward.169} parent=0 // pred_fallthru
    _
  // Predicated region
  $region6: #{forward.169} parent=0 // pred_check
    _
  $region7: #{forward.169} parent=0 // pred_check_branch
    %11 = sbr.rel (0) target = $region9
  $region8: #{forward.169} parent=0 // pred_region
    _
  $region9: #{forward.169} parent=0 // pred_fallthru
    _
  // Predicated region
  $region10: #{forward.169} parent=0 // pred_check
    _
  $region11: #{forward.169} parent=0 // pred_check_branch
    %13 = sbr.rel (0) target = $region13
  $region12: #{forward.169} parent=0 // pred_region
    _
  $region13: #{forward.169} parent=0 // pred_fallthru
    _
  %p14 = scmp.eq.s32.totalorder 0, 0
  // Predicated region
  $region14: #{forward.169} parent=0 // pred_check
    %p15 = pneg %p14
  $region15: #{forward.169} parent=0 // pred_check_branch
    %17 = sbr.rel (%p15) target = $region17
  $region16: #{forward.169} parent=0 // pred_region
    %18 = vst [vmem:[#allocation2] sm:$0xff] 0.0
    %19 = vst [vmem:[#allocation2 + $0x8] sm:$0xff] 0.0
    %20 = vst [vmem:[#allocation2 + $0x10] sm:$0xff] 0.0
    %21 = vst [vmem:[#allocation2 + $0x18] sm:$0xff] 0.0
  $region17: #{forward.169} parent=0 // pred_fallthru
    _
  %v22 = vld [vmem:[%s0] sm:$0xf]
  %v23 = vld [vmem:[%s0 + $0x4] sm:$0xf]
  %v24 = vld [vmem:[%s0 + $0x8] sm:$0xf]
  %v25 = vld [vmem:[%s0 + $0xc] sm:$0xf]
  %v26 = vunpack.c.l.bf16 %v22
  %v27 = vunpack.c.l.bf16 %v23
  %v28 = vunpack.c.l.bf16 %v24
  %v29 = vunpack.c.l.bf16 %v25
  %v30 = vmax.f32 %v26, 0.0
  %v31 = vmax.f32 %v27, 0.0
  %v32 = vmax.f32 %v28, 0.0
  %v33 = vmax.f32 %v29, 0.0
  %v34 = vpack.c.bf16 %v31, %v30
  %v35 = vpack.c.bf16 %v33, %v32
  %v36 = vld [vmem:[#allocation2] sm:$0xff]
  %v37 = vld [vmem:[#allocation2 + $0x8] sm:$0xff]
  %v38 = vld [vmem:[#allocation2 + $0x10] sm:$0xff]
  %v39 = vld [vmem:[#allocation2 + $0x18] sm:$0xff]
  %v40 = vld [vmem:[%s1] sm:$0xf]
  %v41 = vld [vmem:[%s1 + $0x4] sm:$0xf]
  %v42 = vld [vmem:[%s1 + $0x8] sm:$0xf]
  %v43 = vld [vmem:[%s1 + $0xc] sm:$0xf]
  %v44 = vld [vmem:[%s1 + $0x10] sm:$0xf]
  %v45 = vld [vmem:[%s1 + $0x14] sm:$0xf]
  %v46 = vld [vmem:[%s1 + $0x18] sm:$0xf]
  %v47 = vld [vmem:[%s1 + $0x1c] sm:$0xf]
  %v48 = vld [vmem:[%s1 + $0x20] sm:$0xf]
  %v49 = vld [vmem:[%s1 + $0x24] sm:$0xf]
  %v50 = vld [vmem:[%s1 + $0x28] sm:$0xf]
  %v51 = vld [vmem:[%s1 + $0x2c] sm:$0xf]
  %v52 = vld [vmem:[%s1 + $0x30] sm:$0xf]
  %v53 = vld [vmem:[%s1 + $0x34] sm:$0xf]
  %v54 = vld [vmem:[%s1 + $0x38] sm:$0xf]
  %v55 = vld [vmem:[%s1 + $0x3c] sm:$0xf]
  %v72 = vunpack.c.l.b16 %v40
  %v73 = vunpack.c.l.b16 %v41
  %v74 = vunpack.c.l.b16 %v42
  %v75 = vunpack.c.l.b16 %v43
  %v76 = vunpack.c.l.b16 %v44
  %v77 = vunpack.c.l.b16 %v45
  %v78 = vunpack.c.l.b16 %v46
  %v79 = vunpack.c.l.b16 %v47
  %v80 = vunpack.c.l.b16 %v48
  %v81 = vunpack.c.l.b16 %v49
  %v82 = vunpack.c.l.b16 %v50
  %v83 = vunpack.c.l.b16 %v51
  %v84 = vunpack.c.l.b16 %v52
  %v85 = vunpack.c.l.b16 %v53
  %v86 = vunpack.c.l.b16 %v54
  %v87 = vunpack.c.l.b16 %v55
  %v88 = vpack.c.b16 %v73, %v72
  %v89 = vpack.c.b16 %v75, %v74
  %v90 = vpack.c.b16 %v77, %v76
  %v91 = vpack.c.b16 %v79, %v78
  %v92 = vpack.c.b16 %v81, %v80
  %v93 = vpack.c.b16 %v83, %v82
  %v94 = vpack.c.b16 %v85, %v84
  %v95 = vpack.c.b16 %v87, %v86
  %104 = vmatpush.bf16.msra.mxu0 %v95
  %105 = vmatpush.bf16.msra.mxu0 %v94
  %106 = vmatpush.bf16.msra.mxu0 %v93
  %107 = vmatpush.bf16.msra.mxu0 %v92
  %108 = vmatpush.bf16.msra.mxu0 %v91
  %109 = vmatpush.bf16.msra.mxu0 %v90
  %110 = vmatpush.bf16.msra.mxu0 %v89
  %111 = vmatpush.bf16.msra.mxu0 %v88
  %112 = vmatmul.bf16.gmra.mxu0 %v34
  %v113 = vpop.f32.mrf.mxu0
  %v114 = vadd.f32 0.0, %v113
  %v115 = vpop.f32.mrf.mxu0
  %v116 = vadd.f32 0.0, %v115
  %117 = vmatmul.bf16.gmra.mxu0 %v35
  %v118 = vpop.f32.mrf.mxu0
  %v119 = vadd.f32 0.0, %v118
  %v120 = vpop.f32.mrf.mxu0
  %v121 = vadd.f32 0.0, %v120
  %122 = vdwg.mxu0
  %v123 = vadd.f32 %v36, %v114
  %v124 = vadd.f32 %v37, %v116
  %v125 = vadd.f32 %v38, %v119
  %v126 = vadd.f32 %v39, %v121
  %127 = vst [vmem:[#allocation2] sm:$0xff] %v123
  %128 = vst [vmem:[#allocation2 + $0x8] sm:$0xff] %v124
  %129 = vst [vmem:[#allocation2 + $0x10] sm:$0xff] %v125
  %130 = vst [vmem:[#allocation2 + $0x18] sm:$0xff] %v126
  // Predicated region
  $region18: #{forward.169} parent=0 // pred_check
    %p131 = pneg %p14
  $region19: #{forward.169} parent=0 // pred_check_branch
    %133 = sbr.rel (%p131) target = $region21
  $region20: #{forward.169} parent=0 // pred_region
    %v134 = vld [vmem:[#allocation2] sm:$0xff]
    %v135 = vld [vmem:[#allocation2 + $0x8] sm:$0xff]
    %v136 = vld [vmem:[#allocation2 + $0x10] sm:$0xff]
    %v137 = vld [vmem:[#allocation2 + $0x18] sm:$0xff]
    %v138 = vld [vmem:[%s2] sm:$0x1]
    %v140 = vperm.slane %v138, 0
    %v142 = vadd.f32 %v134, %v140
    %v143 = vadd.f32 %v135, %v140
    %v144 = vadd.f32 %v136, %v140
    %v145 = vadd.f32 %v137, %v140
    %146 = vst [vmem:[%s3] sm:$0xff] %v142
    %147 = vst [vmem:[%s3 + $0x8] sm:$0xff] %v143
    %148 = vst [vmem:[%s3 + $0x10] sm:$0xff] %v144
    %149 = vst [vmem:[%s3 + $0x18] sm:$0xff] %v145
  $region21: #{forward.169} parent=0 // pred_fallthru
    _
  // Predicated region
  $region22: #{forward.169} parent=0 // pred_check
    _
  $region23: #{forward.169} parent=0 // pred_check_branch
    %151 = sbr.rel (0) target = $region25
  $region24: #{forward.169} parent=0 // pred_region
    _
  $region25: #{forward.169} parent=0 // pred_fallthru
    _
  // Predicated region
  $region26: #{forward.169} parent=0 // pred_check
    _
  $region27: #{forward.169} parent=0 // pred_check_branch
    %153 = sbr.rel (0) target = $region29
  $region28: #{forward.169} parent=0 // pred_region
    _
  $region29: #{forward.169} parent=0 // pred_fallthru
    _

// kernel: forward.252
$region0: #{forward.252}
  #allocation0 [shape = 'u32[]', space=smem, size = 0x4, offset = 0x4, fixed_abs, tag = 'smem constant byte address 0x4 - core index']
  #allocation1 [shape = 'u32[72,128]{1,0:T(1,128)}', space=vmem, size = 0x9000, scoped, tag = 'internal scratch']
  #allocation2 [shape = 'f32[16,128]{1,0:T(8,128)}', space=vmem, size = 0x2000, scoped, tag = 'scratch operand']
  %s0 = inlined_call_operand.vmem [shape: bf16[16,128], index: 0, kind: input, shape index: {}]
  %s1 = inlined_call_operand.vmem [shape: bf16[128,128], index: 1, kind: input, shape index: {}]
  %s2 = inlined_call_operand.vmem [shape: f32[1,128], index: 2, kind: input, shape index: {}]
  %s3 = inlined_call_operand.vmem [shape: f32[16,128], index: 3, kind: output, shape index: {}]
  %s4 = sld [smem:[#allocation0]]
  $region30: #{forward.252} parent=0
    _
  %s6 = ssub.s32 1, %s4
  %s7 = scalar_select 0, %s6, %s4
  // Predicated region
  $region2: #{forward.252} parent=0 // pred_check
    _
  $region3: #{forward.252} parent=0 // pred_check_branch
    %9 = sbr.rel (0) target = $region5
  $region4: #{forward.252} parent=0 // pred_region
    _
  $region5: #{forward.252} parent=0 // pred_fallthru
    _
  // Predicated region
  $region6: #{forward.252} parent=0 // pred_check
    _
  $region7: #{forward.252} parent=0 // pred_check_branch
    %11 = sbr.rel (0) target = $region9
  $region8: #{forward.252} parent=0 // pred_region
    _
  $region9: #{forward.252} parent=0 // pred_fallthru
    _
  // Predicated region
  $region10: #{forward.252} parent=0 // pred_check
    _
  $region11: #{forward.252} parent=0 // pred_check_branch
    %13 = sbr.rel (0) target = $region13
  $region12: #{forward.252} parent=0 // pred_region
    _
  $region13: #{forward.252} parent=0 // pred_fallthru
    _
  %p14 = scmp.eq.s32.totalorder 0, 0
  // Predicated region
  $region14: #{forward.252} parent=0 // pred_check
    %p15 = pneg %p14
  $region15: #{forward.252} parent=0 // pred_check_branch
    %17 = sbr.rel (%p15) target = $region17
  $region16: #{forward.252} parent=0 // pred_region
    %18 = vst [vmem:[#allocation2] sm:$0xff] 0.0
    %19 = vst [vmem:[#allocation2 + $0x8] sm:$0xff] 0.0
  $region17: #{forward.252} parent=0 // pred_fallthru
    _
  %v20 = vld [vmem:[%s0] sm:$0xf]
  %v21 = vld [vmem:[%s0 + $0x4] sm:$0xf]
  %v22 = vunpack.c.l.bf16 %v20
  %v23 = vunpack.c.l.bf16 %v21
  %v24 = vmax.f32 %v22, 0.0
  %v25 = vmax.f32 %v23, 0.0
  %v26 = vpack.c.bf16 %v25, %v24
  %v27 = vld [vmem:[#allocation2] sm:$0xff]
  %v28 = vld [vmem:[#allocation2 + $0x8] sm:$0xff]
  %v29 = vld [vmem:[%s1] sm:$0xf]
  %v30 = vld [vmem:[%s1 + $0x4] sm:$0xf]
  %v31 = vld [vmem:[%s1 + $0x8] sm:$0xf]
  %v32 = vld [vmem:[%s1 + $0xc] sm:$0xf]
  %v33 = vld [vmem:[%s1 + $0x10] sm:$0xf]
  %v34 = vld [vmem:[%s1 + $0x14] sm:$0xf]
  %v35 = vld [vmem:[%s1 + $0x18] sm:$0xf]
  %v36 = vld [vmem:[%s1 + $0x1c] sm:$0xf]
  %v37 = vld [vmem:[%s1 + $0x20] sm:$0xf]
  %v38 = vld [vmem:[%s1 + $0x24] sm:$0xf]
  %v39 = vld [vmem:[%s1 + $0x28] sm:$0xf]
  %v40 = vld [vmem:[%s1 + $0x2c] sm:$0xf]
  %v41 = vld [vmem:[%s1 + $0x30] sm:$0xf]
  %v42 = vld [vmem:[%s1 + $0x34] sm:$0xf]
  %v43 = vld [vmem:[%s1 + $0x38] sm:$0xf]
  %v44 = vld [vmem:[%s1 + $0x3c] sm:$0xf]
  %v61 = vunpack.c.l.b16 %v29
  %v62 = vunpack.c.l.b16 %v30
  %v63 = vunpack.c.l.b16 %v31
  %v64 = vunpack.c.l.b16 %v32
  %v65 = vunpack.c.l.b16 %v33
  %v66 = vunpack.c.l.b16 %v34
  %v67 = vunpack.c.l.b16 %v35
  %v68 = vunpack.c.l.b16 %v36
  %v69 = vunpack.c.l.b16 %v37
  %v70 = vunpack.c.l.b16 %v38
  %v71 = vunpack.c.l.b16 %v39
  %v72 = vunpack.c.l.b16 %v40
  %v73 = vunpack.c.l.b16 %v41
  %v74 = vunpack.c.l.b16 %v42
  %v75 = vunpack.c.l.b16 %v43
  %v76 = vunpack.c.l.b16 %v44
  %v77 = vpack.c.b16 %v62, %v61
  %v78 = vpack.c.b16 %v64, %v63
  %v79 = vpack.c.b16 %v66, %v65
  %v80 = vpack.c.b16 %v68, %v67
  %v81 = vpack.c.b16 %v70, %v69
  %v82 = vpack.c.b16 %v72, %v71
  %v83 = vpack.c.b16 %v74, %v73
  %v84 = vpack.c.b16 %v76, %v75
  %93 = vmatpush.bf16.msra.mxu0 %v84
  %94 = vmatpush.bf16.msra.mxu0 %v83
  %95 = vmatpush.bf16.msra.mxu0 %v82
  %96 = vmatpush.bf16.msra.mxu0 %v81
  %97 = vmatpush.bf16.msra.mxu0 %v80
  %98 = vmatpush.bf16.msra.mxu0 %v79
  %99 = vmatpush.bf16.msra.mxu0 %v78
  %100 = vmatpush.bf16.msra.mxu0 %v77
  %101 = vmatmul.bf16.gmra.mxu0 %v26
  %v102 = vpop.f32.mrf.mxu0
  %v103 = vadd.f32 0.0, %v102
  %v104 = vpop.f32.mrf.mxu0
  %v105 = vadd.f32 0.0, %v104
  %106 = vdwg.mxu0
  %v107 = vadd.f32 %v27, %v103
  %v108 = vadd.f32 %v28, %v105
  %109 = vst [vmem:[#allocation2] sm:$0xff] %v107
  %110 = vst [vmem:[#allocation2 + $0x8] sm:$0xff] %v108
  // Predicated region
  $region18: #{forward.252} parent=0 // pred_check
    %p111 = pneg %p14
  $region19: #{forward.252} parent=0 // pred_check_branch
    %113 = sbr.rel (%p111) target = $region21
  $region20: #{forward.252} parent=0 // pred_region
    %v114 = vld [vmem:[#allocation2] sm:$0xff]
    %v115 = vld [vmem:[#allocation2 + $0x8] sm:$0xff]
    %v116 = vld [vmem:[%s2] sm:$0x1]
    %v118 = vperm.slane %v116, 0
    %v120 = vadd.f32 %v114, %v118
    %v121 = vadd.f32 %v115, %v118
    %122 = vst [vmem:[%s3] sm:$0xff] %v120
    %123 = vst [vmem:[%s3 + $0x8] sm:$0xff] %v121
  $region21: #{forward.252} parent=0 // pred_fallthru
    _
  // Predicated region
  $region22: #{forward.252} parent=0 // pred_check
    _
  $region23: #{forward.252} parent=0 // pred_check_branch
    %125 = sbr.rel (0) target = $region25
  $region24: #{forward.252} parent=0 // pred_region
    _
  $region25: #{forward.252} parent=0 // pred_fallthru
    _
  // Predicated region
  $region26: #{forward.252} parent=0 // pred_check
    _
  $region27: #{forward.252} parent=0 // pred_check_branch
    %127 = sbr.rel (0) target = $region29
  $region28: #{forward.252} parent=0 // pred_region
    _
  $region29: #{forward.252} parent=0 // pred_fallthru
    _

// kernel: forward.258
$region0: #{forward.258}
  #allocation0 [shape = 'u32[]', space=smem, size = 0x4, offset = 0x4, fixed_abs, tag = 'smem constant byte address 0x4 - core index']
  #allocation1 [shape = 'u32[72,128]{1,0:T(1,128)}', space=vmem, size = 0x9000, scoped, tag = 'internal scratch']
  #allocation2 [shape = 'f32[16,128]{1,0:T(8,128)}', space=vmem, size = 0x2000, scoped, tag = 'scratch operand']
  %s0 = inlined_call_operand.vmem [shape: bf16[9,16,128], index: 0, kind: input, shape index: {}]
  %s1 = inlined_call_operand.vmem [shape: f32[9,1,128], index: 1, kind: input, shape index: {}]
  %s2 = inlined_call_operand.vmem [shape: f32[16,128], index: 2, kind: output, shape index: {}]
  %s3 = sld [smem:[#allocation0]]
  $region49: #{forward.258} parent=0
    _
  %s5 = ssub.s32 1, %s3
  %s6 = scalar_select 0, %s5, %s3
  loop: start=0, step=1, limit=11
  $region2: #{forward.258} parent=0 // loop_pre_header
    _
  $region3: #{forward.258} parent=0 // loop_header
    %s8 = sphi 0, %s12
    %p9 = scmp.ge.s32.totalorder %s8, 11
    %s15 = sphi 0, %s27
    %s16 = sphi 0, %s23
    %s17 = sphi 0, %s15
    %s18 = sphi 0, %s16
    %s19 = sphi 0, %s17
    %s20 = sphi 0, %s18
    %s32 = sphi 0, %s34
    %s35 = sphi 0, %s32
    %s36 = sphi 0, %s35
    %s52 = sphi 0, %s36
    %s58 = sphi 0, %s60
    %s61 = sphi 0, %s58
    %s62 = sphi 0, %s61
    %s78 = sphi 0, %s62
    %s84 = sphi 0, %s86
    %s87 = sphi 0, %s84
    %s88 = sphi 0, %s87
    %s104 = sphi 0, %s88
  $region4: #{forward.258} parent=0 // loop_header_branch
    %11 = sbr.rel (%p9) target = $region8
  $region5: #{forward.258} parent=0 // loop_body
    %s13 = ssub.s32 %s8, 1
    %s14 = ssub.s32 %s8, 2
    %s21 = sadd.s32 1, %s16
    %p22 = scmp.ge.s32.totalorder %s21, 9
    %s23 = scalar_select %p22, 0, %s21
    %s24 = sadd.s32 1, %s15
    %s25 = scalar_select %p22, %s24, %s15
    %p26 = scmp.ge.s32.totalorder %s25, 1
    %s27 = scalar_select %p26, 0, %s25
    %s28 = ssub.s32 %s16, %s23
    %s29 = ssub.s32 %s15, %s27
    %s30 = sor.u32 %s28, %s29
    %p31 = scmp.eq.s32.totalorder %s30, 0
    %s33 = sadd.s32 %s32, 1
    %s34 = scalar_select %p31, %s32, %s33
    %p37 = pneg %p31
    %p38 = scmp.eq.s32.totalorder %s8, 8
    %p39 = por %p37, %p38
    %p40 = scmp.ne.s32.totalorder %s32, %s35
    %p41 = scmp.eq.s32.totalorder %s8, 0
    %p42 = por %p40, %p41
    %p43 = scmp.ne.s32.totalorder %s32, %s35
    %p44 = scmp.eq.s32.totalorder %s13, 8
    %p45 = por %p43, %p44
    %p46 = scmp.ne.s32.totalorder %s35, %s36
    %p47 = scmp.eq.s32.totalorder %s13, 0
    %p48 = por %p46, %p47
    %p49 = scmp.ne.s32.totalorder %s35, %s36
    %p50 = scmp.eq.s32.totalorder %s14, 8
    %p51 = por %p49, %p50
    %p53 = scmp.ne.s32.totalorder %s36, %s52
    %p54 = scmp.eq.s32.totalorder %s14, 0
    %p55 = por %p53, %p54
    %s56 = ssub.s32 %s16, %s23
    %p57 = scmp.eq.s32.totalorder %s56, 0
    %s59 = sadd.s32 %s58, 1
    %s60 = scalar_select %p57, %s58, %s59
    %p63 = pneg %p57
    %p64 = scmp.eq.s32.totalorder %s8, 8
    %p65 = por %p63, %p64
    %p66 = scmp.ne.s32.totalorder %s58, %s61
    %p67 = scmp.eq.s32.totalorder %s8, 0
    %p68 = por %p66, %p67
    %p69 = scmp.ne.s32.totalorder %s58, %s61
    %p70 = scmp.eq.s32.totalorder %s13, 8
    %p71 = por %p69, %p70
    %p72 = scmp.ne.s32.totalorder %s61, %s62
    %p73 = scmp.eq.s32.totalorder %s13, 0
    %p74 = por %p72, %p73
    %p75 = scmp.ne.s32.totalorder %s61, %s62
    %p76 = scmp.eq.s32.totalorder %s14, 8
    %p77 = por %p75, %p76
    %p79 = scmp.ne.s32.totalorder %s62, %s78
    %p80 = scmp.eq.s32.totalorder %s14, 0
    %p81 = por %p79, %p80
    %s82 = ssub.s32 %s15, %s27
    %p83 = scmp.eq.s32.totalorder %s82, 0
    %s85 = sadd.s32 %s84, 1
    %s86 = scalar_select %p83, %s84, %s85
    %p89 = pneg %p83
    %p90 = scmp.eq.s32.totalorder %s8, 8
    %p91 = por %p89, %p90
    %p92 = scmp.ne.s32.totalorder %s84, %s87
    %p93 = scmp.eq.s32.totalorder %s8, 0
    %p94 = por %p92, %p93
    %p95 = scmp.ne.s32.totalorder %s84, %s87
    %p96 = scmp.eq.s32.totalorder %s13, 8
    %p97 = por %p95, %p96
    %p98 = scmp.ne.s32.totalorder %s87, %s88
    %p99 = scmp.eq.s32.totalorder %s13, 0
    %p100 = por %p98, %p99
    %p101 = scmp.ne.s32.totalorder %s87, %s88
    %p102 = scmp.eq.s32.totalorder %s14, 8
    %p103 = por %p101, %p102
    %p105 = scmp.ne.s32.totalorder %s88, %s104
    %p106 = scmp.eq.s32.totalorder %s14, 0
    %p107 = por %p105, %p106
    %p108 = scmp.le.s32.totalorder 1, %s8
    %p109 = scmp.lt.s32.totalorder %s8, 10
    %p110 = pnand %p108, %p109
    %p111 = pneg %p110
    // Predicated region
    $region9: #{forward.258} parent=5 // pred_check
      _
    $region10: #{forward.258} parent=5 // pred_check_branch
      %113 = sbr.rel (%p110) target = $region12
    $region11: #{forward.258} parent=5 // pred_region
      %s114 = ssub.s32 %s8, 1
    $region12: #{forward.258} parent=5 // pred_fallthru
      _
    %p115 = scmp.lt.s32.totalorder %s8, 9
    // Predicated region
    $region13: #{forward.258} parent=5 // pred_check
      %p116 = pneg %p115
    $region14: #{forward.258} parent=5 // pred_check_branch
      %118 = sbr.rel (%p116) target = $region16
    $region15: #{forward.258} parent=5 // pred_region
      // Predicated region
      $region17: #{forward.258} parent=15 // pred_check
        %p119 = pneg %p42
      $region18: #{forward.258} parent=15 // pred_check_branch
        %121 = sbr.rel (%p119) target = $region20
      $region19: #{forward.258} parent=15 // pred_region
        %s122 = smul.u32 2, %s15
        %p123 = scmp.lt.s32.totalorder %s16, 8
        %s124 = scalar_select %p123, %s16, 8
        %p125 = scmp.lt.s32.totalorder %s122, 1
        %s126 = scalar_select %p125, %s122, 1
        %s127 = smul.addr %s124, 2
        %s128 = sadd.s32 %s126, %s127
        %s129 = smul.addr %s128, 4
        %s130 = scalar_lea.vmem %s0, %s129
        %s131 = smul.u32 2, %s15
      $region20: #{forward.258} parent=15 // pred_fallthru
        _
      // Predicated region
      $region21: #{forward.258} parent=15 // pred_check
        %p132 = pneg %p68
      $region22: #{forward.258} parent=15 // pred_check_branch
        %134 = sbr.rel (%p132) target = $region24
      $region23: #{forward.258} parent=15 // pred_region
        %p135 = scmp.lt.s32.totalorder %s16, 8
        %s136 = scalar_select %p135, %s16, 8
        %s137 = scalar_lea.vmem %s1, %s136
      $region24: #{forward.258} parent=15 // pred_fallthru
        _
    $region16: #{forward.258} parent=5 // pred_fallthru
      _
    %p138 = scmp.le.s32.totalorder 1, %s8
    %p139 = scmp.lt.s32.totalorder %s8, 10
    %p140 = pnand %p138, %p139
    %p141 = pneg %p140
    // Predicated region
    $region25: #{forward.258} parent=5 // pred_check
      _
    $region26: #{forward.258} parent=5 // pred_check_branch
      %143 = sbr.rel (%p140) target = $region28
    $region27: #{forward.258} parent=5 // pred_region
      %s144 = ssub.s32 %s8, 1
      %s145 = smul.u32 2, %s17
      %p146 = scmp.lt.s32.totalorder %s18, 8
      %s147 = scalar_select %p146, %s18, 8
      %p148 = scmp.lt.s32.totalorder %s145, 1
      %s149 = scalar_select %p148, %s145, 1
      %s150 = smul.addr %s147, 2
      %s151 = sadd.s32 %s149, %s150
      %s152 = smul.addr %s151, 4
      %s153 = scalar_lea.vmem %s0, %s152
      %p154 = pneg %p48
      %p155 = pneg %p45
      %p156 = scmp.lt.s32.totalorder %s18, 8
      %s157 = scalar_select %p156, %s18, 8
      %s158 = scalar_lea.vmem %s1, %s157
      %p159 = pneg %p74
      %p160 = pneg %p71
      %p161 = pneg %p100
      %p162 = pneg %p97
      %s163 = smul.u32 2, %s17
      %p164 = scmp.lt.s32.totalorder %s163, 1
      %s165 = scalar_select %p164, %s163, 1
      %s166 = smul.addr %s165, 8
      %s167 = scalar_lea.vmem %s2, %s166
      %s168 = smul.u32 2, %s17
      %p169 = scmp.lt.s32.totalorder %s18, 8
      %s170 = scalar_select %p169, %s18, 8
      %p171 = scmp.lt.s32.totalorder %s168, 1
      %s172 = scalar_select %p171, %s168, 1
      %s173 = smul.addr %s170, 2
      %s174 = sadd.s32 %s172, %s173
      %s175 = smul.addr %s174, 4
      %s176 = scalar_lea.vmem %s0, %s175
      %s177 = smul.u32 2, %s17
      %p178 = scmp.lt.s32.totalorder %s18, 8
      %s179 = scalar_select %p178, %s18, 8
      %s180 = scalar_lea.vmem %s1, %s179
      %s181 = smul.u32 2, %s17
      %p182 = scmp.lt.s32.totalorder %s181, 1
      %s183 = scalar_select %p182, %s181, 1
      %s184 = smul.addr %s183, 8
      %s185 = scalar_lea.vmem %s2, %s184
      %s186 = smul.u32 2, %s17
      %p187 = scmp.eq.s32.totalorder %s18, 0
      // Predicated region
      $region29: #{forward.258} parent=27 // pred_check
        %p188 = pneg %p187
      $region30: #{forward.258} parent=27 // pred_check_branch
        %190 = sbr.rel (%p188) target = $region32
      $region31: #{forward.258} parent=27 // pred_region
        %191 = vst [vmem:[#allocation2] sm:$0xff] 0.0
        %192 = vst [vmem:[#allocation2 + $0x8] sm:$0xff] 0.0
      $region32: #{forward.258} parent=27 // pred_fallthru
        _
      %v193 = vld [vmem:[%s176] sm:$0xf]
      %v194 = vld [vmem:[%s176 + $0x4] sm:$0xf]
      %v195 = vunpack.c.l.bf16 %v193
      %v196 = vunpack.c.l.bf16 %v194
      %v197 = vmax.f32 %v195, 0.0
      %v198 = vmax.f32 %v196, 0.0
      %v199 = vld [vmem:[#allocation2] sm:$0xff]
      %v200 = vld [vmem:[#allocation2 + $0x8] sm:$0xff]
      %v201 = vld [vmem:[%s180] sm:$0x1]
      %v203 = vperm.slane %v201, 0
      %v205 = vmul.f32 %v197, %v203
      %v206 = vmul.f32 %v198, %v203
      %v207 = vadd.f32 %v199, %v205
      %v208 = vadd.f32 %v200, %v206
      %209 = vst [vmem:[#allocation2] sm:$0xff] %v207
      %210 = vst [vmem:[#allocation2 + $0x8] sm:$0xff] %v208
      %p211 = scmp.eq.s32.totalorder %s18, 8
      // Predicated region
      $region33: #{forward.258} parent=27 // pred_check
        %p212 = pneg %p211
      $region34: #{forward.258} parent=27 // pred_check_branch
        %214 = sbr.rel (%p212) target = $region36
      $region35: #{forward.258} parent=27 // pred_region
        %v215 = vld [vmem:[#allocation2] sm:$0xff]
        %v216 = vld [vmem:[#allocation2 + $0x8] sm:$0xff]
        %217 = vst [vmem:[%s185] sm:$0xff] %v215
        %218 = vst [vmem:[%s185 + $0x8] sm:$0xff] %v216
      $region36: #{forward.258} parent=27 // pred_fallthru
        _
      %s219 = smul.u32 2, %s17
      %p220 = scmp.lt.s32.totalorder %s219, 1
      %s221 = scalar_select %p220, %s219, 1
      %s222 = smul.addr %s221, 8
      %s223 = scalar_lea.vmem %s2, %s222
      // Predicated region
      $region37: #{forward.258} parent=27 // pred_check
        %p224 = pneg %p97
      $region38: #{forward.258} parent=27 // pred_check_branch
        %226 = sbr.rel (%p224) target = $region40
      $region39: #{forward.258} parent=27 // pred_region
        %s227 = smul.u32 2, %s17
      $region40: #{forward.258} parent=27 // pred_fallthru
        _
      // Predicated region
      $region41: #{forward.258} parent=27 // pred_check
        %p228 = pneg %p97
      $region42: #{forward.258} parent=27 // pred_check_branch
        %230 = sbr.rel (%p228) target = $region44
      $region43: #{forward.258} parent=27 // pred_region
        %s231 = smul.u32 2, %s17
        %p232 = scmp.lt.s32.totalorder %s231, 1
        %s233 = scalar_select %p232, %s231, 1
        %s234 = smul.addr %s233, 8
        %s235 = scalar_lea.vmem %s2, %s234
      $region44: #{forward.258} parent=27 // pred_fallthru
        _
    $region28: #{forward.258} parent=5 // pred_fallthru
      _
    %p236 = scmp.le.s32.totalorder 2, %s8
    // Predicated region
    $region45: #{forward.258} parent=5 // pred_check
      %p237 = pneg %p236
    $region46: #{forward.258} parent=5 // pred_check_branch
      %239 = sbr.rel (%p237) target = $region48
    $region47: #{forward.258} parent=5 // pred_region
      %s240 = ssub.s32 %s8, 2
    $region48: #{forward.258} parent=5 // pred_fallthru
      _
  $region6: #{forward.258} parent=0 // loop_footer
    %s12 = sadd.s32 1, %s8
  $region7: #{forward.258} parent=0 // loop_footer_branch
    %7 = sbr.rel target = $region3
  $region8: #{forward.258} parent=0 // loop_exit
    _

// kernel: forward.259
$region0: #{forward.259}
  #allocation0 [shape = 'u32[]', space=smem, size = 0x4, offset = 0x4, fixed_abs, tag = 'smem constant byte address 0x4 - core index']
  #allocation1 [shape = 'u32[72,128]{1,0:T(1,128)}', space=vmem, size = 0x9000, scoped, tag = 'internal scratch']
  #allocation2 [shape = 'f32[16,128]{1,0:T(8,128)}', space=vmem, size = 0x2000, scoped, tag = 'scratch operand']
  %s0 = inlined_call_operand.vmem [shape: bf16[16,128], index: 0, kind: input, shape index: {}]
  %s1 = inlined_call_operand.vmem [shape: bf16[128,128], index: 1, kind: input, shape index: {}]
  %s2 = inlined_call_operand.vmem [shape: f32[1,128], index: 2, kind: input, shape index: {}]
  %s3 = inlined_call_operand.vmem [shape: f32[16,128], index: 3, kind: output, shape index: {}]
  %s4 = sld [smem:[#allocation0]]
  $region30: #{forward.259} parent=0
    _
  %s6 = ssub.s32 1, %s4
  %s7 = scalar_select 0, %s6, %s4
  // Predicated region
  $region2: #{forward.259} parent=0 // pred_check
    _
  $region3: #{forward.259} parent=0 // pred_check_branch
    %9 = sbr.rel (0) target = $region5
  $region4: #{forward.259} parent=0 // pred_region
    _
  $region5: #{forward.259} parent=0 // pred_fallthru
    _
  // Predicated region
  $region6: #{forward.259} parent=0 // pred_check
    _
  $region7: #{forward.259} parent=0 // pred_check_branch
    %11 = sbr.rel (0) target = $region9
  $region8: #{forward.259} parent=0 // pred_region
    _
  $region9: #{forward.259} parent=0 // pred_fallthru
    _
  // Predicated region
  $region10: #{forward.259} parent=0 // pred_check
    _
  $region11: #{forward.259} parent=0 // pred_check_branch
    %13 = sbr.rel (0) target = $region13
  $region12: #{forward.259} parent=0 // pred_region
    _
  $region13: #{forward.259} parent=0 // pred_fallthru
    _
  %p14 = scmp.eq.s32.totalorder 0, 0
  // Predicated region
  $region14: #{forward.259} parent=0 // pred_check
    %p15 = pneg %p14
  $region15: #{forward.259} parent=0 // pred_check_branch
    %17 = sbr.rel (%p15) target = $region17
  $region16: #{forward.259} parent=0 // pred_region
    %18 = vst [vmem:[#allocation2] sm:$0xff] 0.0
    %19 = vst [vmem:[#allocation2 + $0x8] sm:$0xff] 0.0
  $region17: #{forward.259} parent=0 // pred_fallthru
    _
  %v20 = vld [vmem:[%s0] sm:$0xf]
  %v21 = vld [vmem:[%s0 + $0x4] sm:$0xf]
  %v22 = vld [vmem:[#allocation2] sm:$0xff]
  %v23 = vld [vmem:[#allocation2 + $0x8] sm:$0xff]
  %v24 = vld [vmem:[%s1] sm:$0xf]
  %v25 = vld [vmem:[%s1 + $0x4] sm:$0xf]
  %v26 = vld [vmem:[%s1 + $0x8] sm:$0xf]
  %v27 = vld [vmem:[%s1 + $0xc] sm:$0xf]
  %v28 = vld [vmem:[%s1 + $0x10] sm:$0xf]
  %v29 = vld [vmem:[%s1 + $0x14] sm:$0xf]
  %v30 = vld [vmem:[%s1 + $0x18] sm:$0xf]
  %v31 = vld [vmem:[%s1 + $0x1c] sm:$0xf]
  %v32 = vld [vmem:[%s1 + $0x20] sm:$0xf]
  %v33 = vld [vmem:[%s1 + $0x24] sm:$0xf]
  %v34 = vld [vmem:[%s1 + $0x28] sm:$0xf]
  %v35 = vld [vmem:[%s1 + $0x2c] sm:$0xf]
  %v36 = vld [vmem:[%s1 + $0x30] sm:$0xf]
  %v37 = vld [vmem:[%s1 + $0x34] sm:$0xf]
  %v38 = vld [vmem:[%s1 + $0x38] sm:$0xf]
  %v39 = vld [vmem:[%s1 + $0x3c] sm:$0xf]
  %v42 = vunpack.c.l.b16 %v20
  %v43 = vunpack.c.l.b16 %v21
  %v44 = vpack.c.b16 %v43, %v42
  %v62 = vunpack.c.l.b16 %v24
  %v63 = vunpack.c.l.b16 %v25
  %v64 = vunpack.c.l.b16 %v26
  %v65 = vunpack.c.l.b16 %v27
  %v66 = vunpack.c.l.b16 %v28
  %v67 = vunpack.c.l.b16 %v29
  %v68 = vunpack.c.l.b16 %v30
  %v69 = vunpack.c.l.b16 %v31
  %v70 = vunpack.c.l.b16 %v32
  %v71 = vunpack.c.l.b16 %v33
  %v72 = vunpack.c.l.b16 %v34
  %v73 = vunpack.c.l.b16 %v35
  %v74 = vunpack.c.l.b16 %v36
  %v75 = vunpack.c.l.b16 %v37
  %v76 = vunpack.c.l.b16 %v38
  %v77 = vunpack.c.l.b16 %v39
  %v78 = vpack.c.b16 %v63, %v62
  %v79 = vpack.c.b16 %v65, %v64
  %v80 = vpack.c.b16 %v67, %v66
  %v81 = vpack.c.b16 %v69, %v68
  %v82 = vpack.c.b16 %v71, %v70
  %v83 = vpack.c.b16 %v73, %v72
  %v84 = vpack.c.b16 %v75, %v74
  %v85 = vpack.c.b16 %v77, %v76
  %94 = vmatpush.bf16.msra.mxu0 %v85
  %95 = vmatpush.bf16.msra.mxu0 %v84
  %96 = vmatpush.bf16.msra.mxu0 %v83
  %97 = vmatpush.bf16.msra.mxu0 %v82
  %98 = vmatpush.bf16.msra.mxu0 %v81
  %99 = vmatpush.bf16.msra.mxu0 %v80
  %100 = vmatpush.bf16.msra.mxu0 %v79
  %101 = vmatpush.bf16.msra.mxu0 %v78
  %102 = vmatmul.bf16.gmra.mxu0 %v44
  %v103 = vpop.f32.mrf.mxu0
  %v104 = vadd.f32 0.0, %v103
  %v105 = vpop.f32.mrf.mxu0
  %v106 = vadd.f32 0.0, %v105
  %107 = vdwg.mxu0
  %v108 = vadd.f32 %v22, %v104
  %v109 = vadd.f32 %v23, %v106
  %110 = vst [vmem:[#allocation2] sm:$0xff] %v108
  %111 = vst [vmem:[#allocation2 + $0x8] sm:$0xff] %v109
  // Predicated region
  $region18: #{forward.259} parent=0 // pred_check
    %p112 = pneg %p14
  $region19: #{forward.259} parent=0 // pred_check_branch
    %114 = sbr.rel (%p112) target = $region21
  $region20: #{forward.259} parent=0 // pred_region
    %v115 = vld [vmem:[#allocation2] sm:$0xff]
    %v116 = vld [vmem:[#allocation2 + $0x8] sm:$0xff]
    %v117 = vld [vmem:[%s2] sm:$0x1]
    %v119 = vperm.slane %v117, 0
    %v121 = vadd.f32 %v115, %v119
    %v122 = vadd.f32 %v116, %v119
    %123 = vst [vmem:[%s3] sm:$0xff] %v121
    %124 = vst [vmem:[%s3 + $0x8] sm:$0xff] %v122
  $region21: #{forward.259} parent=0 // pred_fallthru
    _
  // Predicated region
  $region22: #{forward.259} parent=0 // pred_check
    _
  $region23: #{forward.259} parent=0 // pred_check_branch
    %126 = sbr.rel (0) target = $region25
  $region24: #{forward.259} parent=0 // pred_region
    _
  $region25: #{forward.259} parent=0 // pred_fallthru
    _
  // Predicated region
  $region26: #{forward.259} parent=0 // pred_check
    _
  $region27: #{forward.259} parent=0 // pred_check_branch
    %128 = sbr.rel (0) target = $region29
  $region28: #{forward.259} parent=0 // pred_region
    _
  $region29: #{forward.259} parent=0 // pred_fallthru
    _

// kernel: forward.254
$region0: #{forward.254}
  #allocation0 [shape = 'u32[]', space=smem, size = 0x4, offset = 0x4, fixed_abs, tag = 'smem constant byte address 0x4 - core index']
  #allocation1 [shape = 'u32[72,128]{1,0:T(1,128)}', space=vmem, size = 0x9000, scoped, tag = 'internal scratch']
  #allocation2 [shape = 'f32[16,128]{1,0:T(8,128)}', space=vmem, size = 0x2000, scoped, tag = 'scratch operand']
  %s0 = inlined_call_operand.vmem [shape: f32[9,16,128], index: 0, kind: input, shape index: {}]
  %s1 = inlined_call_operand.vmem [shape: f32[16,1], index: 1, kind: input, shape index: {}]
  %s2 = inlined_call_operand.vmem [shape: f32[1,128], index: 2, kind: input, shape index: {}]
  %s3 = inlined_call_operand.vmem [shape: f32[1,128], index: 3, kind: input, shape index: {}]
  %s4 = inlined_call_operand.vmem [shape: f32[16,128], index: 4, kind: output, shape index: {}]
  %s5 = sld [smem:[#allocation0]]
  $region57: #{forward.254} parent=0
    _
  %s7 = ssub.s32 1, %s5
  %s8 = scalar_select 0, %s7, %s5
  loop: start=0, step=1, limit=11
  $region2: #{forward.254} parent=0 // loop_pre_header
    _
  $region3: #{forward.254} parent=0 // loop_header
    %s10 = sphi 0, %s14
    %p11 = scmp.ge.s32.totalorder %s10, 11
    %s17 = sphi 0, %s29
    %s18 = sphi 0, %s25
    %s19 = sphi 0, %s17
    %s20 = sphi 0, %s18
    %s21 = sphi 0, %s19
    %s22 = sphi 0, %s20
    %s34 = sphi 0, %s36
    %s37 = sphi 0, %s34
    %s38 = sphi 0, %s37
    %s54 = sphi 0, %s38
    %s60 = sphi 0, %s62
    %s63 = sphi 0, %s60
    %s64 = sphi 0, %s63
    %s80 = sphi 0, %s64
    %s84 = sphi 0, %s84
    %s86 = sphi 0, %s84
    %s87 = sphi 0, %s86
    %s101 = sphi 0, %s87
    %s105 = sphi 0, %s105
    %s107 = sphi 0, %s105
    %s108 = sphi 0, %s107
    %s122 = sphi 0, %s108
    %s128 = sphi 0, %s130
    %s131 = sphi 0, %s128
    %s132 = sphi 0, %s131
    %s148 = sphi 0, %s132
  $region4: #{forward.254} parent=0 // loop_header_branch
    %13 = sbr.rel (%p11) target = $region8
  $region5: #{forward.254} parent=0 // loop_body
    %s15 = ssub.s32 %s10, 1
    %s16 = ssub.s32 %s10, 2
    %s23 = sadd.s32 1, %s18
    %p24 = scmp.ge.s32.totalorder %s23, 9
    %s25 = scalar_select %p24, 0, %s23
    %s26 = sadd.s32 1, %s17
    %s27 = scalar_select %p24, %s26, %s17
    %p28 = scmp.ge.s32.totalorder %s27, 1
    %s29 = scalar_select %p28, 0, %s27
    %s30 = ssub.s32 %s18, %s25
    %s31 = ssub.s32 %s17, %s29
    %s32 = sor.u32 %s30, %s31
    %p33 = scmp.eq.s32.totalorder %s32, 0
    %s35 = sadd.s32 %s34, 1
    %s36 = scalar_select %p33, %s34, %s35
    %p39 = pneg %p33
    %p40 = scmp.eq.s32.totalorder %s10, 8
    %p41 = por %p39, %p40
    %p42 = scmp.ne.s32.totalorder %s34, %s37
    %p43 = scmp.eq.s32.totalorder %s10, 0
    %p44 = por %p42, %p43
    %p45 = scmp.ne.s32.totalorder %s34, %s37
    %p46 = scmp.eq.s32.totalorder %s15, 8
    %p47 = por %p45, %p46
    %p48 = scmp.ne.s32.totalorder %s37, %s38
    %p49 = scmp.eq.s32.totalorder %s15, 0
    %p50 = por %p48, %p49
    %p51 = scmp.ne.s32.totalorder %s37, %s38
    %p52 = scmp.eq.s32.totalorder %s16, 8
    %p53 = por %p51, %p52
    %p55 = scmp.ne.s32.totalorder %s38, %s54
    %p56 = scmp.eq.s32.totalorder %s16, 0
    %p57 = por %p55, %p56
    %s58 = ssub.s32 %s17, %s29
    %p59 = scmp.eq.s32.totalorder %s58, 0
    %s61 = sadd.s32 %s60, 1
    %s62 = scalar_select %p59, %s60, %s61
    %p65 = pneg %p59
    %p66 = scmp.eq.s32.totalorder %s10, 8
    %p67 = por %p65, %p66
    %p68 = scmp.ne.s32.totalorder %s60, %s63
    %p69 = scmp.eq.s32.totalorder %s10, 0
    %p70 = por %p68, %p69
    %p71 = scmp.ne.s32.totalorder %s60, %s63
    %p72 = scmp.eq.s32.totalorder %s15, 8
    %p73 = por %p71, %p72
    %p74 = scmp.ne.s32.totalorder %s63, %s64
    %p75 = scmp.eq.s32.totalorder %s15, 0
    %p76 = por %p74, %p75
    %p77 = scmp.ne.s32.totalorder %s63, %s64
    %p78 = scmp.eq.s32.totalorder %s16, 8
    %p79 = por %p77, %p78
    %p81 = scmp.ne.s32.totalorder %s64, %s80
    %p82 = scmp.eq.s32.totalorder %s16, 0
    %p83 = por %p81, %p82
    %s85 = sadd.s32 %s84, 1
    %p88 = scmp.eq.s32.totalorder %s10, 8
    %p89 = scmp.ne.s32.totalorder %s84, %s86
    %p90 = scmp.eq.s32.totalorder %s10, 0
    %p91 = por %p89, %p90
    %p92 = scmp.ne.s32.totalorder %s84, %s86
    %p93 = scmp.eq.s32.totalorder %s15, 8
    %p94 = por %p92, %p93
    %p95 = scmp.ne.s32.totalorder %s86, %s87
    %p96 = scmp.eq.s32.totalorder %s15, 0
    %p97 = por %p95, %p96
    %p98 = scmp.ne.s32.totalorder %s86, %s87
    %p99 = scmp.eq.s32.totalorder %s16, 8
    %p100 = por %p98, %p99
    %p102 = scmp.ne.s32.totalorder %s87, %s101
    %p103 = scmp.eq.s32.totalorder %s16, 0
    %p104 = por %p102, %p103
    %s106 = sadd.s32 %s105, 1
    %p109 = scmp.eq.s32.totalorder %s10, 8
    %p110 = scmp.ne.s32.totalorder %s105, %s107
    %p111 = scmp.eq.s32.totalorder %s10, 0
    %p112 = por %p110, %p111
    %p113 = scmp.ne.s32.totalorder %s105, %s107
    %p114 = scmp.eq.s32.totalorder %s15, 8
    %p115 = por %p113, %p114
    %p116 = scmp.ne.s32.totalorder %s107, %s108
    %p117 = scmp.eq.s32.totalorder %s15, 0
    %p118 = por %p116, %p117
    %p119 = scmp.ne.s32.totalorder %s107, %s108
    %p120 = scmp.eq.s32.totalorder %s16, 8
    %p121 = por %p119, %p120
    %p123 = scmp.ne.s32.totalorder %s108, %s122
    %p124 = scmp.eq.s32.totalorder %s16, 0
    %p125 = por %p123, %p124
    %s126 = ssub.s32 %s17, %s29
    %p127 = scmp.eq.s32.totalorder %s126, 0
    %s129 = sadd.s32 %s128, 1
    %s130 = scalar_select %p127, %s128, %s129
    %p133 = pneg %p127
    %p134 = scmp.eq.s32.totalorder %s10, 8
    %p135 = por %p133, %p134
    %p136 = scmp.ne.s32.totalorder %s128, %s131
    %p137 = scmp.eq.s32.totalorder %s10, 0
    %p138 = por %p136, %p137
    %p139 = scmp.ne.s32.totalorder %s128, %s131
    %p140 = scmp.eq.s32.totalorder %s15, 8
    %p141 = por %p139, %p140
    %p142 = scmp.ne.s32.totalorder %s131, %s132
    %p143 = scmp.eq.s32.totalorder %s15, 0
    %p144 = por %p142, %p143
    %p145 = scmp.ne.s32.totalorder %s131, %s132
    %p146 = scmp.eq.s32.totalorder %s16, 8
    %p147 = por %p145, %p146
    %p149 = scmp.ne.s32.totalorder %s132, %s148
    %p150 = scmp.eq.s32.totalorder %s16, 0
    %p151 = por %p149, %p150
    %p152 = scmp.le.s32.totalorder 1, %s10
    %p153 = scmp.lt.s32.totalorder %s10, 10
    %p154 = pnand %p152, %p153
    %p155 = pneg %p154
    // Predicated region
    $region9: #{forward.254} parent=5 // pred_check
      _
    $region10: #{forward.254} parent=5 // pred_check_branch
      %157 = sbr.rel (%p154) target = $region12
    $region11: #{forward.254} parent=5 // pred_region
      %s158 = ssub.s32 %s10, 1
      // Predicated region
      $region13: #{forward.254} parent=11 // pred_check
        %p159 = pneg %p76
      $region14: #{forward.254} parent=11 // pred_check_branch
        %161 = sbr.rel (%p159) target = $region16
      $region15: #{forward.254} parent=11 // pred_region
        %s162 = smul.u32 2, %s19
        %p163 = scmp.lt.s32.totalorder %s162, 1
        %s164 = scalar_select %p163, %s162, 1
        %s165 = smul.addr %s164, 8
        %s166 = scalar_lea.vmem %s1, %s165
        %s167 = smul.u32 2, %s19
      $region16: #{forward.254} parent=11 // pred_fallthru
        _
      // Predicated region
      $region17: #{forward.254} parent=11 // pred_check
        %p168 = pneg %p97
      $region18: #{forward.254} parent=11 // pred_check_branch
        %170 = sbr.rel (%p168) target = $region20
      $region19: #{forward.254} parent=11 // pred_region
        _
      $region20: #{forward.254} parent=11 // pred_fallthru
        _
      // Predicated region
      $region21: #{forward.254} parent=11 // pred_check
        %p171 = pneg %p118
      $region22: #{forward.254} parent=11 // pred_check_branch
        %173 = sbr.rel (%p171) target = $region24
      $region23: #{forward.254} parent=11 // pred_region
        _
      $region24: #{forward.254} parent=11 // pred_fallthru
        _
    $region12: #{forward.254} parent=5 // pred_fallthru
      _
    %p174 = scmp.lt.s32.totalorder %s10, 9
    // Predicated region
    $region25: #{forward.254} parent=5 // pred_check
      %p175 = pneg %p174
    $region26: #{forward.254} parent=5 // pred_check_branch
      %177 = sbr.rel (%p175) target = $region28
    $region27: #{forward.254} parent=5 // pred_region
      // Predicated region
      $region29: #{forward.254} parent=27 // pred_check
        %p178 = pneg %p44
      $region30: #{forward.254} parent=27 // pred_check_branch
        %180 = sbr.rel (%p178) target = $region32
      $region31: #{forward.254} parent=27 // pred_region
        %s181 = smul.u32 2, %s17
        %p182 = scmp.lt.s32.totalorder %s18, 8
        %s183 = scalar_select %p182, %s18, 8
        %p184 = scmp.lt.s32.totalorder %s181, 1
        %s185 = scalar_select %p184, %s181, 1
        %s186 = smul.addr %s183, 2
        %s187 = sadd.s32 %s185, %s186
        %s188 = smul.addr %s187, 8
        %s189 = scalar_lea.vmem %s0, %s188
        %s190 = smul.u32 2, %s17
      $region32: #{forward.254} parent=27 // pred_fallthru
        _
    $region28: #{forward.254} parent=5 // pred_fallthru
      _
    %p191 = scmp.le.s32.totalorder 1, %s10
    %p192 = scmp.lt.s32.totalorder %s10, 10
    %p193 = pnand %p191, %p192
    %p194 = pneg %p193
    // Predicated region
    $region33: #{forward.254} parent=5 // pred_check
      _
    $region34: #{forward.254} parent=5 // pred_check_branch
      %196 = sbr.rel (%p193) target = $region36
    $region35: #{forward.254} parent=5 // pred_region
      %s197 = ssub.s32 %s10, 1
      %s198 = smul.u32 2, %s19
      %p199 = scmp.lt.s32.totalorder %s20, 8
      %s200 = scalar_select %p199, %s20, 8
      %p201 = scmp.lt.s32.totalorder %s198, 1
      %s202 = scalar_select %p201, %s198, 1
      %s203 = smul.addr %s200, 2
      %s204 = sadd.s32 %s202, %s203
      %s205 = smul.addr %s204, 8
      %s206 = scalar_lea.vmem %s0, %s205
      %p207 = pneg %p50
      %p208 = pneg %p47
      %s209 = smul.u32 2, %s19
      %p210 = scmp.lt.s32.totalorder %s209, 1
      %s211 = scalar_select %p210, %s209, 1
      %s212 = smul.addr %s211, 8
      %s213 = scalar_lea.vmem %s1, %s212
      %p214 = pneg %p76
      %p215 = pneg %p73
      %p216 = pneg %p97
      %p217 = pneg %p94
      %p218 = pneg %p118
      %p219 = pneg %p115
      %p220 = pneg %p144
      %p221 = pneg %p141
      %s222 = smul.u32 2, %s19
      %p223 = scmp.lt.s32.totalorder %s222, 1
      %s224 = scalar_select %p223, %s222, 1
      %s225 = smul.addr %s224, 8
      %s226 = scalar_lea.vmem %s4, %s225
      %s227 = smul.u32 2, %s19
      %p228 = scmp.lt.s32.totalorder %s20, 8
      %s229 = scalar_select %p228, %s20, 8
      %p230 = scmp.lt.s32.totalorder %s227, 1
      %s231 = scalar_select %p230, %s227, 1
      %s232 = smul.addr %s229, 2
      %s233 = sadd.s32 %s231, %s232
      %s234 = smul.addr %s233, 8
      %s235 = scalar_lea.vmem %s0, %s234
      %s236 = smul.u32 2, %s19
      %s237 = smul.u32 2, %s19
      %p238 = scmp.lt.s32.totalorder %s237, 1
      %s239 = scalar_select %p238, %s237, 1
      %s240 = smul.addr %s239, 8
      %s241 = scalar_lea.vmem %s1, %s240
      %s242 = smul.u32 2, %s19
      %s243 = smul.u32 2, %s19
      %p244 = scmp.lt.s32.totalorder %s243, 1
      %s245 = scalar_select %p244, %s243, 1
      %s246 = smul.addr %s245, 8
      %s247 = scalar_lea.vmem %s4, %s246
      %s248 = smul.u32 2, %s19
      %p249 = scmp.eq.s32.totalorder %s20, 0
      // Predicated region
      $region37: #{forward.254} parent=35 // pred_check
        %p250 = pneg %p249
      $region38: #{forward.254} parent=35 // pred_check_branch
        %252 = sbr.rel (%p250) target = $region40
      $region39: #{forward.254} parent=35 // pred_region
        %253 = vst [vmem:[#allocation2] sm:$0xff] -inf
        %254 = vst [vmem:[#allocation2 + $0x8] sm:$0xff] -inf
      $region40: #{forward.254} parent=35 // pred_fallthru
        _
      %v255 = vld [vmem:[%s235] sm:$0xff]
      %v256 = vld [vmem:[%s235 + $0x8] sm:$0xff]
      %v257 = vld [vmem:[#allocation2] sm:$0xff]
      %v258 = vld [vmem:[#allocation2 + $0x8] sm:$0xff]
      %v259 = vmax.f32 %v257, %v255
      %v260 = vmax.f32 %v258, %v256
      %261 = vst [vmem:[#allocation2] sm:$0xff] %v259
      %262 = vst [vmem:[#allocation2 + $0x8] sm:$0xff] %v260
      %p263 = scmp.eq.s32.totalorder %s20, 8
      // Predicated region
      $region41: #{forward.254} parent=35 // pred_check
        %p264 = pneg %p263
      $region42: #{forward.254} parent=35 // pred_check_branch
        %266 = sbr.rel (%p264) target = $region44
      $region43: #{forward.254} parent=35 // pred_region
        %v267 = vld [vmem:[#allocation2] sm:$0xff]
        %v268 = vld [vmem:[#allocation2 + $0x8] sm:$0xff]
        %v269 = vld [vmem:[%s2] sm:$0x1]
        %v271 = vperm.slane %v269, 0
        %v273 = vmul.f32 %v267, %v271
        %v274 = vmul.f32 %v268, %v271
        %v275 = vld [vmem:[%s3] sm:$0x1]
        %v277 = vperm.slane %v275, 0
        %v279 = vadd.f32 %v273, %v277
        %v280 = vadd.f32 %v274, %v277
        %281 = vst [vmem:[%s247] sm:$0xff] %v279
        %282 = vst [vmem:[%s247 + $0x8] sm:$0xff] %v280
      $region44: #{forward.254} parent=35 // pred_fallthru
        _
      %s283 = smul.u32 2, %s19
      %p284 = scmp.lt.s32.totalorder %s283, 1
      %s285 = scalar_select %p284, %s283, 1
      %s286 = smul.addr %s285, 8
      %s287 = scalar_lea.vmem %s4, %s286
      // Predicated region
      $region45: #{forward.254} parent=35 // pred_check
        %p288 = pneg %p141
      $region46: #{forward.254} parent=35 // pred_check_branch
        %290 = sbr.rel (%p288) target = $region48
      $region47: #{forward.254} parent=35 // pred_region
        %s291 = smul.u32 2, %s19
      $region48: #{forward.254} parent=35 // pred_fallthru
        _
      // Predicated region
      $region49: #{forward.254} parent=35 // pred_check
        %p292 = pneg %p141
      $region50: #{forward.254} parent=35 // pred_check_branch
        %294 = sbr.rel (%p292) target = $region52
      $region51: #{forward.254} parent=35 // pred_region
        %s295 = smul.u32 2, %s19
        %p296 = scmp.lt.s32.totalorder %s295, 1
        %s297 = scalar_select %p296, %s295, 1
        %s298 = smul.addr %s297, 8
        %s299 = scalar_lea.vmem %s4, %s298
      $region52: #{forward.254} parent=35 // pred_fallthru
        _
    $region36: #{forward.254} parent=5 // pred_fallthru
      _
    %p300 = scmp.le.s32.totalorder 2, %s10
    // Predicated region
    $region53: #{forward.254} parent=5 // pred_check
      %p301 = pneg %p300
    $region54: #{forward.254} parent=5 // pred_check_branch
      %303 = sbr.rel (%p301) target = $region56
    $region55: #{forward.254} parent=5 // pred_region
      %s304 = ssub.s32 %s10, 2
    $region56: #{forward.254} parent=5 // pred_fallthru
      _
  $region6: #{forward.254} parent=0 // loop_footer
    %s14 = sadd.s32 1, %s10
  $region7: #{forward.254} parent=0 // loop_footer_branch
    %9 = sbr.rel target = $region3
  $region8: #{forward.254} parent=0 // loop_exit
    _

// kernel: forward.255
$region0: #{forward.255}
  #allocation0 [shape = 'u32[]', space=smem, size = 0x4, offset = 0x4, fixed_abs, tag = 'smem constant byte address 0x4 - core index']
  #allocation1 [shape = 'u32[72,128]{1,0:T(1,128)}', space=vmem, size = 0x9000, scoped, tag = 'internal scratch']
  #allocation2 [shape = 'f32[16,128]{1,0:T(8,128)}', space=vmem, size = 0x2000, scoped, tag = 'scratch operand']
  %s0 = inlined_call_operand.vmem [shape: f32[9,16,128], index: 0, kind: input, shape index: {}]
  %s1 = inlined_call_operand.vmem [shape: f32[16,1], index: 1, kind: input, shape index: {}]
  %s2 = inlined_call_operand.vmem [shape: f32[1,128], index: 2, kind: input, shape index: {}]
  %s3 = inlined_call_operand.vmem [shape: f32[1,128], index: 3, kind: input, shape index: {}]
  %s4 = inlined_call_operand.vmem [shape: f32[16,128], index: 4, kind: output, shape index: {}]
  %s5 = sld [smem:[#allocation0]]
  $region57: #{forward.255} parent=0
    _
  %s7 = ssub.s32 1, %s5
  %s8 = scalar_select 0, %s7, %s5
  loop: start=0, step=1, limit=11
  $region2: #{forward.255} parent=0 // loop_pre_header
    _
  $region3: #{forward.255} parent=0 // loop_header
    %s10 = sphi 0, %s14
    %p11 = scmp.ge.s32.totalorder %s10, 11
    %s17 = sphi 0, %s29
    %s18 = sphi 0, %s25
    %s19 = sphi 0, %s17
    %s20 = sphi 0, %s18
    %s21 = sphi 0, %s19
    %s22 = sphi 0, %s20
    %s34 = sphi 0, %s36
    %s37 = sphi 0, %s34
    %s38 = sphi 0, %s37
    %s54 = sphi 0, %s38
    %s60 = sphi 0, %s62
    %s63 = sphi 0, %s60
    %s64 = sphi 0, %s63
    %s80 = sphi 0, %s64
    %s84 = sphi 0, %s84
    %s86 = sphi 0, %s84
    %s87 = sphi 0, %s86
    %s101 = sphi 0, %s87
    %s105 = sphi 0, %s105
    %s107 = sphi 0, %s105
    %s108 = sphi 0, %s107
    %s122 = sphi 0, %s108
    %s128 = sphi 0, %s130
    %s131 = sphi 0, %s128
    %s132 = sphi 0, %s131
    %s148 = sphi 0, %s132
  $region4: #{forward.255} parent=0 // loop_header_branch
    %13 = sbr.rel (%p11) target = $region8
  $region5: #{forward.255} parent=0 // loop_body
    %s15 = ssub.s32 %s10, 1
    %s16 = ssub.s32 %s10, 2
    %s23 = sadd.s32 1, %s18
    %p24 = scmp.ge.s32.totalorder %s23, 9
    %s25 = scalar_select %p24, 0, %s23
    %s26 = sadd.s32 1, %s17
    %s27 = scalar_select %p24, %s26, %s17
    %p28 = scmp.ge.s32.totalorder %s27, 1
    %s29 = scalar_select %p28, 0, %s27
    %s30 = ssub.s32 %s18, %s25
    %s31 = ssub.s32 %s17, %s29
    %s32 = sor.u32 %s30, %s31
    %p33 = scmp.eq.s32.totalorder %s32, 0
    %s35 = sadd.s32 %s34, 1
    %s36 = scalar_select %p33, %s34, %s35
    %p39 = pneg %p33
    %p40 = scmp.eq.s32.totalorder %s10, 8
    %p41 = por %p39, %p40
    %p42 = scmp.ne.s32.totalorder %s34, %s37
    %p43 = scmp.eq.s32.totalorder %s10, 0
    %p44 = por %p42, %p43
    %p45 = scmp.ne.s32.totalorder %s34, %s37
    %p46 = scmp.eq.s32.totalorder %s15, 8
    %p47 = por %p45, %p46
    %p48 = scmp.ne.s32.totalorder %s37, %s38
    %p49 = scmp.eq.s32.totalorder %s15, 0
    %p50 = por %p48, %p49
    %p51 = scmp.ne.s32.totalorder %s37, %s38
    %p52 = scmp.eq.s32.totalorder %s16, 8
    %p53 = por %p51, %p52
    %p55 = scmp.ne.s32.totalorder %s38, %s54
    %p56 = scmp.eq.s32.totalorder %s16, 0
    %p57 = por %p55, %p56
    %s58 = ssub.s32 %s17, %s29
    %p59 = scmp.eq.s32.totalorder %s58, 0
    %s61 = sadd.s32 %s60, 1
    %s62 = scalar_select %p59, %s60, %s61
    %p65 = pneg %p59
    %p66 = scmp.eq.s32.totalorder %s10, 8
    %p67 = por %p65, %p66
    %p68 = scmp.ne.s32.totalorder %s60, %s63
    %p69 = scmp.eq.s32.totalorder %s10, 0
    %p70 = por %p68, %p69
    %p71 = scmp.ne.s32.totalorder %s60, %s63
    %p72 = scmp.eq.s32.totalorder %s15, 8
    %p73 = por %p71, %p72
    %p74 = scmp.ne.s32.totalorder %s63, %s64
    %p75 = scmp.eq.s32.totalorder %s15, 0
    %p76 = por %p74, %p75
    %p77 = scmp.ne.s32.totalorder %s63, %s64
    %p78 = scmp.eq.s32.totalorder %s16, 8
    %p79 = por %p77, %p78
    %p81 = scmp.ne.s32.totalorder %s64, %s80
    %p82 = scmp.eq.s32.totalorder %s16, 0
    %p83 = por %p81, %p82
    %s85 = sadd.s32 %s84, 1
    %p88 = scmp.eq.s32.totalorder %s10, 8
    %p89 = scmp.ne.s32.totalorder %s84, %s86
    %p90 = scmp.eq.s32.totalorder %s10, 0
    %p91 = por %p89, %p90
    %p92 = scmp.ne.s32.totalorder %s84, %s86
    %p93 = scmp.eq.s32.totalorder %s15, 8
    %p94 = por %p92, %p93
    %p95 = scmp.ne.s32.totalorder %s86, %s87
    %p96 = scmp.eq.s32.totalorder %s15, 0
    %p97 = por %p95, %p96
    %p98 = scmp.ne.s32.totalorder %s86, %s87
    %p99 = scmp.eq.s32.totalorder %s16, 8
    %p100 = por %p98, %p99
    %p102 = scmp.ne.s32.totalorder %s87, %s101
    %p103 = scmp.eq.s32.totalorder %s16, 0
    %p104 = por %p102, %p103
    %s106 = sadd.s32 %s105, 1
    %p109 = scmp.eq.s32.totalorder %s10, 8
    %p110 = scmp.ne.s32.totalorder %s105, %s107
    %p111 = scmp.eq.s32.totalorder %s10, 0
    %p112 = por %p110, %p111
    %p113 = scmp.ne.s32.totalorder %s105, %s107
    %p114 = scmp.eq.s32.totalorder %s15, 8
    %p115 = por %p113, %p114
    %p116 = scmp.ne.s32.totalorder %s107, %s108
    %p117 = scmp.eq.s32.totalorder %s15, 0
    %p118 = por %p116, %p117
    %p119 = scmp.ne.s32.totalorder %s107, %s108
    %p120 = scmp.eq.s32.totalorder %s16, 8
    %p121 = por %p119, %p120
    %p123 = scmp.ne.s32.totalorder %s108, %s122
    %p124 = scmp.eq.s32.totalorder %s16, 0
    %p125 = por %p123, %p124
    %s126 = ssub.s32 %s17, %s29
    %p127 = scmp.eq.s32.totalorder %s126, 0
    %s129 = sadd.s32 %s128, 1
    %s130 = scalar_select %p127, %s128, %s129
    %p133 = pneg %p127
    %p134 = scmp.eq.s32.totalorder %s10, 8
    %p135 = por %p133, %p134
    %p136 = scmp.ne.s32.totalorder %s128, %s131
    %p137 = scmp.eq.s32.totalorder %s10, 0
    %p138 = por %p136, %p137
    %p139 = scmp.ne.s32.totalorder %s128, %s131
    %p140 = scmp.eq.s32.totalorder %s15, 8
    %p141 = por %p139, %p140
    %p142 = scmp.ne.s32.totalorder %s131, %s132
    %p143 = scmp.eq.s32.totalorder %s15, 0
    %p144 = por %p142, %p143
    %p145 = scmp.ne.s32.totalorder %s131, %s132
    %p146 = scmp.eq.s32.totalorder %s16, 8
    %p147 = por %p145, %p146
    %p149 = scmp.ne.s32.totalorder %s132, %s148
    %p150 = scmp.eq.s32.totalorder %s16, 0
    %p151 = por %p149, %p150
    %p152 = scmp.le.s32.totalorder 1, %s10
    %p153 = scmp.lt.s32.totalorder %s10, 10
    %p154 = pnand %p152, %p153
    %p155 = pneg %p154
    // Predicated region
    $region9: #{forward.255} parent=5 // pred_check
      _
    $region10: #{forward.255} parent=5 // pred_check_branch
      %157 = sbr.rel (%p154) target = $region12
    $region11: #{forward.255} parent=5 // pred_region
      %s158 = ssub.s32 %s10, 1
      // Predicated region
      $region13: #{forward.255} parent=11 // pred_check
        %p159 = pneg %p76
      $region14: #{forward.255} parent=11 // pred_check_branch
        %161 = sbr.rel (%p159) target = $region16
      $region15: #{forward.255} parent=11 // pred_region
        %s162 = smul.u32 2, %s19
        %p163 = scmp.lt.s32.totalorder %s162, 1
        %s164 = scalar_select %p163, %s162, 1
        %s165 = smul.addr %s164, 8
        %s166 = scalar_lea.vmem %s1, %s165
        %s167 = smul.u32 2, %s19
      $region16: #{forward.255} parent=11 // pred_fallthru
        _
      // Predicated region
      $region17: #{forward.255} parent=11 // pred_check
        %p168 = pneg %p97
      $region18: #{forward.255} parent=11 // pred_check_branch
        %170 = sbr.rel (%p168) target = $region20
      $region19: #{forward.255} parent=11 // pred_region
        _
      $region20: #{forward.255} parent=11 // pred_fallthru
        _
      // Predicated region
      $region21: #{forward.255} parent=11 // pred_check
        %p171 = pneg %p118
      $region22: #{forward.255} parent=11 // pred_check_branch
        %173 = sbr.rel (%p171) target = $region24
      $region23: #{forward.255} parent=11 // pred_region
        _
      $region24: #{forward.255} parent=11 // pred_fallthru
        _
    $region12: #{forward.255} parent=5 // pred_fallthru
      _
    %p174 = scmp.lt.s32.totalorder %s10, 9
    // Predicated region
    $region25: #{forward.255} parent=5 // pred_check
      %p175 = pneg %p174
    $region26: #{forward.255} parent=5 // pred_check_branch
      %177 = sbr.rel (%p175) target = $region28
    $region27: #{forward.255} parent=5 // pred_region
      // Predicated region
      $region29: #{forward.255} parent=27 // pred_check
        %p178 = pneg %p44
      $region30: #{forward.255} parent=27 // pred_check_branch
        %180 = sbr.rel (%p178) target = $region32
      $region31: #{forward.255} parent=27 // pred_region
        %s181 = smul.u32 2, %s17
        %p182 = scmp.lt.s32.totalorder %s18, 8
        %s183 = scalar_select %p182, %s18, 8
        %p184 = scmp.lt.s32.totalorder %s181, 1
        %s185 = scalar_select %p184, %s181, 1
        %s186 = smul.addr %s183, 2
        %s187 = sadd.s32 %s185, %s186
        %s188 = smul.addr %s187, 8
        %s189 = scalar_lea.vmem %s0, %s188
        %s190 = smul.u32 2, %s17
      $region32: #{forward.255} parent=27 // pred_fallthru
        _
    $region28: #{forward.255} parent=5 // pred_fallthru
      _
    %p191 = scmp.le.s32.totalorder 1, %s10
    %p192 = scmp.lt.s32.totalorder %s10, 10
    %p193 = pnand %p191, %p192
    %p194 = pneg %p193
    // Predicated region
    $region33: #{forward.255} parent=5 // pred_check
      _
    $region34: #{forward.255} parent=5 // pred_check_branch
      %196 = sbr.rel (%p193) target = $region36
    $region35: #{forward.255} parent=5 // pred_region
      %s197 = ssub.s32 %s10, 1
      %s198 = smul.u32 2, %s19
      %p199 = scmp.lt.s32.totalorder %s20, 8
      %s200 = scalar_select %p199, %s20, 8
      %p201 = scmp.lt.s32.totalorder %s198, 1
      %s202 = scalar_select %p201, %s198, 1
      %s203 = smul.addr %s200, 2
      %s204 = sadd.s32 %s202, %s203
      %s205 = smul.addr %s204, 8
      %s206 = scalar_lea.vmem %s0, %s205
      %p207 = pneg %p50
      %p208 = pneg %p47
      %s209 = smul.u32 2, %s19
      %p210 = scmp.lt.s32.totalorder %s209, 1
      %s211 = scalar_select %p210, %s209, 1
      %s212 = smul.addr %s211, 8
      %s213 = scalar_lea.vmem %s1, %s212
      %p214 = pneg %p76
      %p215 = pneg %p73
      %p216 = pneg %p97
      %p217 = pneg %p94
      %p218 = pneg %p118
      %p219 = pneg %p115
      %p220 = pneg %p144
      %p221 = pneg %p141
      %s222 = smul.u32 2, %s19
      %p223 = scmp.lt.s32.totalorder %s222, 1
      %s224 = scalar_select %p223, %s222, 1
      %s225 = smul.addr %s224, 8
      %s226 = scalar_lea.vmem %s4, %s225
      %s227 = smul.u32 2, %s19
      %p228 = scmp.lt.s32.totalorder %s20, 8
      %s229 = scalar_select %p228, %s20, 8
      %p230 = scmp.lt.s32.totalorder %s227, 1
      %s231 = scalar_select %p230, %s227, 1
      %s232 = smul.addr %s229, 2
      %s233 = sadd.s32 %s231, %s232
      %s234 = smul.addr %s233, 8
      %s235 = scalar_lea.vmem %s0, %s234
      %s236 = smul.u32 2, %s19
      %s237 = smul.u32 2, %s19
      %p238 = scmp.lt.s32.totalorder %s237, 1
      %s239 = scalar_select %p238, %s237, 1
      %s240 = smul.addr %s239, 8
      %s241 = scalar_lea.vmem %s1, %s240
      %s242 = smul.u32 2, %s19
      %s243 = smul.u32 2, %s19
      %p244 = scmp.lt.s32.totalorder %s243, 1
      %s245 = scalar_select %p244, %s243, 1
      %s246 = smul.addr %s245, 8
      %s247 = scalar_lea.vmem %s4, %s246
      %s248 = smul.u32 2, %s19
      %p249 = scmp.eq.s32.totalorder %s20, 0
      // Predicated region
      $region37: #{forward.255} parent=35 // pred_check
        %p250 = pneg %p249
      $region38: #{forward.255} parent=35 // pred_check_branch
        %252 = sbr.rel (%p250) target = $region40
      $region39: #{forward.255} parent=35 // pred_region
        %253 = vst [vmem:[#allocation2] sm:$0xff] 0.0
        %254 = vst [vmem:[#allocation2 + $0x8] sm:$0xff] 0.0
      $region40: #{forward.255} parent=35 // pred_fallthru
        _
      %v255 = vld [vmem:[%s235] sm:$0xff]
      %v256 = vld [vmem:[%s235 + $0x8] sm:$0xff]
      %v257 = vld [vmem:[#allocation2] sm:$0xff]
      %v258 = vld [vmem:[#allocation2 + $0x8] sm:$0xff]
      %v259 = vadd.f32 %v257, %v255
      %v260 = vadd.f32 %v258, %v256
      %261 = vst [vmem:[#allocation2] sm:$0xff] %v259
      %262 = vst [vmem:[#allocation2 + $0x8] sm:$0xff] %v260
      %p263 = scmp.eq.s32.totalorder %s20, 8
      // Predicated region
      $region41: #{forward.255} parent=35 // pred_check
        %p264 = pneg %p263
      $region42: #{forward.255} parent=35 // pred_check_branch
        %266 = sbr.rel (%p264) target = $region44
      $region43: #{forward.255} parent=35 // pred_region
        %v267 = vld [vmem:[#allocation2] sm:$0xff]
        %v268 = vld [vmem:[#allocation2 + $0x8] sm:$0xff]
        %v269 = vld [vmem:[%s241] sm:$0xff]
        %v270 = vld [vmem:[%s241 + $0x8] sm:$0xff]
        %272 = vset.pattern.permute.xlu0 0
        %273 = vperm.xlu0 %272, %v269
        %v274 = vpop.permute.xlu0 %273
        %277 = vset.pattern.permute.xlu0 0
        %278 = vperm.xlu0 %277, %v270
        %v279 = vpop.permute.xlu0 %278
        %v281 = vmul.f32 %v267, %v274
        %v282 = vmul.f32 %v268, %v279
        %v283 = vld [vmem:[%s2] sm:$0x1]
        %v285 = vperm.slane %v283, 0
        %v287 = vmul.f32 %v281, %v285
        %v288 = vmul.f32 %v282, %v285
        %v289 = vld [vmem:[%s3] sm:$0x1]
        %v291 = vperm.slane %v289, 0
        %v293 = vadd.f32 %v287, %v291
        %v294 = vadd.f32 %v288, %v291
        %295 = vst [vmem:[%s247] sm:$0xff] %v293
        %296 = vst [vmem:[%s247 + $0x8] sm:$0xff] %v294
      $region44: #{forward.255} parent=35 // pred_fallthru
        _
      %s297 = smul.u32 2, %s19
      %p298 = scmp.lt.s32.totalorder %s297, 1
      %s299 = scalar_select %p298, %s297, 1
      %s300 = smul.addr %s299, 8
      %s301 = scalar_lea.vmem %s4, %s300
      // Predicated region
      $region45: #{forward.255} parent=35 // pred_check
        %p302 = pneg %p141
      $region46: #{forward.255} parent=35 // pred_check_branch
        %304 = sbr.rel (%p302) target = $region48
      $region47: #{forward.255} parent=35 // pred_region
        %s305 = smul.u32 2, %s19
      $region48: #{forward.255} parent=35 // pred_fallthru
        _
      // Predicated region
      $region49: #{forward.255} parent=35 // pred_check
        %p306 = pneg %p141
      $region50: #{forward.255} parent=35 // pred_check_branch
        %308 = sbr.rel (%p306) target = $region52
      $region51: #{forward.255} parent=35 // pred_region
        %s309 = smul.u32 2, %s19
        %p310 = scmp.lt.s32.totalorder %s309, 1
        %s311 = scalar_select %p310, %s309, 1
        %s312 = smul.addr %s311, 8
        %s313 = scalar_lea.vmem %s4, %s312
      $region52: #{forward.255} parent=35 // pred_fallthru
        _
    $region36: #{forward.255} parent=5 // pred_fallthru
      _
    %p314 = scmp.le.s32.totalorder 2, %s10
    // Predicated region
    $region53: #{forward.255} parent=5 // pred_check
      %p315 = pneg %p314
    $region54: #{forward.255} parent=5 // pred_check_branch
      %317 = sbr.rel (%p315) target = $region56
    $region55: #{forward.255} parent=5 // pred_region
      %s318 = ssub.s32 %s10, 2
    $region56: #{forward.255} parent=5 // pred_fallthru
      _
  $region6: #{forward.255} parent=0 // loop_footer
    %s14 = sadd.s32 1, %s10
  $region7: #{forward.255} parent=0 // loop_footer_branch
    %9 = sbr.rel target = $region3
  $region8: #{forward.255} parent=0 // loop_exit
    _

// kernel: forward.262
$region0: #{forward.262}
  #allocation0 [shape = 'u32[]', space=smem, size = 0x4, offset = 0x4, fixed_abs, tag = 'smem constant byte address 0x4 - core index']
  #allocation1 [shape = 'u32[72,128]{1,0:T(1,128)}', space=vmem, size = 0x9000, scoped, tag = 'internal scratch']
  #allocation2 [shape = 'f32[16,128]{1,0:T(8,128)}', space=vmem, size = 0x2000, scoped, tag = 'scratch operand']
  %s0 = inlined_call_operand.vmem [shape: bf16[25,16,128], index: 0, kind: input, shape index: {}]
  %s1 = inlined_call_operand.vmem [shape: f32[25,1,128], index: 1, kind: input, shape index: {}]
  %s2 = inlined_call_operand.vmem [shape: f32[16,128], index: 2, kind: output, shape index: {}]
  %s3 = sld [smem:[#allocation0]]
  $region49: #{forward.262} parent=0
    _
  %s5 = ssub.s32 1, %s3
  %s6 = scalar_select 0, %s5, %s3
  loop: start=0, step=1, limit=27
  $region2: #{forward.262} parent=0 // loop_pre_header
    _
  $region3: #{forward.262} parent=0 // loop_header
    %s8 = sphi 0, %s12
    %p9 = scmp.ge.s32.totalorder %s8, 27
    %s15 = sphi 0, %s27
    %s16 = sphi 0, %s23
    %s17 = sphi 0, %s15
    %s18 = sphi 0, %s16
    %s19 = sphi 0, %s17
    %s20 = sphi 0, %s18
    %s32 = sphi 0, %s34
    %s35 = sphi 0, %s32
    %s36 = sphi 0, %s35
    %s52 = sphi 0, %s36
    %s58 = sphi 0, %s60
    %s61 = sphi 0, %s58
    %s62 = sphi 0, %s61
    %s78 = sphi 0, %s62
    %s84 = sphi 0, %s86
    %s87 = sphi 0, %s84
    %s88 = sphi 0, %s87
    %s104 = sphi 0, %s88
  $region4: #{forward.262} parent=0 // loop_header_branch
    %11 = sbr.rel (%p9) target = $region8
  $region5: #{forward.262} parent=0 // loop_body
    %s13 = ssub.s32 %s8, 1
    %s14 = ssub.s32 %s8, 2
    %s21 = sadd.s32 1, %s16
    %p22 = scmp.ge.s32.totalorder %s21, 25
    %s23 = scalar_select %p22, 0, %s21
    %s24 = sadd.s32 1, %s15
    %s25 = scalar_select %p22, %s24, %s15
    %p26 = scmp.ge.s32.totalorder %s25, 1
    %s27 = scalar_select %p26, 0, %s25
    %s28 = ssub.s32 %s16, %s23
    %s29 = ssub.s32 %s15, %s27
    %s30 = sor.u32 %s28, %s29
    %p31 = scmp.eq.s32.totalorder %s30, 0
    %s33 = sadd.s32 %s32, 1
    %s34 = scalar_select %p31, %s32, %s33
    %p37 = pneg %p31
    %p38 = scmp.eq.s32.totalorder %s8, 24
    %p39 = por %p37, %p38
    %p40 = scmp.ne.s32.totalorder %s32, %s35
    %p41 = scmp.eq.s32.totalorder %s8, 0
    %p42 = por %p40, %p41
    %p43 = scmp.ne.s32.totalorder %s32, %s35
    %p44 = scmp.eq.s32.totalorder %s13, 24
    %p45 = por %p43, %p44
    %p46 = scmp.ne.s32.totalorder %s35, %s36
    %p47 = scmp.eq.s32.totalorder %s13, 0
    %p48 = por %p46, %p47
    %p49 = scmp.ne.s32.totalorder %s35, %s36
    %p50 = scmp.eq.s32.totalorder %s14, 24
    %p51 = por %p49, %p50
    %p53 = scmp.ne.s32.totalorder %s36, %s52
    %p54 = scmp.eq.s32.totalorder %s14, 0
    %p55 = por %p53, %p54
    %s56 = ssub.s32 %s16, %s23
    %p57 = scmp.eq.s32.totalorder %s56, 0
    %s59 = sadd.s32 %s58, 1
    %s60 = scalar_select %p57, %s58, %s59
    %p63 = pneg %p57
    %p64 = scmp.eq.s32.totalorder %s8, 24
    %p65 = por %p63, %p64
    %p66 = scmp.ne.s32.totalorder %s58, %s61
    %p67 = scmp.eq.s32.totalorder %s8, 0
    %p68 = por %p66, %p67
    %p69 = scmp.ne.s32.totalorder %s58, %s61
    %p70 = scmp.eq.s32.totalorder %s13, 24
    %p71 = por %p69, %p70
    %p72 = scmp.ne.s32.totalorder %s61, %s62
    %p73 = scmp.eq.s32.totalorder %s13, 0
    %p74 = por %p72, %p73
    %p75 = scmp.ne.s32.totalorder %s61, %s62
    %p76 = scmp.eq.s32.totalorder %s14, 24
    %p77 = por %p75, %p76
    %p79 = scmp.ne.s32.totalorder %s62, %s78
    %p80 = scmp.eq.s32.totalorder %s14, 0
    %p81 = por %p79, %p80
    %s82 = ssub.s32 %s15, %s27
    %p83 = scmp.eq.s32.totalorder %s82, 0
    %s85 = sadd.s32 %s84, 1
    %s86 = scalar_select %p83, %s84, %s85
    %p89 = pneg %p83
    %p90 = scmp.eq.s32.totalorder %s8, 24
    %p91 = por %p89, %p90
    %p92 = scmp.ne.s32.totalorder %s84, %s87
    %p93 = scmp.eq.s32.totalorder %s8, 0
    %p94 = por %p92, %p93
    %p95 = scmp.ne.s32.totalorder %s84, %s87
    %p96 = scmp.eq.s32.totalorder %s13, 24
    %p97 = por %p95, %p96
    %p98 = scmp.ne.s32.totalorder %s87, %s88
    %p99 = scmp.eq.s32.totalorder %s13, 0
    %p100 = por %p98, %p99
    %p101 = scmp.ne.s32.totalorder %s87, %s88
    %p102 = scmp.eq.s32.totalorder %s14, 24
    %p103 = por %p101, %p102
    %p105 = scmp.ne.s32.totalorder %s88, %s104
    %p106 = scmp.eq.s32.totalorder %s14, 0
    %p107 = por %p105, %p106
    %p108 = scmp.le.s32.totalorder 1, %s8
    %p109 = scmp.lt.s32.totalorder %s8, 26
    %p110 = pnand %p108, %p109
    %p111 = pneg %p110
    // Predicated region
    $region9: #{forward.262} parent=5 // pred_check
      _
    $region10: #{forward.262} parent=5 // pred_check_branch
      %113 = sbr.rel (%p110) target = $region12
    $region11: #{forward.262} parent=5 // pred_region
      %s114 = ssub.s32 %s8, 1
    $region12: #{forward.262} parent=5 // pred_fallthru
      _
    %p115 = scmp.lt.s32.totalorder %s8, 25
    // Predicated region
    $region13: #{forward.262} parent=5 // pred_check
      %p116 = pneg %p115
    $region14: #{forward.262} parent=5 // pred_check_branch
      %118 = sbr.rel (%p116) target = $region16
    $region15: #{forward.262} parent=5 // pred_region
      // Predicated region
      $region17: #{forward.262} parent=15 // pred_check
        %p119 = pneg %p42
      $region18: #{forward.262} parent=15 // pred_check_branch
        %121 = sbr.rel (%p119) target = $region20
      $region19: #{forward.262} parent=15 // pred_region
        %s122 = smul.u32 2, %s15
        %p123 = scmp.lt.s32.totalorder %s16, 24
        %s124 = scalar_select %p123, %s16, 24
        %p125 = scmp.lt.s32.totalorder %s122, 1
        %s126 = scalar_select %p125, %s122, 1
        %s127 = smul.addr %s124, 2
        %s128 = sadd.s32 %s126, %s127
        %s129 = smul.addr %s128, 4
        %s130 = scalar_lea.vmem %s0, %s129
        %s131 = smul.u32 2, %s15
      $region20: #{forward.262} parent=15 // pred_fallthru
        _
      // Predicated region
      $region21: #{forward.262} parent=15 // pred_check
        %p132 = pneg %p68
      $region22: #{forward.262} parent=15 // pred_check_branch
        %134 = sbr.rel (%p132) target = $region24
      $region23: #{forward.262} parent=15 // pred_region
        %p135 = scmp.lt.s32.totalorder %s16, 24
        %s136 = scalar_select %p135, %s16, 24
        %s137 = scalar_lea.vmem %s1, %s136
      $region24: #{forward.262} parent=15 // pred_fallthru
        _
    $region16: #{forward.262} parent=5 // pred_fallthru
      _
    %p138 = scmp.le.s32.totalorder 1, %s8
    %p139 = scmp.lt.s32.totalorder %s8, 26
    %p140 = pnand %p138, %p139
    %p141 = pneg %p140
    // Predicated region
    $region25: #{forward.262} parent=5 // pred_check
      _
    $region26: #{forward.262} parent=5 // pred_check_branch
      %143 = sbr.rel (%p140) target = $region28
    $region27: #{forward.262} parent=5 // pred_region
      %s144 = ssub.s32 %s8, 1
      %s145 = smul.u32 2, %s17
      %p146 = scmp.lt.s32.totalorder %s18, 24
      %s147 = scalar_select %p146, %s18, 24
      %p148 = scmp.lt.s32.totalorder %s145, 1
      %s149 = scalar_select %p148, %s145, 1
      %s150 = smul.addr %s147, 2
      %s151 = sadd.s32 %s149, %s150
      %s152 = smul.addr %s151, 4
      %s153 = scalar_lea.vmem %s0, %s152
      %p154 = pneg %p48
      %p155 = pneg %p45
      %p156 = scmp.lt.s32.totalorder %s18, 24
      %s157 = scalar_select %p156, %s18, 24
      %s158 = scalar_lea.vmem %s1, %s157
      %p159 = pneg %p74
      %p160 = pneg %p71
      %p161 = pneg %p100
      %p162 = pneg %p97
      %s163 = smul.u32 2, %s17
      %p164 = scmp.lt.s32.totalorder %s163, 1
      %s165 = scalar_select %p164, %s163, 1
      %s166 = smul.addr %s165, 8
      %s167 = scalar_lea.vmem %s2, %s166
      %s168 = smul.u32 2, %s17
      %p169 = scmp.lt.s32.totalorder %s18, 24
      %s170 = scalar_select %p169, %s18, 24
      %p171 = scmp.lt.s32.totalorder %s168, 1
      %s172 = scalar_select %p171, %s168, 1
      %s173 = smul.addr %s170, 2
      %s174 = sadd.s32 %s172, %s173
      %s175 = smul.addr %s174, 4
      %s176 = scalar_lea.vmem %s0, %s175
      %s177 = smul.u32 2, %s17
      %p178 = scmp.lt.s32.totalorder %s18, 24
      %s179 = scalar_select %p178, %s18, 24
      %s180 = scalar_lea.vmem %s1, %s179
      %s181 = smul.u32 2, %s17
      %p182 = scmp.lt.s32.totalorder %s181, 1
      %s183 = scalar_select %p182, %s181, 1
      %s184 = smul.addr %s183, 8
      %s185 = scalar_lea.vmem %s2, %s184
      %s186 = smul.u32 2, %s17
      %p187 = scmp.eq.s32.totalorder %s18, 0
      // Predicated region
      $region29: #{forward.262} parent=27 // pred_check
        %p188 = pneg %p187
      $region30: #{forward.262} parent=27 // pred_check_branch
        %190 = sbr.rel (%p188) target = $region32
      $region31: #{forward.262} parent=27 // pred_region
        %191 = vst [vmem:[#allocation2] sm:$0xff] 0.0
        %192 = vst [vmem:[#allocation2 + $0x8] sm:$0xff] 0.0
      $region32: #{forward.262} parent=27 // pred_fallthru
        _
      %v193 = vld [vmem:[%s176] sm:$0xf]
      %v194 = vld [vmem:[%s176 + $0x4] sm:$0xf]
      %v195 = vunpack.c.l.bf16 %v193
      %v196 = vunpack.c.l.bf16 %v194
      %v197 = vmax.f32 %v195, 0.0
      %v198 = vmax.f32 %v196, 0.0
      %v199 = vld [vmem:[#allocation2] sm:$0xff]
      %v200 = vld [vmem:[#allocation2 + $0x8] sm:$0xff]
      %v201 = vld [vmem:[%s180] sm:$0x1]
      %v203 = vperm.slane %v201, 0
      %v205 = vmul.f32 %v197, %v203
      %v206 = vmul.f32 %v198, %v203
      %v207 = vadd.f32 %v199, %v205
      %v208 = vadd.f32 %v200, %v206
      %209 = vst [vmem:[#allocation2] sm:$0xff] %v207
      %210 = vst [vmem:[#allocation2 + $0x8] sm:$0xff] %v208
      %p211 = scmp.eq.s32.totalorder %s18, 24
      // Predicated region
      $region33: #{forward.262} parent=27 // pred_check
        %p212 = pneg %p211
      $region34: #{forward.262} parent=27 // pred_check_branch
        %214 = sbr.rel (%p212) target = $region36
      $region35: #{forward.262} parent=27 // pred_region
        %v215 = vld [vmem:[#allocation2] sm:$0xff]
        %v216 = vld [vmem:[#allocation2 + $0x8] sm:$0xff]
        %217 = vst [vmem:[%s185] sm:$0xff] %v215
        %218 = vst [vmem:[%s185 + $0x8] sm:$0xff] %v216
      $region36: #{forward.262} parent=27 // pred_fallthru
        _
      %s219 = smul.u32 2, %s17
      %p220 = scmp.lt.s32.totalorder %s219, 1
      %s221 = scalar_select %p220, %s219, 1
      %s222 = smul.addr %s221, 8
      %s223 = scalar_lea.vmem %s2, %s222
      // Predicated region
      $region37: #{forward.262} parent=27 // pred_check
        %p224 = pneg %p97
      $region38: #{forward.262} parent=27 // pred_check_branch
        %226 = sbr.rel (%p224) target = $region40
      $region39: #{forward.262} parent=27 // pred_region
        %s227 = smul.u32 2, %s17
      $region40: #{forward.262} parent=27 // pred_fallthru
        _
      // Predicated region
      $region41: #{forward.262} parent=27 // pred_check
        %p228 = pneg %p97
      $region42: #{forward.262} parent=27 // pred_check_branch
        %230 = sbr.rel (%p228) target = $region44
      $region43: #{forward.262} parent=27 // pred_region
        %s231 = smul.u32 2, %s17
        %p232 = scmp.lt.s32.totalorder %s231, 1
        %s233 = scalar_select %p232, %s231, 1
        %s234 = smul.addr %s233, 8
        %s235 = scalar_lea.vmem %s2, %s234
      $region44: #{forward.262} parent=27 // pred_fallthru
        _
    $region28: #{forward.262} parent=5 // pred_fallthru
      _
    %p236 = scmp.le.s32.totalorder 2, %s8
    // Predicated region
    $region45: #{forward.262} parent=5 // pred_check
      %p237 = pneg %p236
    $region46: #{forward.262} parent=5 // pred_check_branch
      %239 = sbr.rel (%p237) target = $region48
    $region47: #{forward.262} parent=5 // pred_region
      %s240 = ssub.s32 %s8, 2
    $region48: #{forward.262} parent=5 // pred_fallthru
      _
  $region6: #{forward.262} parent=0 // loop_footer
    %s12 = sadd.s32 1, %s8
  $region7: #{forward.262} parent=0 // loop_footer_branch
    %7 = sbr.rel target = $region3
  $region8: #{forward.262} parent=0 // loop_exit
    _

// kernel: forward.302
$region0: #{forward.302}
  #allocation0 [shape = 'u32[]', space=smem, size = 0x4, offset = 0x4, fixed_abs, tag = 'smem constant byte address 0x4 - core index']
  #allocation1 [shape = 'u32[72,128]{1,0:T(1,128)}', space=vmem, size = 0x9000, scoped, tag = 'internal scratch']
  #allocation2 [shape = 'f32[16,128]{1,0:T(8,128)}', space=vmem, size = 0x2000, scoped, tag = 'scratch operand']
  %s0 = inlined_call_operand.vmem [shape: f32[9,16,128], index: 0, kind: input, shape index: {}]
  %s1 = inlined_call_operand.vmem [shape: f32[16,1], index: 1, kind: input, shape index: {}]
  %s2 = inlined_call_operand.vmem [shape: f32[1,128], index: 2, kind: input, shape index: {}]
  %s3 = inlined_call_operand.hbm [shape: f32[1,128], index: 3, kind: input, shape index: {}]
  %s4 = inlined_call_operand.vmem [shape: f32[16,128], index: 4, kind: output, shape index: {}]
  %s5 = sld [smem:[#allocation0]]
  $region61: #{forward.302} parent=0
    _
  %s7 = ssub.s32 1, %s5
  %s8 = scalar_select 0, %s7, %s5
  $region1: #{forward.302} parent=0
    #allocation3 [shape = 'u8[512]{0}', space=vmem, size = 0x400, scoped, tag = 'input window, operand 3, single buffered']
    #allocation4 [shape = 's32[2]{0}', space=sflag, size = 0x8, scoped, tag = 'scoped memory for forward.302']
    %9 = vsyncpa [#allocation4], 0
    loop: start=0, step=1, limit=11
    $region2: #{forward.302} parent=1 // loop_pre_header
      _
    $region3: #{forward.302} parent=1 // loop_header
      %s11 = sphi 0, %s15
      %p12 = scmp.ge.s32.totalorder %s11, 11
      %s18 = sphi 0, %s30
      %s19 = sphi 0, %s26
      %s20 = sphi 0, %s18
      %s21 = sphi 0, %s19
      %s22 = sphi 0, %s20
      %s23 = sphi 0, %s21
      %s35 = sphi 0, %s37
      %s38 = sphi 0, %s35
      %s39 = sphi 0, %s38
      %s55 = sphi 0, %s39
      %s61 = sphi 0, %s63
      %s64 = sphi 0, %s61
      %s65 = sphi 0, %s64
      %s81 = sphi 0, %s65
      %s85 = sphi 0, %s85
      %s87 = sphi 0, %s85
      %s88 = sphi 0, %s87
      %s102 = sphi 0, %s88
      %s106 = sphi 0, %s106
      %s108 = sphi 0, %s106
      %s109 = sphi 0, %s108
      %s123 = sphi 0, %s109
      %s129 = sphi 0, %s131
      %s132 = sphi 0, %s129
      %s133 = sphi 0, %s132
      %s149 = sphi 0, %s133
    $region4: #{forward.302} parent=1 // loop_header_branch
      %14 = sbr.rel (%p12) target = $region8
    $region5: #{forward.302} parent=1 // loop_body
      %s16 = ssub.s32 %s11, 1
      %s17 = ssub.s32 %s11, 2
      %s24 = sadd.s32 1, %s19
      %p25 = scmp.ge.s32.totalorder %s24, 9
      %s26 = scalar_select %p25, 0, %s24
      %s27 = sadd.s32 1, %s18
      %s28 = scalar_select %p25, %s27, %s18
      %p29 = scmp.ge.s32.totalorder %s28, 1
      %s30 = scalar_select %p29, 0, %s28
      %s31 = ssub.s32 %s19, %s26
      %s32 = ssub.s32 %s18, %s30
      %s33 = sor.u32 %s31, %s32
      %p34 = scmp.eq.s32.totalorder %s33, 0
      %s36 = sadd.s32 %s35, 1
      %s37 = scalar_select %p34, %s35, %s36
      %p40 = pneg %p34
      %p41 = scmp.eq.s32.totalorder %s11, 8
      %p42 = por %p40, %p41
      %p43 = scmp.ne.s32.totalorder %s35, %s38
      %p44 = scmp.eq.s32.totalorder %s11, 0
      %p45 = por %p43, %p44
      %p46 = scmp.ne.s32.totalorder %s35, %s38
      %p47 = scmp.eq.s32.totalorder %s16, 8
      %p48 = por %p46, %p47
      %p49 = scmp.ne.s32.totalorder %s38, %s39
      %p50 = scmp.eq.s32.totalorder %s16, 0
      %p51 = por %p49, %p50
      %p52 = scmp.ne.s32.totalorder %s38, %s39
      %p53 = scmp.eq.s32.totalorder %s17, 8
      %p54 = por %p52, %p53
      %p56 = scmp.ne.s32.totalorder %s39, %s55
      %p57 = scmp.eq.s32.totalorder %s17, 0
      %p58 = por %p56, %p57
      %s59 = ssub.s32 %s18, %s30
      %p60 = scmp.eq.s32.totalorder %s59, 0
      %s62 = sadd.s32 %s61, 1
      %s63 = scalar_select %p60, %s61, %s62
      %p66 = pneg %p60
      %p67 = scmp.eq.s32.totalorder %s11, 8
      %p68 = por %p66, %p67
      %p69 = scmp.ne.s32.totalorder %s61, %s64
      %p70 = scmp.eq.s32.totalorder %s11, 0
      %p71 = por %p69, %p70
      %p72 = scmp.ne.s32.totalorder %s61, %s64
      %p73 = scmp.eq.s32.totalorder %s16, 8
      %p74 = por %p72, %p73
      %p75 = scmp.ne.s32.totalorder %s64, %s65
      %p76 = scmp.eq.s32.totalorder %s16, 0
      %p77 = por %p75, %p76
      %p78 = scmp.ne.s32.totalorder %s64, %s65
      %p79 = scmp.eq.s32.totalorder %s17, 8
      %p80 = por %p78, %p79
      %p82 = scmp.ne.s32.totalorder %s65, %s81
      %p83 = scmp.eq.s32.totalorder %s17, 0
      %p84 = por %p82, %p83
      %s86 = sadd.s32 %s85, 1
      %p89 = scmp.eq.s32.totalorder %s11, 8
      %p90 = scmp.ne.s32.totalorder %s85, %s87
      %p91 = scmp.eq.s32.totalorder %s11, 0
      %p92 = por %p90, %p91
      %p93 = scmp.ne.s32.totalorder %s85, %s87
      %p94 = scmp.eq.s32.totalorder %s16, 8
      %p95 = por %p93, %p94
      %p96 = scmp.ne.s32.totalorder %s87, %s88
      %p97 = scmp.eq.s32.totalorder %s16, 0
      %p98 = por %p96, %p97
      %p99 = scmp.ne.s32.totalorder %s87, %s88
      %p100 = scmp.eq.s32.totalorder %s17, 8
      %p101 = por %p99, %p100
      %p103 = scmp.ne.s32.totalorder %s88, %s102
      %p104 = scmp.eq.s32.totalorder %s17, 0
      %p105 = por %p103, %p104
      %s107 = sadd.s32 %s106, 1
      %p110 = scmp.eq.s32.totalorder %s11, 8
      %p111 = scmp.ne.s32.totalorder %s106, %s108
      %p112 = scmp.eq.s32.totalorder %s11, 0
      %p113 = por %p111, %p112
      %p114 = scmp.ne.s32.totalorder %s106, %s108
      %p115 = scmp.eq.s32.totalorder %s16, 8
      %p116 = por %p114, %p115
      %p117 = scmp.ne.s32.totalorder %s108, %s109
      %p118 = scmp.eq.s32.totalorder %s16, 0
      %p119 = por %p117, %p118
      %p120 = scmp.ne.s32.totalorder %s108, %s109
      %p121 = scmp.eq.s32.totalorder %s17, 8
      %p122 = por %p120, %p121
      %p124 = scmp.ne.s32.totalorder %s109, %s123
      %p125 = scmp.eq.s32.totalorder %s17, 0
      %p126 = por %p124, %p125
      %s127 = ssub.s32 %s18, %s30
      %p128 = scmp.eq.s32.totalorder %s127, 0
      %s130 = sadd.s32 %s129, 1
      %s131 = scalar_select %p128, %s129, %s130
      %p134 = pneg %p128
      %p135 = scmp.eq.s32.totalorder %s11, 8
      %p136 = por %p134, %p135
      %p137 = scmp.ne.s32.totalorder %s129, %s132
      %p138 = scmp.eq.s32.totalorder %s11, 0
      %p139 = por %p137, %p138
      %p140 = scmp.ne.s32.totalorder %s129, %s132
      %p141 = scmp.eq.s32.totalorder %s16, 8
      %p142 = por %p140, %p141
      %p143 = scmp.ne.s32.totalorder %s132, %s133
      %p144 = scmp.eq.s32.totalorder %s16, 0
      %p145 = por %p143, %p144
      %p146 = scmp.ne.s32.totalorder %s132, %s133
      %p147 = scmp.eq.s32.totalorder %s17, 8
      %p148 = por %p146, %p147
      %p150 = scmp.ne.s32.totalorder %s133, %s149
      %p151 = scmp.eq.s32.totalorder %s17, 0
      %p152 = por %p150, %p151
      %p153 = scmp.le.s32.totalorder 1, %s11
      %p154 = scmp.lt.s32.totalorder %s11, 10
      %p155 = pnand %p153, %p154
      %p156 = pneg %p155
      // Predicated region
      $region9: #{forward.302} parent=5 // pred_check
        _
      $region10: #{forward.302} parent=5 // pred_check_branch
        %158 = sbr.rel (%p155) target = $region12
      $region11: #{forward.302} parent=5 // pred_region
        %s159 = ssub.s32 %s11, 1
        // Predicated region
        $region13: #{forward.302} parent=11 // pred_check
          %p160 = pneg %p77
        $region14: #{forward.302} parent=11 // pred_check_branch
          %162 = sbr.rel (%p160) target = $region16
        $region15: #{forward.302} parent=11 // pred_region
          %s163 = smul.u32 2, %s20
          %p164 = scmp.lt.s32.totalorder %s163, 1
          %s165 = scalar_select %p164, %s163, 1
          %s166 = smul.addr %s165, 8
          %s167 = scalar_lea.vmem %s1, %s166
          %s168 = smul.u32 2, %s20
        $region16: #{forward.302} parent=11 // pred_fallthru
          _
        // Predicated region
        $region17: #{forward.302} parent=11 // pred_check
          %p169 = pneg %p98
        $region18: #{forward.302} parent=11 // pred_check_branch
          %171 = sbr.rel (%p169) target = $region20
        $region19: #{forward.302} parent=11 // pred_region
          _
        $region20: #{forward.302} parent=11 // pred_fallthru
          _
        // Predicated region
        $region21: #{forward.302} parent=11 // pred_check
          %p172 = pneg %p119
        $region22: #{forward.302} parent=11 // pred_check_branch
          %174 = sbr.rel (%p172) target = $region24
        $region23: #{forward.302} parent=11 // pred_region
          %176 = vsyncadd [#allocation4], 0
          %s178 = sshll.u32 %s3, 4
          %s179 = int_to_ptr.hbm [resolvable:$true] %s178
          %s180 = sshll.u32 [#allocation3], 4
          %s181 = int_to_ptr.vmem [resolvable:$true] %s180
          %183 = dma.hbm_to_vmem [thread:$0]  %s179, 16, %s181, [#allocation4]
        $region24: #{forward.302} parent=11 // pred_fallthru
          _
      $region12: #{forward.302} parent=5 // pred_fallthru
        _
      %p184 = scmp.lt.s32.totalorder %s11, 9
      // Predicated region
      $region25: #{forward.302} parent=5 // pred_check
        %p185 = pneg %p184
      $region26: #{forward.302} parent=5 // pred_check_branch
        %187 = sbr.rel (%p185) target = $region28
      $region27: #{forward.302} parent=5 // pred_region
        // Predicated region
        $region29: #{forward.302} parent=27 // pred_check
          %p188 = pneg %p45
        $region30: #{forward.302} parent=27 // pred_check_branch
          %190 = sbr.rel (%p188) target = $region32
        $region31: #{forward.302} parent=27 // pred_region
          %s191 = smul.u32 2, %s18
          %p192 = scmp.lt.s32.totalorder %s19, 8
          %s193 = scalar_select %p192, %s19, 8
          %p194 = scmp.lt.s32.totalorder %s191, 1
          %s195 = scalar_select %p194, %s191, 1
          %s196 = smul.addr %s193, 2
          %s197 = sadd.s32 %s195, %s196
          %s198 = smul.addr %s197, 8
          %s199 = scalar_lea.vmem %s0, %s198
          %s200 = smul.u32 2, %s18
        $region32: #{forward.302} parent=27 // pred_fallthru
          _
      $region28: #{forward.302} parent=5 // pred_fallthru
        _
      %p201 = scmp.le.s32.totalorder 1, %s11
      %p202 = scmp.lt.s32.totalorder %s11, 10
      %p203 = pnand %p201, %p202
      %p204 = pneg %p203
      // Predicated region
      $region33: #{forward.302} parent=5 // pred_check
        _
      $region34: #{forward.302} parent=5 // pred_check_branch
        %206 = sbr.rel (%p203) target = $region36
      $region35: #{forward.302} parent=5 // pred_region
        %s207 = ssub.s32 %s11, 1
        // Predicated region
        $region37: #{forward.302} parent=35 // pred_check
          %p208 = pneg %p119
        $region38: #{forward.302} parent=35 // pred_check_branch
          %210 = sbr.rel (%p208) target = $region40
        $region39: #{forward.302} parent=35 // pred_region
          %212 = dma.done [#allocation4], 16
        $region40: #{forward.302} parent=35 // pred_fallthru
          _
        %s213 = smul.u32 2, %s20
        %p214 = scmp.lt.s32.totalorder %s21, 8
        %s215 = scalar_select %p214, %s21, 8
        %p216 = scmp.lt.s32.totalorder %s213, 1
        %s217 = scalar_select %p216, %s213, 1
        %s218 = smul.addr %s215, 2
        %s219 = sadd.s32 %s217, %s218
        %s220 = smul.addr %s219, 8
        %s221 = scalar_lea.vmem %s0, %s220
        %p222 = pneg %p51
        %p223 = pneg %p48
        %s224 = smul.u32 2, %s20
        %p225 = scmp.lt.s32.totalorder %s224, 1
        %s226 = scalar_select %p225, %s224, 1
        %s227 = smul.addr %s226, 8
        %s228 = scalar_lea.vmem %s1, %s227
        %p229 = pneg %p77
        %p230 = pneg %p74
        %p231 = pneg %p98
        %p232 = pneg %p95
        %p233 = pneg %p119
        %p234 = pneg %p116
        %p235 = pneg %p145
        %p236 = pneg %p142
        %s237 = smul.u32 2, %s20
        %p238 = scmp.lt.s32.totalorder %s237, 1
        %s239 = scalar_select %p238, %s237, 1
        %s240 = smul.addr %s239, 8
        %s241 = scalar_lea.vmem %s4, %s240
        %s242 = smul.u32 2, %s20
        %p243 = scmp.lt.s32.totalorder %s21, 8
        %s244 = scalar_select %p243, %s21, 8
        %p245 = scmp.lt.s32.totalorder %s242, 1
        %s246 = scalar_select %p245, %s242, 1
        %s247 = smul.addr %s244, 2
        %s248 = sadd.s32 %s246, %s247
        %s249 = smul.addr %s248, 8
        %s250 = scalar_lea.vmem %s0, %s249
        %s251 = smul.u32 2, %s20
        %s252 = smul.u32 2, %s20
        %p253 = scmp.lt.s32.totalorder %s252, 1
        %s254 = scalar_select %p253, %s252, 1
        %s255 = smul.addr %s254, 8
        %s256 = scalar_lea.vmem %s1, %s255
        %s257 = smul.u32 2, %s20
        %s258 = smul.u32 2, %s20
        %p259 = scmp.lt.s32.totalorder %s258, 1
        %s260 = scalar_select %p259, %s258, 1
        %s261 = smul.addr %s260, 8
        %s262 = scalar_lea.vmem %s4, %s261
        %s263 = smul.u32 2, %s20
        %p264 = scmp.eq.s32.totalorder %s21, 0
        // Predicated region
        $region41: #{forward.302} parent=35 // pred_check
          %p265 = pneg %p264
        $region42: #{forward.302} parent=35 // pred_check_branch
          %267 = sbr.rel (%p265) target = $region44
        $region43: #{forward.302} parent=35 // pred_region
          %268 = vst [vmem:[#allocation2] sm:$0xff] -inf
          %269 = vst [vmem:[#allocation2 + $0x8] sm:$0xff] -inf
        $region44: #{forward.302} parent=35 // pred_fallthru
          _
        %v270 = vld [vmem:[%s250] sm:$0xff]
        %v271 = vld [vmem:[%s250 + $0x8] sm:$0xff]
        %v272 = vld [vmem:[#allocation2] sm:$0xff]
        %v273 = vld [vmem:[#allocation2 + $0x8] sm:$0xff]
        %v274 = vmax.f32 %v272, %v270
        %v275 = vmax.f32 %v273, %v271
        %276 = vst [vmem:[#allocation2] sm:$0xff] %v274
        %277 = vst [vmem:[#allocation2 + $0x8] sm:$0xff] %v275
        %p278 = scmp.eq.s32.totalorder %s21, 8
        // Predicated region
        $region45: #{forward.302} parent=35 // pred_check
          %p279 = pneg %p278
        $region46: #{forward.302} parent=35 // pred_check_branch
          %281 = sbr.rel (%p279) target = $region48
        $region47: #{forward.302} parent=35 // pred_region
          %v282 = vld [vmem:[#allocation2] sm:$0xff]
          %v283 = vld [vmem:[#allocation2 + $0x8] sm:$0xff]
          %v284 = vld [vmem:[%s2] sm:$0x1]
          %v286 = vperm.slane %v284, 0
          %v288 = vmul.f32 %v282, %v286
          %v289 = vmul.f32 %v283, %v286
          %v290 = vld [vmem:[#allocation3] sm:$0x1]
          %v292 = vperm.slane %v290, 0
          %v294 = vadd.f32 %v288, %v292
          %v295 = vadd.f32 %v289, %v292
          %296 = vst [vmem:[%s262] sm:$0xff] %v294
          %297 = vst [vmem:[%s262 + $0x8] sm:$0xff] %v295
        $region48: #{forward.302} parent=35 // pred_fallthru
          _
        %s298 = smul.u32 2, %s20
        %p299 = scmp.lt.s32.totalorder %s298, 1
        %s300 = scalar_select %p299, %s298, 1
        %s301 = smul.addr %s300, 8
        %s302 = scalar_lea.vmem %s4, %s301
        // Predicated region
        $region49: #{forward.302} parent=35 // pred_check
          %p303 = pneg %p142
        $region50: #{forward.302} parent=35 // pred_check_branch
          %305 = sbr.rel (%p303) target = $region52
        $region51: #{forward.302} parent=35 // pred_region
          %s306 = smul.u32 2, %s20
        $region52: #{forward.302} parent=35 // pred_fallthru
          _
        // Predicated region
        $region53: #{forward.302} parent=35 // pred_check
          %p307 = pneg %p142
        $region54: #{forward.302} parent=35 // pred_check_branch
          %309 = sbr.rel (%p307) target = $region56
        $region55: #{forward.302} parent=35 // pred_region
          %s310 = smul.u32 2, %s20
          %p311 = scmp.lt.s32.totalorder %s310, 1
          %s312 = scalar_select %p311, %s310, 1
          %s313 = smul.addr %s312, 8
          %s314 = scalar_lea.vmem %s4, %s313
        $region56: #{forward.302} parent=35 // pred_fallthru
          _
      $region36: #{forward.302} parent=5 // pred_fallthru
        _
      %p315 = scmp.le.s32.totalorder 2, %s11
      // Predicated region
      $region57: #{forward.302} parent=5 // pred_check
        %p316 = pneg %p315
      $region58: #{forward.302} parent=5 // pred_check_branch
        %318 = sbr.rel (%p316) target = $region60
      $region59: #{forward.302} parent=5 // pred_region
        %s319 = ssub.s32 %s11, 2
      $region60: #{forward.302} parent=5 // pred_fallthru
        _
    $region6: #{forward.302} parent=1 // loop_footer
      %s15 = sadd.s32 1, %s11
    $region7: #{forward.302} parent=1 // loop_footer_branch
      %10 = sbr.rel target = $region3
    $region8: #{forward.302} parent=1 // loop_exit
      _
    %320 = vsyncpa [#allocation4], 1
    %s321 = scalar_lea.sflag [#allocation4], 1
    %322 = vsyncpa %s321, 1

// kernel: forward.305
$region0: #{forward.305}
  #allocation0 [shape = 'u32[]', space=smem, size = 0x4, offset = 0x4, fixed_abs, tag = 'smem constant byte address 0x4 - core index']
  #allocation1 [shape = 'u32[72,128]{1,0:T(1,128)}', space=vmem, size = 0x9000, scoped, tag = 'internal scratch']
  #allocation2 [shape = 'f32[16,128]{1,0:T(8,128)}', space=vmem, size = 0x2000, scoped, tag = 'scratch operand']
  %s0 = inlined_call_operand.vmem [shape: bf16[16,128], index: 0, kind: input, shape index: {}]
  %s1 = inlined_call_operand.vmem [shape: bf16[128,128], index: 1, kind: input, shape index: {}]
  %s2 = inlined_call_operand.hbm [shape: f32[1,128], index: 2, kind: input, shape index: {}]
  %s3 = inlined_call_operand.vmem [shape: f32[16,128], index: 3, kind: output, shape index: {}]
  %s4 = sld [smem:[#allocation0]]
  $region34: #{forward.305} parent=0
    _
  %s6 = ssub.s32 1, %s4
  %s7 = scalar_select 0, %s6, %s4
  $region1: #{forward.305} parent=0
    #allocation3 [shape = 'u8[512]{0}', space=vmem, size = 0x400, scoped, tag = 'input window, operand 2, single buffered']
    #allocation4 [shape = 's32[1]{0}', space=sflag, size = 0x4, scoped, tag = 'scoped memory for forward.305']
    %8 = vsyncpa [#allocation4], 0
    // Predicated region
    $region2: #{forward.305} parent=1 // pred_check
      _
    $region3: #{forward.305} parent=1 // pred_check_branch
      %10 = sbr.rel (0) target = $region5
    $region4: #{forward.305} parent=1 // pred_region
      _
    $region5: #{forward.305} parent=1 // pred_fallthru
      _
    // Predicated region
    $region6: #{forward.305} parent=1 // pred_check
      _
    $region7: #{forward.305} parent=1 // pred_check_branch
      %12 = sbr.rel (0) target = $region9
    $region8: #{forward.305} parent=1 // pred_region
      _
    $region9: #{forward.305} parent=1 // pred_fallthru
      _
    // Predicated region
    $region10: #{forward.305} parent=1 // pred_check
      _
    $region11: #{forward.305} parent=1 // pred_check_branch
      %14 = sbr.rel (0) target = $region13
    $region12: #{forward.305} parent=1 // pred_region
      %16 = vsyncadd [#allocation4], 0
      %s18 = sshll.u32 %s2, 4
      %s19 = int_to_ptr.hbm [resolvable:$true] %s18
      %s20 = sshll.u32 [#allocation3], 4
      %s21 = int_to_ptr.vmem [resolvable:$true] %s20
      %23 = dma.hbm_to_vmem [thread:$0]  %s19, 16, %s21, [#allocation4]
    $region13: #{forward.305} parent=1 // pred_fallthru
      _
    // Predicated region
    $region14: #{forward.305} parent=1 // pred_check
      _
    $region15: #{forward.305} parent=1 // pred_check_branch
      %25 = sbr.rel (0) target = $region17
    $region16: #{forward.305} parent=1 // pred_region
      %27 = dma.done [#allocation4], 16
    $region17: #{forward.305} parent=1 // pred_fallthru
      _
    %p28 = scmp.eq.s32.totalorder 0, 0
    // Predicated region
    $region18: #{forward.305} parent=1 // pred_check
      %p29 = pneg %p28
    $region19: #{forward.305} parent=1 // pred_check_branch
      %31 = sbr.rel (%p29) target = $region21
    $region20: #{forward.305} parent=1 // pred_region
      %32 = vst [vmem:[#allocation2] sm:$0xff] 0.0
      %33 = vst [vmem:[#allocation2 + $0x8] sm:$0xff] 0.0
    $region21: #{forward.305} parent=1 // pred_fallthru
      _
    %v34 = vld [vmem:[%s0] sm:$0xf]
    %v35 = vld [vmem:[%s0 + $0x4] sm:$0xf]
    %v36 = vunpack.c.l.bf16 %v34
    %v37 = vunpack.c.l.bf16 %v35
    %v38 = vmax.f32 %v36, 0.0
    %v39 = vmax.f32 %v37, 0.0
    %v40 = vpack.c.bf16 %v39, %v38
    %v41 = vld [vmem:[#allocation2] sm:$0xff]
    %v42 = vld [vmem:[#allocation2 + $0x8] sm:$0xff]
    %v43 = vld [vmem:[%s1] sm:$0xf]
    %v44 = vld [vmem:[%s1 + $0x4] sm:$0xf]
    %v45 = vld [vmem:[%s1 + $0x8] sm:$0xf]
    %v46 = vld [vmem:[%s1 + $0xc] sm:$0xf]
    %v47 = vld [vmem:[%s1 + $0x10] sm:$0xf]
    %v48 = vld [vmem:[%s1 + $0x14] sm:$0xf]
    %v49 = vld [vmem:[%s1 + $0x18] sm:$0xf]
    %v50 = vld [vmem:[%s1 + $0x1c] sm:$0xf]
    %v51 = vld [vmem:[%s1 + $0x20] sm:$0xf]
    %v52 = vld [vmem:[%s1 + $0x24] sm:$0xf]
    %v53 = vld [vmem:[%s1 + $0x28] sm:$0xf]
    %v54 = vld [vmem:[%s1 + $0x2c] sm:$0xf]
    %v55 = vld [vmem:[%s1 + $0x30] sm:$0xf]
    %v56 = vld [vmem:[%s1 + $0x34] sm:$0xf]
    %v57 = vld [vmem:[%s1 + $0x38] sm:$0xf]
    %v58 = vld [vmem:[%s1 + $0x3c] sm:$0xf]
    %v75 = vunpack.c.l.b16 %v43
    %v76 = vunpack.c.l.b16 %v44
    %v77 = vunpack.c.l.b16 %v45
    %v78 = vunpack.c.l.b16 %v46
    %v79 = vunpack.c.l.b16 %v47
    %v80 = vunpack.c.l.b16 %v48
    %v81 = vunpack.c.l.b16 %v49
    %v82 = vunpack.c.l.b16 %v50
    %v83 = vunpack.c.l.b16 %v51
    %v84 = vunpack.c.l.b16 %v52
    %v85 = vunpack.c.l.b16 %v53
    %v86 = vunpack.c.l.b16 %v54
    %v87 = vunpack.c.l.b16 %v55
    %v88 = vunpack.c.l.b16 %v56
    %v89 = vunpack.c.l.b16 %v57
    %v90 = vunpack.c.l.b16 %v58
    %v91 = vpack.c.b16 %v76, %v75
    %v92 = vpack.c.b16 %v78, %v77
    %v93 = vpack.c.b16 %v80, %v79
    %v94 = vpack.c.b16 %v82, %v81
    %v95 = vpack.c.b16 %v84, %v83
    %v96 = vpack.c.b16 %v86, %v85
    %v97 = vpack.c.b16 %v88, %v87
    %v98 = vpack.c.b16 %v90, %v89
    %107 = vmatpush.bf16.msra.mxu0 %v98
    %108 = vmatpush.bf16.msra.mxu0 %v97
    %109 = vmatpush.bf16.msra.mxu0 %v96
    %110 = vmatpush.bf16.msra.mxu0 %v95
    %111 = vmatpush.bf16.msra.mxu0 %v94
    %112 = vmatpush.bf16.msra.mxu0 %v93
    %113 = vmatpush.bf16.msra.mxu0 %v92
    %114 = vmatpush.bf16.msra.mxu0 %v91
    %115 = vmatmul.bf16.gmra.mxu0 %v40
    %v116 = vpop.f32.mrf.mxu0
    %v117 = vadd.f32 0.0, %v116
    %v118 = vpop.f32.mrf.mxu0
    %v119 = vadd.f32 0.0, %v118
    %120 = vdwg.mxu0
    %v121 = vadd.f32 %v41, %v117
    %v122 = vadd.f32 %v42, %v119
    %123 = vst [vmem:[#allocation2] sm:$0xff] %v121
    %124 = vst [vmem:[#allocation2 + $0x8] sm:$0xff] %v122
    // Predicated region
    $region22: #{forward.305} parent=1 // pred_check
      %p125 = pneg %p28
    $region23: #{forward.305} parent=1 // pred_check_branch
      %127 = sbr.rel (%p125) target = $region25
    $region24: #{forward.305} parent=1 // pred_region
      %v128 = vld [vmem:[#allocation2] sm:$0xff]
      %v129 = vld [vmem:[#allocation2 + $0x8] sm:$0xff]
      %v130 = vld [vmem:[#allocation3] sm:$0x1]
      %v132 = vperm.slane %v130, 0
      %v134 = vadd.f32 %v128, %v132
      %v135 = vadd.f32 %v129, %v132
      %136 = vst [vmem:[%s3] sm:$0xff] %v134
      %137 = vst [vmem:[%s3 + $0x8] sm:$0xff] %v135
    $region25: #{forward.305} parent=1 // pred_fallthru
      _
    // Predicated region
    $region26: #{forward.305} parent=1 // pred_check
      _
    $region27: #{forward.305} parent=1 // pred_check_branch
      %139 = sbr.rel (0) target = $region29
    $region28: #{forward.305} parent=1 // pred_region
      _
    $region29: #{forward.305} parent=1 // pred_fallthru
      _
    // Predicated region
    $region30: #{forward.305} parent=1 // pred_check
      _
    $region31: #{forward.305} parent=1 // pred_check_branch
      %141 = sbr.rel (0) target = $region33
    $region32: #{forward.305} parent=1 // pred_region
      _
    $region33: #{forward.305} parent=1 // pred_fallthru
      _
    %142 = vsyncpa [#allocation4], 1

// kernel: forward.309
$region0: #{forward.309}
  #allocation0 [shape = 'u32[]', space=smem, size = 0x4, offset = 0x4, fixed_abs, tag = 'smem constant byte address 0x4 - core index']
  #allocation1 [shape = 'u32[72,128]{1,0:T(1,128)}', space=vmem, size = 0x9000, scoped, tag = 'internal scratch']
  #allocation2 [shape = 'f32[16,128]{1,0:T(8,128)}', space=vmem, size = 0x2000, scoped, tag = 'scratch operand']
  %s0 = inlined_call_operand.vmem [shape: bf16[16,128], index: 0, kind: input, shape index: {}]
  %s1 = inlined_call_operand.vmem [shape: bf16[128,128], index: 1, kind: input, shape index: {}]
  %s2 = inlined_call_operand.hbm [shape: f32[1,128], index: 2, kind: input, shape index: {}]
  %s3 = inlined_call_operand.vmem [shape: f32[16,128], index: 3, kind: output, shape index: {}]
  %s4 = sld [smem:[#allocation0]]
  $region34: #{forward.309} parent=0
    _
  %s6 = ssub.s32 1, %s4
  %s7 = scalar_select 0, %s6, %s4
  $region1: #{forward.309} parent=0
    #allocation3 [shape = 'u8[512]{0}', space=vmem, size = 0x400, scoped, tag = 'input window, operand 2, single buffered']
    #allocation4 [shape = 's32[1]{0}', space=sflag, size = 0x4, scoped, tag = 'scoped memory for forward.309']
    %8 = vsyncpa [#allocation4], 0
    // Predicated region
    $region2: #{forward.309} parent=1 // pred_check
      _
    $region3: #{forward.309} parent=1 // pred_check_branch
      %10 = sbr.rel (0) target = $region5
    $region4: #{forward.309} parent=1 // pred_region
      _
    $region5: #{forward.309} parent=1 // pred_fallthru
      _
    // Predicated region
    $region6: #{forward.309} parent=1 // pred_check
      _
    $region7: #{forward.309} parent=1 // pred_check_branch
      %12 = sbr.rel (0) target = $region9
    $region8: #{forward.309} parent=1 // pred_region
      _
    $region9: #{forward.309} parent=1 // pred_fallthru
      _
    // Predicated region
    $region10: #{forward.309} parent=1 // pred_check
      _
    $region11: #{forward.309} parent=1 // pred_check_branch
      %14 = sbr.rel (0) target = $region13
    $region12: #{forward.309} parent=1 // pred_region
      %16 = vsyncadd [#allocation4], 0
      %s18 = sshll.u32 %s2, 4
      %s19 = int_to_ptr.hbm [resolvable:$true] %s18
      %s20 = sshll.u32 [#allocation3], 4
      %s21 = int_to_ptr.vmem [resolvable:$true] %s20
      %23 = dma.hbm_to_vmem [thread:$0]  %s19, 16, %s21, [#allocation4]
    $region13: #{forward.309} parent=1 // pred_fallthru
      _
    // Predicated region
    $region14: #{forward.309} parent=1 // pred_check
      _
    $region15: #{forward.309} parent=1 // pred_check_branch
      %25 = sbr.rel (0) target = $region17
    $region16: #{forward.309} parent=1 // pred_region
      %27 = dma.done [#allocation4], 16
    $region17: #{forward.309} parent=1 // pred_fallthru
      _
    %p28 = scmp.eq.s32.totalorder 0, 0
    // Predicated region
    $region18: #{forward.309} parent=1 // pred_check
      %p29 = pneg %p28
    $region19: #{forward.309} parent=1 // pred_check_branch
      %31 = sbr.rel (%p29) target = $region21
    $region20: #{forward.309} parent=1 // pred_region
      %32 = vst [vmem:[#allocation2] sm:$0xff] 0.0
      %33 = vst [vmem:[#allocation2 + $0x8] sm:$0xff] 0.0
    $region21: #{forward.309} parent=1 // pred_fallthru
      _
    %v34 = vld [vmem:[%s0] sm:$0xf]
    %v35 = vld [vmem:[%s0 + $0x4] sm:$0xf]
    %v36 = vld [vmem:[#allocation2] sm:$0xff]
    %v37 = vld [vmem:[#allocation2 + $0x8] sm:$0xff]
    %v38 = vld [vmem:[%s1] sm:$0xf]
    %v39 = vld [vmem:[%s1 + $0x4] sm:$0xf]
    %v40 = vld [vmem:[%s1 + $0x8] sm:$0xf]
    %v41 = vld [vmem:[%s1 + $0xc] sm:$0xf]
    %v42 = vld [vmem:[%s1 + $0x10] sm:$0xf]
    %v43 = vld [vmem:[%s1 + $0x14] sm:$0xf]
    %v44 = vld [vmem:[%s1 + $0x18] sm:$0xf]
    %v45 = vld [vmem:[%s1 + $0x1c] sm:$0xf]
    %v46 = vld [vmem:[%s1 + $0x20] sm:$0xf]
    %v47 = vld [vmem:[%s1 + $0x24] sm:$0xf]
    %v48 = vld [vmem:[%s1 + $0x28] sm:$0xf]
    %v49 = vld [vmem:[%s1 + $0x2c] sm:$0xf]
    %v50 = vld [vmem:[%s1 + $0x30] sm:$0xf]
    %v51 = vld [vmem:[%s1 + $0x34] sm:$0xf]
    %v52 = vld [vmem:[%s1 + $0x38] sm:$0xf]
    %v53 = vld [vmem:[%s1 + $0x3c] sm:$0xf]
    %v56 = vunpack.c.l.b16 %v34
    %v57 = vunpack.c.l.b16 %v35
    %v58 = vpack.c.b16 %v57, %v56
    %v76 = vunpack.c.l.b16 %v38
    %v77 = vunpack.c.l.b16 %v39
    %v78 = vunpack.c.l.b16 %v40
    %v79 = vunpack.c.l.b16 %v41
    %v80 = vunpack.c.l.b16 %v42
    %v81 = vunpack.c.l.b16 %v43
    %v82 = vunpack.c.l.b16 %v44
    %v83 = vunpack.c.l.b16 %v45
    %v84 = vunpack.c.l.b16 %v46
    %v85 = vunpack.c.l.b16 %v47
    %v86 = vunpack.c.l.b16 %v48
    %v87 = vunpack.c.l.b16 %v49
    %v88 = vunpack.c.l.b16 %v50
    %v89 = vunpack.c.l.b16 %v51
    %v90 = vunpack.c.l.b16 %v52
    %v91 = vunpack.c.l.b16 %v53
    %v92 = vpack.c.b16 %v77, %v76
    %v93 = vpack.c.b16 %v79, %v78
    %v94 = vpack.c.b16 %v81, %v80
    %v95 = vpack.c.b16 %v83, %v82
    %v96 = vpack.c.b16 %v85, %v84
    %v97 = vpack.c.b16 %v87, %v86
    %v98 = vpack.c.b16 %v89, %v88
    %v99 = vpack.c.b16 %v91, %v90
    %108 = vmatpush.bf16.msra.mxu0 %v99
    %109 = vmatpush.bf16.msra.mxu0 %v98
    %110 = vmatpush.bf16.msra.mxu0 %v97
    %111 = vmatpush.bf16.msra.mxu0 %v96
    %112 = vmatpush.bf16.msra.mxu0 %v95
    %113 = vmatpush.bf16.msra.mxu0 %v94
    %114 = vmatpush.bf16.msra.mxu0 %v93
    %115 = vmatpush.bf16.msra.mxu0 %v92
    %116 = vmatmul.bf16.gmra.mxu0 %v58
    %v117 = vpop.f32.mrf.mxu0
    %v118 = vadd.f32 0.0, %v117
    %v119 = vpop.f32.mrf.mxu0
    %v120 = vadd.f32 0.0, %v119
    %121 = vdwg.mxu0
    %v122 = vadd.f32 %v36, %v118
    %v123 = vadd.f32 %v37, %v120
    %124 = vst [vmem:[#allocation2] sm:$0xff] %v122
    %125 = vst [vmem:[#allocation2 + $0x8] sm:$0xff] %v123
    // Predicated region
    $region22: #{forward.309} parent=1 // pred_check
      %p126 = pneg %p28
    $region23: #{forward.309} parent=1 // pred_check_branch
      %128 = sbr.rel (%p126) target = $region25
    $region24: #{forward.309} parent=1 // pred_region
      %v129 = vld [vmem:[#allocation2] sm:$0xff]
      %v130 = vld [vmem:[#allocation2 + $0x8] sm:$0xff]
      %v131 = vld [vmem:[#allocation3] sm:$0x1]
      %v133 = vperm.slane %v131, 0
      %v135 = vadd.f32 %v129, %v133
      %v136 = vadd.f32 %v130, %v133
      %137 = vst [vmem:[%s3] sm:$0xff] %v135
      %138 = vst [vmem:[%s3 + $0x8] sm:$0xff] %v136
    $region25: #{forward.309} parent=1 // pred_fallthru
      _
    // Predicated region
    $region26: #{forward.309} parent=1 // pred_check
      _
    $region27: #{forward.309} parent=1 // pred_check_branch
      %140 = sbr.rel (0) target = $region29
    $region28: #{forward.309} parent=1 // pred_region
      _
    $region29: #{forward.309} parent=1 // pred_fallthru
      _
    // Predicated region
    $region30: #{forward.309} parent=1 // pred_check
      _
    $region31: #{forward.309} parent=1 // pred_check_branch
      %142 = sbr.rel (0) target = $region33
    $region32: #{forward.309} parent=1 // pred_region
      _
    $region33: #{forward.309} parent=1 // pred_fallthru
      _
    %143 = vsyncpa [#allocation4], 1

// kernel: forward.332
$region0: #{forward.332}
  #allocation0 [shape = 'u32[]', space=smem, size = 0x4, offset = 0x4, fixed_abs, tag = 'smem constant byte address 0x4 - core index']
  #allocation1 [shape = 'u32[72,128]{1,0:T(1,128)}', space=vmem, size = 0x9000, scoped, tag = 'internal scratch']
  %s0 = inlined_call_operand.vmem [shape: f32[16,128], index: 0, kind: input, shape index: {}]
  %s1 = inlined_call_operand.vmem [shape: f32[1,128], index: 1, kind: input, shape index: {}]
  %s2 = inlined_call_operand.vmem [shape: f32[1,128], index: 2, kind: input, shape index: {}]
  %s3 = inlined_call_operand.vmem [shape: f32[16,128], index: 3, kind: output, shape index: {}]
  %s4 = sld [smem:[#allocation0]]
  $region22: #{forward.332} parent=0
    _
  %s6 = ssub.s32 1, %s4
  %s7 = scalar_select 0, %s6, %s4
  // Predicated region
  $region2: #{forward.332} parent=0 // pred_check
    _
  $region3: #{forward.332} parent=0 // pred_check_branch
    %9 = sbr.rel (0) target = $region5
  $region4: #{forward.332} parent=0 // pred_region
    _
  $region5: #{forward.332} parent=0 // pred_fallthru
    _
  // Predicated region
  $region6: #{forward.332} parent=0 // pred_check
    _
  $region7: #{forward.332} parent=0 // pred_check_branch
    %11 = sbr.rel (0) target = $region9
  $region8: #{forward.332} parent=0 // pred_region
    _
  $region9: #{forward.332} parent=0 // pred_fallthru
    _
  // Predicated region
  $region10: #{forward.332} parent=0 // pred_check
    _
  $region11: #{forward.332} parent=0 // pred_check_branch
    %13 = sbr.rel (0) target = $region13
  $region12: #{forward.332} parent=0 // pred_region
    _
  $region13: #{forward.332} parent=0 // pred_fallthru
    _
  %v14 = vld [vmem:[%s0] sm:$0xff]
  %v15 = vld [vmem:[%s0 + $0x8] sm:$0xff]
  %v16 = vld [vmem:[%s1] sm:$0x1]
  %v18 = vperm.slane %v16, 0
  %v20 = vmul.f32 %v14, %v18
  %v21 = vmul.f32 %v15, %v18
  %v22 = vld [vmem:[%s2] sm:$0x1]
  %v24 = vperm.slane %v22, 0
  %v26 = vadd.f32 %v20, %v24
  %v27 = vadd.f32 %v21, %v24
  %v28 = vmax.f32 %v26, 0.0
  %v29 = vmax.f32 %v27, 0.0
  %30 = vst [vmem:[%s3] sm:$0xff] %v28
  %31 = vst [vmem:[%s3 + $0x8] sm:$0xff] %v29
  // Predicated region
  $region14: #{forward.332} parent=0 // pred_check
    _
  $region15: #{forward.332} parent=0 // pred_check_branch
    %33 = sbr.rel (0) target = $region17
  $region16: #{forward.332} parent=0 // pred_region
    _
  $region17: #{forward.332} parent=0 // pred_fallthru
    _
  // Predicated region
  $region18: #{forward.332} parent=0 // pred_check
    _
  $region19: #{forward.332} parent=0 // pred_check_branch
    %35 = sbr.rel (0) target = $region21
  $region20: #{forward.332} parent=0 // pred_region
    _
  $region21: #{forward.332} parent=0 // pred_fallthru
    _

</llo_original>
